<compile_context>
chip_gen: v6e
topology: v6e:2x2x1
jax: 0.10.0
libtpu: 0.0.40
codegen_flags: <defaults>
</compile_context>

<pallas_src>
import functools

import numpy as np
import jax
import jax.numpy as jnp
from jax.experimental import pallas as pl
from jax.experimental.pallas import tpu as pltpu

C1 = 32     # conv1 out channels
C2 = 64     # conv2 out channels
NH = 128    # fc1 width
NOUT = 2    # real logits
NOP = 128   # lane-padded logits (lane-dense output store)


# ---------------------------------------------------------------------------
# Fused kernel: conv1+relu+pool -> conv2+relu+pool -> fc1+relu -> fc2
# ---------------------------------------------------------------------------
def _fused_cnn_kernel(xs_ref, w1_ref, b1_ref, w2_ref, b2_ref,
                      wf1_ref, bf1_ref, wf2_ref, bf2_ref, o_ref,
                      *, B, H, W1):
    f32, bf16 = jnp.float32, jnp.bfloat16
    H1 = H // 2            # conv2 spatial
    H2 = H // 4            # pooled conv2 spatial
    W2 = W1 // 2
    XL = (W1 + 2) * C1     # conv1-out / conv2-LHS lane width, lanes = (x_pad, ci)
    NW = W1 * C2           # conv2-out lane width, lanes = (x, co)

    # ---------- stage 1: conv1 (Cin=1, VPU, f32) + bias + relu + 2x2 maxpool -------
    b1 = b1_ref[...]                                       # (1, XL), zero x-borders
    zrow = jnp.zeros((1, XL), f32)
    h1_list = []
    for b in range(B):
        acc = [jnp.zeros((H, XL), f32), jnp.zeros((H, XL), f32)]
        for ky in range(3):
            for kx in range(3):
                tap = w1_ref[ky * 3 + kx]                  # (1, XL), tiled tap weights
                for j in range(2):                         # output-x parity (W-pool fused)
                    win = xs_ref[j + kx, b, ky:ky + H, :]  # (H, XL), lane-dense
                    acc[j] = acc[j] + win * tap
        m1 = jnp.maximum(acc[0], acc[1])                   # W-pooled (H, XL)
        rows = [zrow]                                      # top zero pad row for conv2
        for yo1 in range(H1):                              # H-pool + bias + relu
            r = jnp.maximum(m1[2 * yo1:2 * yo1 + 1, :],
                            m1[2 * yo1 + 1:2 * yo1 + 2, :])
            rows.append(jnp.maximum(r + b1, 0.0))          # x-border lane groups stay 0
        rows.append(zrow)                                  # bottom zero pad row
        h1_list.append(jnp.concatenate(rows, axis=0))      # (H1+2, XL) zero-padded
    hpad = jnp.stack(h1_list, axis=0)                      # (B, H1+2, XL)

    # ---------- stage 2: conv2 as 3 banded MXU matmuls over ky (K = XL) ------------
    M = B * H1
    acc2 = jnp.zeros((M, NW), f32)
    for ky in range(3):
        lhs = hpad[:, ky:ky + H1, :].reshape(M, XL).astype(bf16)
        acc2 = acc2 + jnp.dot(lhs, w2_ref[ky], preferred_element_type=f32)

    # ---------- 2x2 maxpool + bias + relu on conv2 output --------------------------
    yrows = []
    for q in range(B * H2):                                # pool over y (row pairs)
        yrows.append(jnp.maximum(acc2[2 * q:2 * q + 1, :],
                                 acc2[2 * q + 1:2 * q + 2, :]))
    yp = jnp.concatenate(yrows, axis=0)                    # (B*H2, NW)
    parts = []
    for x2 in range(W2):                                   # pool over x (64-lane groups)
        l = yp[:, (2 * x2) * C2:(2 * x2 + 1) * C2]
        r = yp[:, (2 * x2 + 1) * C2:(2 * x2 + 2) * C2]
        parts.append(jnp.maximum(l, r))
    pooled = jnp.concatenate(parts, axis=-1)               # (B*H2, W2*C2)
    h2 = jnp.maximum(pooled + b2_ref[...], 0.0).astype(bf16)

    # ---------- fc1 (H2 accumulated matmuls, K = W2*C2) + relu -> fc2 --------------
    accf = jnp.zeros((B, NH), f32)
    for yo2 in range(H2):
        rows = [h2[b * H2 + yo2:b * H2 + yo2 + 1, :] for b in range(B)]
        lhs = jnp.concatenate(rows, axis=0) if B > 1 else rows[0]   # (B, W2*C2)
        accf = accf + jnp.dot(lhs, wf1_ref[yo2], preferred_element_type=f32)
    hf1 = jnp.maximum(accf + bf1_ref[...], 0.0).astype(bf16)        # (B, NH)
    out = jnp.dot(hf1, wf2_ref[...], preferred_element_type=f32) + bf2_ref[...]
    o_ref[...] = out.astype(o_ref.dtype)                   # lane-dense (B, 128) store


# ---------------------------------------------------------------------------
# pallas_call wrapper
# ---------------------------------------------------------------------------
def _cnn_pallas_call(G, B, H, W1):
    H2 = H // 4
    W2 = W1 // 2
    XL = (W1 + 2) * C1
    NW = W1 * C2
    kernel = functools.partial(_fused_cnn_kernel, B=B, H=H, W1=W1)
    return pl.pallas_call(
        kernel,
        out_shape=jax.ShapeDtypeStruct((G, B, NOP), jnp.float32),
        grid=(G,),
        in_specs=[
            pl.BlockSpec((None, 4, B, H + 2, XL), lambda n: (n, 0, 0, 0, 0)),  # inputs
            pl.BlockSpec((9, 1, XL), lambda n: (0, 0, 0)),        # conv1 taps (tiled)
            pl.BlockSpec((1, XL), lambda n: (0, 0)),              # conv1 bias (tiled)
            pl.BlockSpec((3, XL, NW), lambda n: (0, 0, 0)),       # conv2 banded weights
            pl.BlockSpec((1, W2 * C2), lambda n: (0, 0)),         # conv2 bias (tiled)
            pl.BlockSpec((H2, W2 * C2, NH), lambda n: (0, 0, 0)),  # fc1 (per yo2 slab)
            pl.BlockSpec((1, NH), lambda n: (0, 0)),              # fc1 bias
            pl.BlockSpec((NH, NOP), lambda n: (0, 0)),            # fc2 (padded)
            pl.BlockSpec((1, NOP), lambda n: (0, 0)),             # fc2 bias (padded)
        ],
        out_specs=pl.BlockSpec((None, B, NOP), lambda n: (n, 0, 0)),
        compiler_params=pltpu.CompilerParams(dimension_semantics=("parallel",)),
    )


@jax.jit
def cnn_forward(kparams, x_nchw):
    N, C, H, W = x_nchw.shape
    assert C == 1 and H % 4 == 0 and W % 4 == 0
    W1 = W // 2
    XL = (W1 + 2) * C1

    # Batch blocking: B images per grid step; keep >= 2 grid steps when N >= 2 so both
    # v7x TensorCores get work; cap B to bound vreg pressure.
    if N <= 1:
        B, G = max(N, 1), 1
    else:
        B = min(4, (N + 1) // 2)
        G = -(-N // B)
    Np = G * B

    # Tiny host-side prep on the raw input only: pad for conv1 'same', split the W
    # dimension into the 4 column-parity shifts used by the fused W-pool, broadcast
    # each pixel across the 32 conv1-output-channel lanes (lane-dense conv1), and add
    # zero x-border lane groups so stage 2 consumes the conv1 output directly.
    x = x_nchw.astype(jnp.float32).reshape(N, H, W)
    xp = jnp.pad(x, ((0, 0), (1, 1), (1, 1)))                       # (N, H+2, W+2)
    vs = jnp.stack([xp[:, :, s::2][:, :, :W1] for s in range(4)], axis=0)  # (4,N,H+2,W1)
    xs = jnp.repeat(vs[..., None], C1, axis=-1).reshape(4, N, H + 2, W1 * C1)
    zb = jnp.zeros((4, N, H + 2, C1), jnp.float32)
    xs = jnp.concatenate([zb, xs, zb], axis=-1)                     # (4, N, H+2, XL)
    if Np > N:
        xs = jnp.pad(xs, ((0, 0), (0, Np - N), (0, 0), (0, 0)))
    xs = xs.reshape(4, G, B, H + 2, XL).transpose(1, 0, 2, 3, 4)    # (G, 4, B, H+2, XL)

    call = _cnn_pallas_call(G, B, H, W1)
    out = call(xs, kparams["w1"], kparams["b1"], kparams["w2"], kparams["b2"],
               kparams["wf1"], kparams["bf1"], kparams["wf2"], kparams["bf2"])
    return out.reshape(Np, NOP)[:N, :NOUT]                          # the 2 real logits


# ---------------------------------------------------------------------------
# Parameters (PyTorch layouts) and one-time host-side re-layout to kernel layouts
# ---------------------------------------------------------------------------
def init_params(key, fc1_in):
    ks = jax.random.split(key, 8)

    def u(k, shape, fan_in):
        bound = 1.0 / jnp.sqrt(jnp.float32(fan_in))
        return jax.random.uniform(k, shape, jnp.float32, -bound, bound)

    return dict(
        conv1_w=u(ks[0], (C1, 1, 3, 3), 1 * 9),
        conv1_b=u(ks[1], (C1,), 1 * 9),
        conv2_w=u(ks[2], (C2, C1, 3, 3), C1 * 9),
        conv2_b=u(ks[3], (C2,), C1 * 9),
        fc1_w=u(ks[4], (NH, fc1_in), fc1_in),     # PyTorch Linear layout: (out, in)
        fc1_b=u(ks[5], (NH,), fc1_in),
        fc2_w=u(ks[6], (NOUT, NH), NH),
        fc2_b=u(ks[7], (NOUT,), NH),
    )


def to_kernel_params(p, H, W):
    """One-time host-side re-layout of PyTorch-style parameters (no per-call cost)."""
    W1, H2, W2 = W // 2, H // 4, W // 4
    XL = (W1 + 2) * C1
    NW = W1 * C2

    c1w = np.asarray(p["conv1_w"], np.float32)
    c1b = np.asarray(p["conv1_b"], np.float32)
    c2w = np.asarray(p["conv2_w"], np.float32)
    c2b = np.asarray(p["conv2_b"], np.float32)
    f1w = np.asarray(p["fc1_w"], np.float32)
    f1b = np.asarray(p["fc1_b"], np.float32)
    f2w = np.asarray(p["fc2_w"], np.float32)
    f2b = np.asarray(p["fc2_b"], np.float32)

    # conv1 taps tiled across the (x, ci) lane layout with zero x-border groups.
    vt = c1w.reshape(C1, 9).T                                      # (9, C1)
    z9 = np.zeros((9, C1), np.float32)
    w1 = np.concatenate([z9, np.tile(vt, (1, W1)), z9], axis=1)[:, None, :]
    b1 = np.concatenate([np.zeros(C1, np.float32),
                         np.tile(c1b, W1),
                         np.zeros(C1, np.float32)])[None].astype(np.float32)

    # conv2 as 3 banded matrices: row (xp, ci) -> col (x, co) carries
    # w2[co, ci, ky, xp - x] when xp - x in {0,1,2}; zeros elsewhere.
    w2 = np.zeros((3, XL, NW), np.float32)
    for ky in range(3):
        for kx in range(3):
            blk = c2w[:, :, ky, kx].T                              # (C1, C2)
            for x in range(W1):
                xpi = x + kx
                w2[ky, xpi * C1:(xpi + 1) * C1, x * C2:(x + 1) * C2] = blk
    b2 = np.tile(c2b, W2)[None].astype(np.float32)                 # (1, W2*C2)

    # fc1 pre-permuted to the kernel flatten order (yo2 slabs, rows = (xo2, co)),
    # matching PyTorch's CHW x.view(N, -1) semantics.
    wf1 = (f1w.reshape(NH, C2, H2, W2).transpose(2, 3, 1, 0)
           .reshape(H2, W2 * C2, NH))
    # fc2 pre-transposed + zero-padded to a lane-dense 128-wide output slab.
    wf2 = np.zeros((NH, NOP), np.float32)
    wf2[:, :f2w.shape[0]] = f2w.T
    bf2 = np.zeros((1, NOP), np.float32)
    bf2[0, :f2b.shape[0]] = f2b

    bf16 = jnp.bfloat16
    return dict(
        w1=jnp.asarray(w1), b1=jnp.asarray(b1),
        w2=jnp.asarray(w2, dtype=bf16), b2=jnp.asarray(b2),
        wf1=jnp.asarray(wf1, dtype=bf16), bf1=jnp.asarray(f1b[None]),
        wf2=jnp.asarray(wf2, dtype=bf16), bf2=jnp.asarray(bf2),
    )


# ---------------------------------------------------------------------------
# Pure-JAX reference (numerical sanity check)
# ---------------------------------------------------------------------------
def _maxpool2x2_nchw(x):
    n, c, h, w = x.shape
    return x.reshape(n, c, h // 2, 2, w // 2, 2).max(axis=(3, 5))


def reference_forward(p, x_nchw):
    dn = ("NCHW", "OIHW", "NCHW")
    y = jax.lax.conv_general_dilated(x_nchw.astype(jnp.float32), p["conv1_w"],
                                     window_strides=(1, 1), padding="SAME",
                                     dimension_numbers=dn)
    y = jax.nn.relu(y + p["conv1_b"][None, :, None, None])
    y = _maxpool2x2_nchw(y)
    y = jax.lax.conv_general_dilated(y, p["conv2_w"], window_strides=(1, 1),
                                     padding="SAME", dimension_numbers=dn)
    y = jax.nn.relu(y + p["conv2_b"][None, :, None, None])
    y = _maxpool2x2_nchw(y)
    yf = y.reshape(y.shape[0], -1)                      # PyTorch x.view(N, -1): CHW order
    y = jax.nn.relu(yf @ p["fc1_w"].T + p["fc1_b"])
    return y @ p["fc2_w"].T + p["fc2_b"]


if __name__ == "__main__":
    key = jax.random.PRNGKey(0)
    k_x, k_p = jax.random.split(key)

    # Small input consistent with the module: batch=2, 1 channel, 16x16 spatial.
    N, C, H, W = 2, 1, 16, 16
    x = jax.random.normal(k_x, (N, C, H, W), dtype=jnp.float32)

    # fc1 is lazily sized in the PyTorch module from the first batch:
    # 64 * (H/4) * (W/4) = 1024 for a 16x16 input.
    fc1_in = C2 * (H // 4) * (W // 4)
    params = init_params(k_p, fc1_in)
    kparams = to_kernel_params(params, H, W)

    out = jax.block_until_ready(cnn_forward(kparams, x))
    assert out.shape == (N, NOUT) and out.dtype == jnp.float32

    ref = jax.block_until_ready(reference_forward(params, x))
    assert bool(jnp.all(jnp.isfinite(out)))
    assert bool(jnp.allclose(out, ref, atol=5e-2, rtol=5e-2)), "mismatch vs reference"
    print("KERNEL_OK")
</pallas_src>

<mosaic_0001>
module attributes {stable_mosaic.version = 11 : i64} {
  func.func @_fused_cnn_kernel(%arg0: i32, %arg1: memref<1x4x1x18x320xf32, #tpu.memory_space<vmem>>, %arg2: memref<9x1x320xf32, #tpu.memory_space<vmem>>, %arg3: memref<1x320xf32, #tpu.memory_space<vmem>>, %arg4: memref<3x320x512xbf16, #tpu.memory_space<vmem>>, %arg5: memref<1x256xf32, #tpu.memory_space<vmem>>, %arg6: memref<4x256x128xbf16, #tpu.memory_space<vmem>>, %arg7: memref<1x128xf32, #tpu.memory_space<vmem>>, %arg8: memref<128x128xbf16, #tpu.memory_space<vmem>>, %arg9: memref<1x128xf32, #tpu.memory_space<vmem>>, %arg10: memref<1x1x128xf32, #tpu.memory_space<vmem>>) attributes {dimension_semantics = [#tpu.dimension_semantics<parallel>], iteration_bounds = array<i64: 2>, scalar_prefetch = 0 : i64, scratch_operands = 0 : i64, tpu.core_type = #tpu.core_type<tc>, window_params = [{transform_indices = @transform_0, window_bounds = array<i64: 1, 4, 1, 18, 320>}, {pipeline_mode = #tpu.pipeline_mode<synchronous>, transform_indices = @transform_1, window_bounds = array<i64: 9, 1, 320>}, {pipeline_mode = #tpu.pipeline_mode<synchronous>, transform_indices = @transform_2, window_bounds = array<i64: 1, 320>}, {pipeline_mode = #tpu.pipeline_mode<synchronous>, transform_indices = @transform_3, window_bounds = array<i64: 3, 320, 512>}, {pipeline_mode = #tpu.pipeline_mode<synchronous>, transform_indices = @transform_4, window_bounds = array<i64: 1, 256>}, {pipeline_mode = #tpu.pipeline_mode<synchronous>, transform_indices = @transform_5, window_bounds = array<i64: 4, 256, 128>}, {pipeline_mode = #tpu.pipeline_mode<synchronous>, transform_indices = @transform_6, window_bounds = array<i64: 1, 128>}, {pipeline_mode = #tpu.pipeline_mode<synchronous>, transform_indices = @transform_7, window_bounds = array<i64: 128, 128>}, {pipeline_mode = #tpu.pipeline_mode<synchronous>, transform_indices = @transform_8, window_bounds = array<i64: 1, 128>}, {transform_indices = @transform_9, window_bounds = array<i64: 1, 1, 128>}]} {
    %c0 = arith.constant 0 : index
    %c0_0 = arith.constant 0 : index
    %0 = vector.load %arg3[%c0, %c0_0] : memref<1x320xf32, #tpu.memory_space<vmem>>, vector<1x320xf32>
    %cst = arith.constant 0.000000e+00 : f32
    %1 = vector.broadcast %cst : f32 to vector<1x320xf32>
    %cst_1 = arith.constant 0.000000e+00 : f32
    %2 = vector.broadcast %cst_1 : f32 to vector<16x320xf32>
    %cst_2 = arith.constant 0.000000e+00 : f32
    %3 = vector.broadcast %cst_2 : f32 to vector<16x320xf32>
    %c0_3 = arith.constant 0 : index
    %c0_4 = arith.constant 0 : index
    %c0_5 = arith.constant 0 : index
    %4 = vector.load %arg2[%c0_3, %c0_4, %c0_5] : memref<9x1x320xf32, #tpu.memory_space<vmem>>, vector<1x1x320xf32>
    %5 = vector.shape_cast %4 : vector<1x1x320xf32> to vector<1x320xf32>
    %c0_6 = arith.constant 0 : index
    %c0_7 = arith.constant 0 : index
    %c0_8 = arith.constant 0 : index
    %c0_9 = arith.constant 0 : index
    %c0_10 = arith.constant 0 : index
    %6 = vector.load %arg1[%c0_6, %c0_7, %c0_8, %c0_9, %c0_10] : memref<1x4x1x18x320xf32, #tpu.memory_space<vmem>>, vector<1x1x1x16x320xf32>
    %7 = vector.shape_cast %6 : vector<1x1x1x16x320xf32> to vector<16x320xf32>
    %8 = vector.broadcast %5 : vector<1x320xf32> to vector<16x320xf32>
    %9 = arith.mulf %7, %8 : vector<16x320xf32>
    %10 = arith.addf %2, %9 : vector<16x320xf32>
    %c0_11 = arith.constant 0 : index
    %c1 = arith.constant 1 : index
    %c0_12 = arith.constant 0 : index
    %c0_13 = arith.constant 0 : index
    %c0_14 = arith.constant 0 : index
    %11 = vector.load %arg1[%c0_11, %c1, %c0_12, %c0_13, %c0_14] : memref<1x4x1x18x320xf32, #tpu.memory_space<vmem>>, vector<1x1x1x16x320xf32>
    %12 = vector.shape_cast %11 : vector<1x1x1x16x320xf32> to vector<16x320xf32>
    %13 = vector.broadcast %5 : vector<1x320xf32> to vector<16x320xf32>
    %14 = arith.mulf %12, %13 : vector<16x320xf32>
    %15 = arith.addf %3, %14 : vector<16x320xf32>
    %c1_15 = arith.constant 1 : index
    %c0_16 = arith.constant 0 : index
    %c0_17 = arith.constant 0 : index
    %16 = vector.load %arg2[%c1_15, %c0_16, %c0_17] : memref<9x1x320xf32, #tpu.memory_space<vmem>>, vector<1x1x320xf32>
    %17 = vector.shape_cast %16 : vector<1x1x320xf32> to vector<1x320xf32>
    %c0_18 = arith.constant 0 : index
    %c1_19 = arith.constant 1 : index
    %c0_20 = arith.constant 0 : index
    %c0_21 = arith.constant 0 : index
    %c0_22 = arith.constant 0 : index
    %18 = vector.load %arg1[%c0_18, %c1_19, %c0_20, %c0_21, %c0_22] : memref<1x4x1x18x320xf32, #tpu.memory_space<vmem>>, vector<1x1x1x16x320xf32>
    %19 = vector.shape_cast %18 : vector<1x1x1x16x320xf32> to vector<16x320xf32>
    %20 = vector.broadcast %17 : vector<1x320xf32> to vector<16x320xf32>
    %21 = arith.mulf %19, %20 : vector<16x320xf32>
    %22 = arith.addf %10, %21 : vector<16x320xf32>
    %c0_23 = arith.constant 0 : index
    %c2 = arith.constant 2 : index
    %c0_24 = arith.constant 0 : index
    %c0_25 = arith.constant 0 : index
    %c0_26 = arith.constant 0 : index
    %23 = vector.load %arg1[%c0_23, %c2, %c0_24, %c0_25, %c0_26] : memref<1x4x1x18x320xf32, #tpu.memory_space<vmem>>, vector<1x1x1x16x320xf32>
    %24 = vector.shape_cast %23 : vector<1x1x1x16x320xf32> to vector<16x320xf32>
    %25 = vector.broadcast %17 : vector<1x320xf32> to vector<16x320xf32>
    %26 = arith.mulf %24, %25 : vector<16x320xf32>
    %27 = arith.addf %15, %26 : vector<16x320xf32>
    %c2_27 = arith.constant 2 : index
    %c0_28 = arith.constant 0 : index
    %c0_29 = arith.constant 0 : index
    %28 = vector.load %arg2[%c2_27, %c0_28, %c0_29] : memref<9x1x320xf32, #tpu.memory_space<vmem>>, vector<1x1x320xf32>
    %29 = vector.shape_cast %28 : vector<1x1x320xf32> to vector<1x320xf32>
    %c0_30 = arith.constant 0 : index
    %c2_31 = arith.constant 2 : index
    %c0_32 = arith.constant 0 : index
    %c0_33 = arith.constant 0 : index
    %c0_34 = arith.constant 0 : index
    %30 = vector.load %arg1[%c0_30, %c2_31, %c0_32, %c0_33, %c0_34] : memref<1x4x1x18x320xf32, #tpu.memory_space<vmem>>, vector<1x1x1x16x320xf32>
    %31 = vector.shape_cast %30 : vector<1x1x1x16x320xf32> to vector<16x320xf32>
    %32 = vector.broadcast %29 : vector<1x320xf32> to vector<16x320xf32>
    %33 = arith.mulf %31, %32 : vector<16x320xf32>
    %34 = arith.addf %22, %33 : vector<16x320xf32>
    %c0_35 = arith.constant 0 : index
    %c3 = arith.constant 3 : index
    %c0_36 = arith.constant 0 : index
    %c0_37 = arith.constant 0 : index
    %c0_38 = arith.constant 0 : index
    %35 = vector.load %arg1[%c0_35, %c3, %c0_36, %c0_37, %c0_38] : memref<1x4x1x18x320xf32, #tpu.memory_space<vmem>>, vector<1x1x1x16x320xf32>
    %36 = vector.shape_cast %35 : vector<1x1x1x16x320xf32> to vector<16x320xf32>
    %37 = vector.broadcast %29 : vector<1x320xf32> to vector<16x320xf32>
    %38 = arith.mulf %36, %37 : vector<16x320xf32>
    %39 = arith.addf %27, %38 : vector<16x320xf32>
    %c3_39 = arith.constant 3 : index
    %c0_40 = arith.constant 0 : index
    %c0_41 = arith.constant 0 : index
    %40 = vector.load %arg2[%c3_39, %c0_40, %c0_41] : memref<9x1x320xf32, #tpu.memory_space<vmem>>, vector<1x1x320xf32>
    %41 = vector.shape_cast %40 : vector<1x1x320xf32> to vector<1x320xf32>
    %c0_42 = arith.constant 0 : index
    %c0_43 = arith.constant 0 : index
    %c0_44 = arith.constant 0 : index
    %c1_45 = arith.constant 1 : index
    %c0_46 = arith.constant 0 : index
    %42 = vector.load %arg1[%c0_42, %c0_43, %c0_44, %c1_45, %c0_46] : memref<1x4x1x18x320xf32, #tpu.memory_space<vmem>>, vector<1x1x1x16x320xf32>
    %43 = vector.shape_cast %42 : vector<1x1x1x16x320xf32> to vector<16x320xf32>
    %44 = vector.broadcast %41 : vector<1x320xf32> to vector<16x320xf32>
    %45 = arith.mulf %43, %44 : vector<16x320xf32>
    %46 = arith.addf %34, %45 : vector<16x320xf32>
    %c0_47 = arith.constant 0 : index
    %c1_48 = arith.constant 1 : index
    %c0_49 = arith.constant 0 : index
    %c1_50 = arith.constant 1 : index
    %c0_51 = arith.constant 0 : index
    %47 = vector.load %arg1[%c0_47, %c1_48, %c0_49, %c1_50, %c0_51] : memref<1x4x1x18x320xf32, #tpu.memory_space<vmem>>, vector<1x1x1x16x320xf32>
    %48 = vector.shape_cast %47 : vector<1x1x1x16x320xf32> to vector<16x320xf32>
    %49 = vector.broadcast %41 : vector<1x320xf32> to vector<16x320xf32>
    %50 = arith.mulf %48, %49 : vector<16x320xf32>
    %51 = arith.addf %39, %50 : vector<16x320xf32>
    %c4 = arith.constant 4 : index
    %c0_52 = arith.constant 0 : index
    %c0_53 = arith.constant 0 : index
    %52 = vector.load %arg2[%c4, %c0_52, %c0_53] : memref<9x1x320xf32, #tpu.memory_space<vmem>>, vector<1x1x320xf32>
    %53 = vector.shape_cast %52 : vector<1x1x320xf32> to vector<1x320xf32>
    %c0_54 = arith.constant 0 : index
    %c1_55 = arith.constant 1 : index
    %c0_56 = arith.constant 0 : index
    %c1_57 = arith.constant 1 : index
    %c0_58 = arith.constant 0 : index
    %54 = vector.load %arg1[%c0_54, %c1_55, %c0_56, %c1_57, %c0_58] : memref<1x4x1x18x320xf32, #tpu.memory_space<vmem>>, vector<1x1x1x16x320xf32>
    %55 = vector.shape_cast %54 : vector<1x1x1x16x320xf32> to vector<16x320xf32>
    %56 = vector.broadcast %53 : vector<1x320xf32> to vector<16x320xf32>
    %57 = arith.mulf %55, %56 : vector<16x320xf32>
    %58 = arith.addf %46, %57 : vector<16x320xf32>
    %c0_59 = arith.constant 0 : index
    %c2_60 = arith.constant 2 : index
    %c0_61 = arith.constant 0 : index
    %c1_62 = arith.constant 1 : index
    %c0_63 = arith.constant 0 : index
    %59 = vector.load %arg1[%c0_59, %c2_60, %c0_61, %c1_62, %c0_63] : memref<1x4x1x18x320xf32, #tpu.memory_space<vmem>>, vector<1x1x1x16x320xf32>
    %60 = vector.shape_cast %59 : vector<1x1x1x16x320xf32> to vector<16x320xf32>
    %61 = vector.broadcast %53 : vector<1x320xf32> to vector<16x320xf32>
    %62 = arith.mulf %60, %61 : vector<16x320xf32>
    %63 = arith.addf %51, %62 : vector<16x320xf32>
    %c5 = arith.constant 5 : index
    %c0_64 = arith.constant 0 : index
    %c0_65 = arith.constant 0 : index
    %64 = vector.load %arg2[%c5, %c0_64, %c0_65] : memref<9x1x320xf32, #tpu.memory_space<vmem>>, vector<1x1x320xf32>
    %65 = vector.shape_cast %64 : vector<1x1x320xf32> to vector<1x320xf32>
    %c0_66 = arith.constant 0 : index
    %c2_67 = arith.constant 2 : index
    %c0_68 = arith.constant 0 : index
    %c1_69 = arith.constant 1 : index
    %c0_70 = arith.constant 0 : index
    %66 = vector.load %arg1[%c0_66, %c2_67, %c0_68, %c1_69, %c0_70] : memref<1x4x1x18x320xf32, #tpu.memory_space<vmem>>, vector<1x1x1x16x320xf32>
    %67 = vector.shape_cast %66 : vector<1x1x1x16x320xf32> to vector<16x320xf32>
    %68 = vector.broadcast %65 : vector<1x320xf32> to vector<16x320xf32>
    %69 = arith.mulf %67, %68 : vector<16x320xf32>
    %70 = arith.addf %58, %69 : vector<16x320xf32>
    %c0_71 = arith.constant 0 : index
    %c3_72 = arith.constant 3 : index
    %c0_73 = arith.constant 0 : index
    %c1_74 = arith.constant 1 : index
    %c0_75 = arith.constant 0 : index
    %71 = vector.load %arg1[%c0_71, %c3_72, %c0_73, %c1_74, %c0_75] : memref<1x4x1x18x320xf32, #tpu.memory_space<vmem>>, vector<1x1x1x16x320xf32>
    %72 = vector.shape_cast %71 : vector<1x1x1x16x320xf32> to vector<16x320xf32>
    %73 = vector.broadcast %65 : vector<1x320xf32> to vector<16x320xf32>
    %74 = arith.mulf %72, %73 : vector<16x320xf32>
    %75 = arith.addf %63, %74 : vector<16x320xf32>
    %c6 = arith.constant 6 : index
    %c0_76 = arith.constant 0 : index
    %c0_77 = arith.constant 0 : index
    %76 = vector.load %arg2[%c6, %c0_76, %c0_77] : memref<9x1x320xf32, #tpu.memory_space<vmem>>, vector<1x1x320xf32>
    %77 = vector.shape_cast %76 : vector<1x1x320xf32> to vector<1x320xf32>
    %c0_78 = arith.constant 0 : index
    %c0_79 = arith.constant 0 : index
    %c0_80 = arith.constant 0 : index
    %c2_81 = arith.constant 2 : index
    %c0_82 = arith.constant 0 : index
    %78 = vector.load %arg1[%c0_78, %c0_79, %c0_80, %c2_81, %c0_82] : memref<1x4x1x18x320xf32, #tpu.memory_space<vmem>>, vector<1x1x1x16x320xf32>
    %79 = vector.shape_cast %78 : vector<1x1x1x16x320xf32> to vector<16x320xf32>
    %80 = vector.broadcast %77 : vector<1x320xf32> to vector<16x320xf32>
    %81 = arith.mulf %79, %80 : vector<16x320xf32>
    %82 = arith.addf %70, %81 : vector<16x320xf32>
    %c0_83 = arith.constant 0 : index
    %c1_84 = arith.constant 1 : index
    %c0_85 = arith.constant 0 : index
    %c2_86 = arith.constant 2 : index
    %c0_87 = arith.constant 0 : index
    %83 = vector.load %arg1[%c0_83, %c1_84, %c0_85, %c2_86, %c0_87] : memref<1x4x1x18x320xf32, #tpu.memory_space<vmem>>, vector<1x1x1x16x320xf32>
    %84 = vector.shape_cast %83 : vector<1x1x1x16x320xf32> to vector<16x320xf32>
    %85 = vector.broadcast %77 : vector<1x320xf32> to vector<16x320xf32>
    %86 = arith.mulf %84, %85 : vector<16x320xf32>
    %87 = arith.addf %75, %86 : vector<16x320xf32>
    %c7 = arith.constant 7 : index
    %c0_88 = arith.constant 0 : index
    %c0_89 = arith.constant 0 : index
    %88 = vector.load %arg2[%c7, %c0_88, %c0_89] : memref<9x1x320xf32, #tpu.memory_space<vmem>>, vector<1x1x320xf32>
    %89 = vector.shape_cast %88 : vector<1x1x320xf32> to vector<1x320xf32>
    %c0_90 = arith.constant 0 : index
    %c1_91 = arith.constant 1 : index
    %c0_92 = arith.constant 0 : index
    %c2_93 = arith.constant 2 : index
    %c0_94 = arith.constant 0 : index
    %90 = vector.load %arg1[%c0_90, %c1_91, %c0_92, %c2_93, %c0_94] : memref<1x4x1x18x320xf32, #tpu.memory_space<vmem>>, vector<1x1x1x16x320xf32>
    %91 = vector.shape_cast %90 : vector<1x1x1x16x320xf32> to vector<16x320xf32>
    %92 = vector.broadcast %89 : vector<1x320xf32> to vector<16x320xf32>
    %93 = arith.mulf %91, %92 : vector<16x320xf32>
    %94 = arith.addf %82, %93 : vector<16x320xf32>
    %c0_95 = arith.constant 0 : index
    %c2_96 = arith.constant 2 : index
    %c0_97 = arith.constant 0 : index
    %c2_98 = arith.constant 2 : index
    %c0_99 = arith.constant 0 : index
    %95 = vector.load %arg1[%c0_95, %c2_96, %c0_97, %c2_98, %c0_99] : memref<1x4x1x18x320xf32, #tpu.memory_space<vmem>>, vector<1x1x1x16x320xf32>
    %96 = vector.shape_cast %95 : vector<1x1x1x16x320xf32> to vector<16x320xf32>
    %97 = vector.broadcast %89 : vector<1x320xf32> to vector<16x320xf32>
    %98 = arith.mulf %96, %97 : vector<16x320xf32>
    %99 = arith.addf %87, %98 : vector<16x320xf32>
    %c8 = arith.constant 8 : index
    %c0_100 = arith.constant 0 : index
    %c0_101 = arith.constant 0 : index
    %100 = vector.load %arg2[%c8, %c0_100, %c0_101] : memref<9x1x320xf32, #tpu.memory_space<vmem>>, vector<1x1x320xf32>
    %101 = vector.shape_cast %100 : vector<1x1x320xf32> to vector<1x320xf32>
    %c0_102 = arith.constant 0 : index
    %c2_103 = arith.constant 2 : index
    %c0_104 = arith.constant 0 : index
    %c2_105 = arith.constant 2 : index
    %c0_106 = arith.constant 0 : index
    %102 = vector.load %arg1[%c0_102, %c2_103, %c0_104, %c2_105, %c0_106] : memref<1x4x1x18x320xf32, #tpu.memory_space<vmem>>, vector<1x1x1x16x320xf32>
    %103 = vector.shape_cast %102 : vector<1x1x1x16x320xf32> to vector<16x320xf32>
    %104 = vector.broadcast %101 : vector<1x320xf32> to vector<16x320xf32>
    %105 = arith.mulf %103, %104 : vector<16x320xf32>
    %106 = arith.addf %94, %105 : vector<16x320xf32>
    %c0_107 = arith.constant 0 : index
    %c3_108 = arith.constant 3 : index
    %c0_109 = arith.constant 0 : index
    %c2_110 = arith.constant 2 : index
    %c0_111 = arith.constant 0 : index
    %107 = vector.load %arg1[%c0_107, %c3_108, %c0_109, %c2_110, %c0_111] : memref<1x4x1x18x320xf32, #tpu.memory_space<vmem>>, vector<1x1x1x16x320xf32>
    %108 = vector.shape_cast %107 : vector<1x1x1x16x320xf32> to vector<16x320xf32>
    %109 = vector.broadcast %101 : vector<1x320xf32> to vector<16x320xf32>
    %110 = arith.mulf %108, %109 : vector<16x320xf32>
    %111 = arith.addf %99, %110 : vector<16x320xf32>
    %112 = arith.maximumf %106, %111 : vector<16x320xf32>
    %113 = vector.extract_strided_slice %112 {offsets = [0, 0], sizes = [1, 320], strides = [1, 1]} : vector<16x320xf32> to vector<1x320xf32>
    %114 = vector.extract_strided_slice %112 {offsets = [1, 0], sizes = [1, 320], strides = [1, 1]} : vector<16x320xf32> to vector<1x320xf32>
    %115 = arith.maximumf %113, %114 : vector<1x320xf32>
    %116 = arith.addf %115, %0 : vector<1x320xf32>
    %cst_112 = arith.constant 0.000000e+00 : f32
    %117 = vector.broadcast %cst_112 : f32 to vector<1x320xf32>
    %118 = arith.maximumf %116, %117 : vector<1x320xf32>
    %119 = vector.extract_strided_slice %112 {offsets = [2, 0], sizes = [1, 320], strides = [1, 1]} : vector<16x320xf32> to vector<1x320xf32>
    %120 = vector.extract_strided_slice %112 {offsets = [3, 0], sizes = [1, 320], strides = [1, 1]} : vector<16x320xf32> to vector<1x320xf32>
    %121 = arith.maximumf %119, %120 : vector<1x320xf32>
    %122 = arith.addf %121, %0 : vector<1x320xf32>
    %cst_113 = arith.constant 0.000000e+00 : f32
    %123 = vector.broadcast %cst_113 : f32 to vector<1x320xf32>
    %124 = arith.maximumf %122, %123 : vector<1x320xf32>
    %125 = vector.extract_strided_slice %112 {offsets = [4, 0], sizes = [1, 320], strides = [1, 1]} : vector<16x320xf32> to vector<1x320xf32>
    %126 = vector.extract_strided_slice %112 {offsets = [5, 0], sizes = [1, 320], strides = [1, 1]} : vector<16x320xf32> to vector<1x320xf32>
    %127 = arith.maximumf %125, %126 : vector<1x320xf32>
    %128 = arith.addf %127, %0 : vector<1x320xf32>
    %cst_114 = arith.constant 0.000000e+00 : f32
    %129 = vector.broadcast %cst_114 : f32 to vector<1x320xf32>
    %130 = arith.maximumf %128, %129 : vector<1x320xf32>
    %131 = vector.extract_strided_slice %112 {offsets = [6, 0], sizes = [1, 320], strides = [1, 1]} : vector<16x320xf32> to vector<1x320xf32>
    %132 = vector.extract_strided_slice %112 {offsets = [7, 0], sizes = [1, 320], strides = [1, 1]} : vector<16x320xf32> to vector<1x320xf32>
    %133 = arith.maximumf %131, %132 : vector<1x320xf32>
    %134 = arith.addf %133, %0 : vector<1x320xf32>
    %cst_115 = arith.constant 0.000000e+00 : f32
    %135 = vector.broadcast %cst_115 : f32 to vector<1x320xf32>
    %136 = arith.maximumf %134, %135 : vector<1x320xf32>
    %137 = vector.extract_strided_slice %112 {offsets = [8, 0], sizes = [1, 320], strides = [1, 1]} : vector<16x320xf32> to vector<1x320xf32>
    %138 = vector.extract_strided_slice %112 {offsets = [9, 0], sizes = [1, 320], strides = [1, 1]} : vector<16x320xf32> to vector<1x320xf32>
    %139 = arith.maximumf %137, %138 : vector<1x320xf32>
    %140 = arith.addf %139, %0 : vector<1x320xf32>
    %cst_116 = arith.constant 0.000000e+00 : f32
    %141 = vector.broadcast %cst_116 : f32 to vector<1x320xf32>
    %142 = arith.maximumf %140, %141 : vector<1x320xf32>
    %143 = vector.extract_strided_slice %112 {offsets = [10, 0], sizes = [1, 320], strides = [1, 1]} : vector<16x320xf32> to vector<1x320xf32>
    %144 = vector.extract_strided_slice %112 {offsets = [11, 0], sizes = [1, 320], strides = [1, 1]} : vector<16x320xf32> to vector<1x320xf32>
    %145 = arith.maximumf %143, %144 : vector<1x320xf32>
    %146 = arith.addf %145, %0 : vector<1x320xf32>
    %cst_117 = arith.constant 0.000000e+00 : f32
    %147 = vector.broadcast %cst_117 : f32 to vector<1x320xf32>
    %148 = arith.maximumf %146, %147 : vector<1x320xf32>
    %149 = vector.extract_strided_slice %112 {offsets = [12, 0], sizes = [1, 320], strides = [1, 1]} : vector<16x320xf32> to vector<1x320xf32>
    %150 = vector.extract_strided_slice %112 {offsets = [13, 0], sizes = [1, 320], strides = [1, 1]} : vector<16x320xf32> to vector<1x320xf32>
    %151 = arith.maximumf %149, %150 : vector<1x320xf32>
    %152 = arith.addf %151, %0 : vector<1x320xf32>
    %cst_118 = arith.constant 0.000000e+00 : f32
    %153 = vector.broadcast %cst_118 : f32 to vector<1x320xf32>
    %154 = arith.maximumf %152, %153 : vector<1x320xf32>
    %155 = vector.extract_strided_slice %112 {offsets = [14, 0], sizes = [1, 320], strides = [1, 1]} : vector<16x320xf32> to vector<1x320xf32>
    %156 = vector.extract_strided_slice %112 {offsets = [15, 0], sizes = [1, 320], strides = [1, 1]} : vector<16x320xf32> to vector<1x320xf32>
    %157 = arith.maximumf %155, %156 : vector<1x320xf32>
    %158 = arith.addf %157, %0 : vector<1x320xf32>
    %cst_119 = arith.constant 0.000000e+00 : f32
    %159 = vector.broadcast %cst_119 : f32 to vector<1x320xf32>
    %160 = arith.maximumf %158, %159 : vector<1x320xf32>
    %161 = tpu.concatenate %1, %118, %124, %130, %136, %142, %148, %154, %160, %1 in 0 : vector<1x320xf32>, vector<1x320xf32>, vector<1x320xf32>, vector<1x320xf32>, vector<1x320xf32>, vector<1x320xf32>, vector<1x320xf32>, vector<1x320xf32>, vector<1x320xf32>, vector<1x320xf32> -> vector<10x320xf32>
    %162 = vector.shape_cast %161 : vector<10x320xf32> to vector<1x10x320xf32>
    %cst_120 = arith.constant 0.000000e+00 : f32
    %163 = vector.broadcast %cst_120 : f32 to vector<8x512xf32>
    %164 = vector.extract_strided_slice %162 {offsets = [0, 0, 0], sizes = [1, 8, 320], strides = [1, 1, 1]} : vector<1x10x320xf32> to vector<1x8x320xf32>
    %165 = vector.shape_cast %164 : vector<1x8x320xf32> to vector<8x320xf32>
    %166 = arith.truncf %165 : vector<8x320xf32> to vector<8x320xbf16>
    %c0_121 = arith.constant 0 : index
    %c0_122 = arith.constant 0 : index
    %c0_123 = arith.constant 0 : index
    %167 = vector.load %arg4[%c0_121, %c0_122, %c0_123] : memref<3x320x512xbf16, #tpu.memory_space<vmem>>, vector<1x320x512xbf16>
    %168 = vector.shape_cast %167 : vector<1x320x512xbf16> to vector<320x512xbf16>
    %cst_124 = arith.constant dense<0.000000e+00> : vector<8x512xf32>
    %169 = tpu.matmul %166, %168, %cst_124 {dimension_numbers = #tpu.dot_dimension_numbers<[1], [0], [0], [1], [0, 0, 1, 1], [], []>} : vector<8x320xbf16>, vector<320x512xbf16>, vector<8x512xf32> -> vector<8x512xf32>
    %170 = arith.addf %163, %169 : vector<8x512xf32>
    %171 = vector.extract_strided_slice %162 {offsets = [0, 1, 0], sizes = [1, 8, 320], strides = [1, 1, 1]} : vector<1x10x320xf32> to vector<1x8x320xf32>
    %172 = vector.shape_cast %171 : vector<1x8x320xf32> to vector<8x320xf32>
    %173 = arith.truncf %172 : vector<8x320xf32> to vector<8x320xbf16>
    %c1_125 = arith.constant 1 : index
    %c0_126 = arith.constant 0 : index
    %c0_127 = arith.constant 0 : index
    %174 = vector.load %arg4[%c1_125, %c0_126, %c0_127] : memref<3x320x512xbf16, #tpu.memory_space<vmem>>, vector<1x320x512xbf16>
    %175 = vector.shape_cast %174 : vector<1x320x512xbf16> to vector<320x512xbf16>
    %cst_128 = arith.constant dense<0.000000e+00> : vector<8x512xf32>
    %176 = tpu.matmul %173, %175, %cst_128 {dimension_numbers = #tpu.dot_dimension_numbers<[1], [0], [0], [1], [0, 0, 1, 1], [], []>} : vector<8x320xbf16>, vector<320x512xbf16>, vector<8x512xf32> -> vector<8x512xf32>
    %177 = arith.addf %170, %176 : vector<8x512xf32>
    %178 = vector.extract_strided_slice %162 {offsets = [0, 2, 0], sizes = [1, 8, 320], strides = [1, 1, 1]} : vector<1x10x320xf32> to vector<1x8x320xf32>
    %179 = vector.shape_cast %178 : vector<1x8x320xf32> to vector<8x320xf32>
    %180 = arith.truncf %179 : vector<8x320xf32> to vector<8x320xbf16>
    %c2_129 = arith.constant 2 : index
    %c0_130 = arith.constant 0 : index
    %c0_131 = arith.constant 0 : index
    %181 = vector.load %arg4[%c2_129, %c0_130, %c0_131] : memref<3x320x512xbf16, #tpu.memory_space<vmem>>, vector<1x320x512xbf16>
    %182 = vector.shape_cast %181 : vector<1x320x512xbf16> to vector<320x512xbf16>
    %cst_132 = arith.constant dense<0.000000e+00> : vector<8x512xf32>
    %183 = tpu.matmul %180, %182, %cst_132 {dimension_numbers = #tpu.dot_dimension_numbers<[1], [0], [0], [1], [0, 0, 1, 1], [], []>} : vector<8x320xbf16>, vector<320x512xbf16>, vector<8x512xf32> -> vector<8x512xf32>
    %184 = arith.addf %177, %183 : vector<8x512xf32>
    %185 = vector.extract_strided_slice %184 {offsets = [0, 0], sizes = [1, 512], strides = [1, 1]} : vector<8x512xf32> to vector<1x512xf32>
    %186 = vector.extract_strided_slice %184 {offsets = [1, 0], sizes = [1, 512], strides = [1, 1]} : vector<8x512xf32> to vector<1x512xf32>
    %187 = arith.maximumf %185, %186 : vector<1x512xf32>
    %188 = vector.extract_strided_slice %184 {offsets = [2, 0], sizes = [1, 512], strides = [1, 1]} : vector<8x512xf32> to vector<1x512xf32>
    %189 = vector.extract_strided_slice %184 {offsets = [3, 0], sizes = [1, 512], strides = [1, 1]} : vector<8x512xf32> to vector<1x512xf32>
    %190 = arith.maximumf %188, %189 : vector<1x512xf32>
    %191 = vector.extract_strided_slice %184 {offsets = [4, 0], sizes = [1, 512], strides = [1, 1]} : vector<8x512xf32> to vector<1x512xf32>
    %192 = vector.extract_strided_slice %184 {offsets = [5, 0], sizes = [1, 512], strides = [1, 1]} : vector<8x512xf32> to vector<1x512xf32>
    %193 = arith.maximumf %191, %192 : vector<1x512xf32>
    %194 = vector.extract_strided_slice %184 {offsets = [6, 0], sizes = [1, 512], strides = [1, 1]} : vector<8x512xf32> to vector<1x512xf32>
    %195 = vector.extract_strided_slice %184 {offsets = [7, 0], sizes = [1, 512], strides = [1, 1]} : vector<8x512xf32> to vector<1x512xf32>
    %196 = arith.maximumf %194, %195 : vector<1x512xf32>
    %197 = tpu.concatenate %187, %190, %193, %196 in 0 : vector<1x512xf32>, vector<1x512xf32>, vector<1x512xf32>, vector<1x512xf32> -> vector<4x512xf32>
    %198 = vector.extract_strided_slice %197 {offsets = [0, 0], sizes = [4, 64], strides = [1, 1]} : vector<4x512xf32> to vector<4x64xf32>
    %199 = vector.extract_strided_slice %197 {offsets = [0, 64], sizes = [4, 64], strides = [1, 1]} : vector<4x512xf32> to vector<4x64xf32>
    %200 = arith.maximumf %198, %199 : vector<4x64xf32>
    %201 = vector.extract_strided_slice %197 {offsets = [0, 128], sizes = [4, 64], strides = [1, 1]} : vector<4x512xf32> to vector<4x64xf32>
    %202 = vector.extract_strided_slice %197 {offsets = [0, 192], sizes = [4, 64], strides = [1, 1]} : vector<4x512xf32> to vector<4x64xf32>
    %203 = arith.maximumf %201, %202 : vector<4x64xf32>
    %204 = vector.extract_strided_slice %197 {offsets = [0, 256], sizes = [4, 64], strides = [1, 1]} : vector<4x512xf32> to vector<4x64xf32>
    %205 = vector.extract_strided_slice %197 {offsets = [0, 320], sizes = [4, 64], strides = [1, 1]} : vector<4x512xf32> to vector<4x64xf32>
    %206 = arith.maximumf %204, %205 : vector<4x64xf32>
    %207 = vector.extract_strided_slice %197 {offsets = [0, 384], sizes = [4, 64], strides = [1, 1]} : vector<4x512xf32> to vector<4x64xf32>
    %208 = vector.extract_strided_slice %197 {offsets = [0, 448], sizes = [4, 64], strides = [1, 1]} : vector<4x512xf32> to vector<4x64xf32>
    %209 = arith.maximumf %207, %208 : vector<4x64xf32>
    %210 = tpu.concatenate %200, %203, %206, %209 in 1 : vector<4x64xf32>, vector<4x64xf32>, vector<4x64xf32>, vector<4x64xf32> -> vector<4x256xf32>
    %c0_133 = arith.constant 0 : index
    %c0_134 = arith.constant 0 : index
    %211 = vector.load %arg5[%c0_133, %c0_134] : memref<1x256xf32, #tpu.memory_space<vmem>>, vector<1x256xf32>
    %212 = vector.broadcast %211 : vector<1x256xf32> to vector<4x256xf32>
    %213 = arith.addf %210, %212 : vector<4x256xf32>
    %cst_135 = arith.constant 0.000000e+00 : f32
    %214 = vector.broadcast %cst_135 : f32 to vector<4x256xf32>
    %215 = arith.maximumf %213, %214 : vector<4x256xf32>
    %216 = arith.truncf %215 : vector<4x256xf32> to vector<4x256xbf16>
    %cst_136 = arith.constant 0.000000e+00 : f32
    %217 = vector.broadcast %cst_136 : f32 to vector<1x128xf32>
    %218 = vector.extract_strided_slice %216 {offsets = [0, 0], sizes = [1, 256], strides = [1, 1]} : vector<4x256xbf16> to vector<1x256xbf16>
    %c0_137 = arith.constant 0 : index
    %c0_138 = arith.constant 0 : index
    %c0_139 = arith.constant 0 : index
    %219 = vector.load %arg6[%c0_137, %c0_138, %c0_139] : memref<4x256x128xbf16, #tpu.memory_space<vmem>>, vector<1x256x128xbf16>
    %220 = vector.shape_cast %219 : vector<1x256x128xbf16> to vector<256x128xbf16>
    %cst_140 = arith.constant dense<0.000000e+00> : vector<1x128xf32>
    %221 = tpu.matmul %218, %220, %cst_140 {dimension_numbers = #tpu.dot_dimension_numbers<[1], [0], [0], [1], [0, 0, 1, 1], [], []>} : vector<1x256xbf16>, vector<256x128xbf16>, vector<1x128xf32> -> vector<1x128xf32>
    %222 = arith.addf %217, %221 : vector<1x128xf32>
    %223 = vector.extract_strided_slice %216 {offsets = [1, 0], sizes = [1, 256], strides = [1, 1]} : vector<4x256xbf16> to vector<1x256xbf16>
    %c1_141 = arith.constant 1 : index
    %c0_142 = arith.constant 0 : index
    %c0_143 = arith.constant 0 : index
    %224 = vector.load %arg6[%c1_141, %c0_142, %c0_143] : memref<4x256x128xbf16, #tpu.memory_space<vmem>>, vector<1x256x128xbf16>
    %225 = vector.shape_cast %224 : vector<1x256x128xbf16> to vector<256x128xbf16>
    %cst_144 = arith.constant dense<0.000000e+00> : vector<1x128xf32>
    %226 = tpu.matmul %223, %225, %cst_144 {dimension_numbers = #tpu.dot_dimension_numbers<[1], [0], [0], [1], [0, 0, 1, 1], [], []>} : vector<1x256xbf16>, vector<256x128xbf16>, vector<1x128xf32> -> vector<1x128xf32>
    %227 = arith.addf %222, %226 : vector<1x128xf32>
    %228 = vector.extract_strided_slice %216 {offsets = [2, 0], sizes = [1, 256], strides = [1, 1]} : vector<4x256xbf16> to vector<1x256xbf16>
    %c2_145 = arith.constant 2 : index
    %c0_146 = arith.constant 0 : index
    %c0_147 = arith.constant 0 : index
    %229 = vector.load %arg6[%c2_145, %c0_146, %c0_147] : memref<4x256x128xbf16, #tpu.memory_space<vmem>>, vector<1x256x128xbf16>
    %230 = vector.shape_cast %229 : vector<1x256x128xbf16> to vector<256x128xbf16>
    %cst_148 = arith.constant dense<0.000000e+00> : vector<1x128xf32>
    %231 = tpu.matmul %228, %230, %cst_148 {dimension_numbers = #tpu.dot_dimension_numbers<[1], [0], [0], [1], [0, 0, 1, 1], [], []>} : vector<1x256xbf16>, vector<256x128xbf16>, vector<1x128xf32> -> vector<1x128xf32>
    %232 = arith.addf %227, %231 : vector<1x128xf32>
    %233 = vector.extract_strided_slice %216 {offsets = [3, 0], sizes = [1, 256], strides = [1, 1]} : vector<4x256xbf16> to vector<1x256xbf16>
    %c3_149 = arith.constant 3 : index
    %c0_150 = arith.constant 0 : index
    %c0_151 = arith.constant 0 : index
    %234 = vector.load %arg6[%c3_149, %c0_150, %c0_151] : memref<4x256x128xbf16, #tpu.memory_space<vmem>>, vector<1x256x128xbf16>
    %235 = vector.shape_cast %234 : vector<1x256x128xbf16> to vector<256x128xbf16>
    %cst_152 = arith.constant dense<0.000000e+00> : vector<1x128xf32>
    %236 = tpu.matmul %233, %235, %cst_152 {dimension_numbers = #tpu.dot_dimension_numbers<[1], [0], [0], [1], [0, 0, 1, 1], [], []>} : vector<1x256xbf16>, vector<256x128xbf16>, vector<1x128xf32> -> vector<1x128xf32>
    %237 = arith.addf %232, %236 : vector<1x128xf32>
    %c0_153 = arith.constant 0 : index
    %c0_154 = arith.constant 0 : index
    %238 = vector.load %arg7[%c0_153, %c0_154] : memref<1x128xf32, #tpu.memory_space<vmem>>, vector<1x128xf32>
    %239 = arith.addf %237, %238 : vector<1x128xf32>
    %cst_155 = arith.constant 0.000000e+00 : f32
    %240 = vector.broadcast %cst_155 : f32 to vector<1x128xf32>
    %241 = arith.maximumf %239, %240 : vector<1x128xf32>
    %242 = arith.truncf %241 : vector<1x128xf32> to vector<1x128xbf16>
    %c0_156 = arith.constant 0 : index
    %c0_157 = arith.constant 0 : index
    %243 = vector.load %arg8[%c0_156, %c0_157] : memref<128x128xbf16, #tpu.memory_space<vmem>>, vector<128x128xbf16>
    %cst_158 = arith.constant dense<0.000000e+00> : vector<1x128xf32>
    %244 = tpu.matmul %242, %243, %cst_158 {dimension_numbers = #tpu.dot_dimension_numbers<[1], [0], [0], [1], [0, 0, 1, 1], [], []>} : vector<1x128xbf16>, vector<128x128xbf16>, vector<1x128xf32> -> vector<1x128xf32>
    %c0_159 = arith.constant 0 : index
    %c0_160 = arith.constant 0 : index
    %245 = vector.load %arg9[%c0_159, %c0_160] : memref<1x128xf32, #tpu.memory_space<vmem>>, vector<1x128xf32>
    %246 = arith.addf %244, %245 : vector<1x128xf32>
    %c0_161 = arith.constant 0 : index
    %c0_162 = arith.constant 0 : index
    %c0_163 = arith.constant 0 : index
    %247 = vector.load %arg10[%c0_161, %c0_162, %c0_163] : memref<1x1x128xf32, #tpu.memory_space<vmem>>, vector<1x1x128xf32>
    %248 = vector.shape_cast %247 : vector<1x1x128xf32> to vector<1x128xf32>
    %249 = vector.shape_cast %246 : vector<1x128xf32> to vector<1x1x128xf32>
    tpu.vector_store %arg10[%c0_161, %c0_162, %c0_163], %249 {strides = array<i32>} : memref<1x1x128xf32, #tpu.memory_space<vmem>>, vector<1x1x128xf32>,
    return
  }
  func.func @transform_0(%arg0: i32) -> (i32, i32, i32, i32, i32) {
    %c0_i32 = arith.constant 0 : i32
    %c0_i32_0 = arith.constant 0 : i32
    %c0_i32_1 = arith.constant 0 : i32
    %c0_i32_2 = arith.constant 0 : i32
    %c0_i32_3 = arith.constant 0 : i32
    return %arg0, %c0_i32, %c0_i32_0, %c0_i32_1, %c0_i32_2 : i32, i32, i32, i32, i32
  }
  func.func @transform_1(%arg0: i32) -> (i32, i32, i32) {
    %c0_i32 = arith.constant 0 : i32
    %c0_i32_0 = arith.constant 0 : i32
    %c0_i32_1 = arith.constant 0 : i32
    %c0_i32_2 = arith.constant 0 : i32
    return %c0_i32, %c0_i32_0, %c0_i32_1 : i32, i32, i32
  }
  func.func @transform_2(%arg0: i32) -> (i32, i32) {
    %c0_i32 = arith.constant 0 : i32
    %c0_i32_0 = arith.constant 0 : i32
    %c0_i32_1 = arith.constant 0 : i32
    return %c0_i32, %c0_i32_0 : i32, i32
  }
  func.func @transform_3(%arg0: i32) -> (i32, i32, i32) {
    %c0_i32 = arith.constant 0 : i32
    %c0_i32_0 = arith.constant 0 : i32
    %c0_i32_1 = arith.constant 0 : i32
    %c0_i32_2 = arith.constant 0 : i32
    return %c0_i32, %c0_i32_0, %c0_i32_1 : i32, i32, i32
  }
  func.func @transform_4(%arg0: i32) -> (i32, i32) {
    %c0_i32 = arith.constant 0 : i32
    %c0_i32_0 = arith.constant 0 : i32
    %c0_i32_1 = arith.constant 0 : i32
    return %c0_i32, %c0_i32_0 : i32, i32
  }
  func.func @transform_5(%arg0: i32) -> (i32, i32, i32) {
    %c0_i32 = arith.constant 0 : i32
    %c0_i32_0 = arith.constant 0 : i32
    %c0_i32_1 = arith.constant 0 : i32
    %c0_i32_2 = arith.constant 0 : i32
    return %c0_i32, %c0_i32_0, %c0_i32_1 : i32, i32, i32
  }
  func.func @transform_6(%arg0: i32) -> (i32, i32) {
    %c0_i32 = arith.constant 0 : i32
    %c0_i32_0 = arith.constant 0 : i32
    %c0_i32_1 = arith.constant 0 : i32
    return %c0_i32, %c0_i32_0 : i32, i32
  }
  func.func @transform_7(%arg0: i32) -> (i32, i32) {
    %c0_i32 = arith.constant 0 : i32
    %c0_i32_0 = arith.constant 0 : i32
    %c0_i32_1 = arith.constant 0 : i32
    return %c0_i32, %c0_i32_0 : i32, i32
  }
  func.func @transform_8(%arg0: i32) -> (i32, i32) {
    %c0_i32 = arith.constant 0 : i32
    %c0_i32_0 = arith.constant 0 : i32
    %c0_i32_1 = arith.constant 0 : i32
    return %c0_i32, %c0_i32_0 : i32, i32
  }
  func.func @transform_9(%arg0: i32) -> (i32, i32, i32) {
    %c0_i32 = arith.constant 0 : i32
    %c0_i32_0 = arith.constant 0 : i32
    %c0_i32_1 = arith.constant 0 : i32
    return %arg0, %c0_i32, %c0_i32_0 : i32, i32, i32
  }
}

</mosaic_0001>

<llo_original>
// kernel: cnn_forward.1
$region0: #{cnn_forward.1}
  #allocation0 [shape = 'u32[]', space=smem, size = 0x4, offset = 0x4, fixed_abs, tag = 'smem constant byte address 0x4 - core index']
  #allocation1 [shape = 'u32[144,128]{1,0:T(1,128)}', space=vmem, size = 0x12000, scoped, tag = 'internal scratch']
  %s0 = inlined_call_operand.vmem [shape: f32[2,4,1,18,320], index: 0, kind: input, shape index: {}]
  %s1 = inlined_call_operand.vmem [shape: f32[9,1,320], index: 1, kind: input, shape index: {}]
  %s2 = inlined_call_operand.vmem [shape: f32[1,320], index: 2, kind: input, shape index: {}]
  %s3 = inlined_call_operand.vmem [shape: bf16[3,320,512], index: 3, kind: input, shape index: {}]
  %s4 = inlined_call_operand.vmem [shape: f32[1,256], index: 4, kind: input, shape index: {}]
  %s5 = inlined_call_operand.vmem [shape: bf16[4,256,128], index: 5, kind: input, shape index: {}]
  %s6 = inlined_call_operand.vmem [shape: f32[1,128], index: 6, kind: input, shape index: {}]
  %s7 = inlined_call_operand.vmem [shape: bf16[128,128], index: 7, kind: input, shape index: {}]
  %s8 = inlined_call_operand.vmem [shape: f32[1,128], index: 8, kind: input, shape index: {}]
  %s9 = inlined_call_operand.hbm [shape: f32[2,1,128], index: 9, kind: output, shape index: {}]
  %s10 = sld [smem:[#allocation0]]
  $region69: #{cnn_forward.1} parent=0
    _
  %s12 = ssub.s32 1, %s10
  %s13 = scalar_select 0, %s12, %s10
  $region1: #{cnn_forward.1} parent=0
    #allocation2 [shape = 'u8[1024]{0}', space=vmem, size = 0x400, scoped, tag = 'output window, operand 0']
    #allocation3 [shape = 's32[2]{0}', space=sflag, size = 0x8, scoped, tag = 'scoped memory for cnn_forward.1']
    %14 = vsyncpa [#allocation3], 0
    %s15 = scalar_lea.sflag [#allocation3], 1
    %16 = vsyncpa %s15, 0
    loop: start=0, step=1, limit=4
    $region2: #{cnn_forward.1} parent=1 // loop_pre_header
      _
    $region3: #{cnn_forward.1} parent=1 // loop_header
      %s18 = sphi 0, %s22
      %p19 = scmp.ge.s32.totalorder %s18, 4
      %s28 = sphi 0, %s30
      %s31 = sphi 0, %s28
      %s32 = sphi 0, %s31
      %s48 = sphi 0, %s32
      %s52 = sphi 0, %s52
      %s54 = sphi 0, %s52
      %s55 = sphi 0, %s54
      %s69 = sphi 0, %s55
      %s73 = sphi 0, %s73
      %s75 = sphi 0, %s73
      %s76 = sphi 0, %s75
      %s90 = sphi 0, %s76
      %s94 = sphi 0, %s94
      %s96 = sphi 0, %s94
      %s97 = sphi 0, %s96
      %s111 = sphi 0, %s97
      %s115 = sphi 0, %s115
      %s117 = sphi 0, %s115
      %s118 = sphi 0, %s117
      %s132 = sphi 0, %s118
      %s136 = sphi 0, %s136
      %s138 = sphi 0, %s136
      %s139 = sphi 0, %s138
      %s153 = sphi 0, %s139
      %s157 = sphi 0, %s157
      %s159 = sphi 0, %s157
      %s160 = sphi 0, %s159
      %s174 = sphi 0, %s160
      %s178 = sphi 0, %s178
      %s180 = sphi 0, %s178
      %s181 = sphi 0, %s180
      %s195 = sphi 0, %s181
      %s199 = sphi 0, %s199
      %s201 = sphi 0, %s199
      %s202 = sphi 0, %s201
      %s216 = sphi 0, %s202
      %s222 = sphi 0, %s224
      %s225 = sphi 0, %s222
      %s226 = sphi 0, %s225
      %s242 = sphi 0, %s226
    $region4: #{cnn_forward.1} parent=1 // loop_header_branch
      %21 = sbr.rel (%p19) target = $region8
    $region5: #{cnn_forward.1} parent=1 // loop_body
      %s23 = ssub.s32 %s18, 1
      %s24 = ssub.s32 %s18, 2
      %s25 = sadd.s32 %s18, 1
      %s26 = ssub.s32 %s18, %s25
      %p27 = scmp.eq.s32.totalorder %s26, 0
      %s29 = sadd.s32 %s28, 1
      %s30 = scalar_select %p27, %s28, %s29
      %p33 = pneg %p27
      %p34 = scmp.eq.s32.totalorder %s18, 1
      %p35 = por %p33, %p34
      %p36 = scmp.ne.s32.totalorder %s28, %s31
      %p37 = scmp.eq.s32.totalorder %s18, 0
      %p38 = por %p36, %p37
      %p39 = scmp.ne.s32.totalorder %s28, %s31
      %p40 = scmp.eq.s32.totalorder %s23, 1
      %p41 = por %p39, %p40
      %p42 = scmp.ne.s32.totalorder %s31, %s32
      %p43 = scmp.eq.s32.totalorder %s23, 0
      %p44 = por %p42, %p43
      %p45 = scmp.ne.s32.totalorder %s31, %s32
      %p46 = scmp.eq.s32.totalorder %s24, 1
      %p47 = por %p45, %p46
      %p49 = scmp.ne.s32.totalorder %s32, %s48
      %p50 = scmp.eq.s32.totalorder %s24, 0
      %p51 = por %p49, %p50
      %s53 = sadd.s32 %s52, 1
      %p56 = scmp.eq.s32.totalorder %s18, 1
      %p57 = scmp.ne.s32.totalorder %s52, %s54
      %p58 = scmp.eq.s32.totalorder %s18, 0
      %p59 = por %p57, %p58
      %p60 = scmp.ne.s32.totalorder %s52, %s54
      %p61 = scmp.eq.s32.totalorder %s23, 1
      %p62 = por %p60, %p61
      %p63 = scmp.ne.s32.totalorder %s54, %s55
      %p64 = scmp.eq.s32.totalorder %s23, 0
      %p65 = por %p63, %p64
      %p66 = scmp.ne.s32.totalorder %s54, %s55
      %p67 = scmp.eq.s32.totalorder %s24, 1
      %p68 = por %p66, %p67
      %p70 = scmp.ne.s32.totalorder %s55, %s69
      %p71 = scmp.eq.s32.totalorder %s24, 0
      %p72 = por %p70, %p71
      %s74 = sadd.s32 %s73, 1
      %p77 = scmp.eq.s32.totalorder %s18, 1
      %p78 = scmp.ne.s32.totalorder %s73, %s75
      %p79 = scmp.eq.s32.totalorder %s18, 0
      %p80 = por %p78, %p79
      %p81 = scmp.ne.s32.totalorder %s73, %s75
      %p82 = scmp.eq.s32.totalorder %s23, 1
      %p83 = por %p81, %p82
      %p84 = scmp.ne.s32.totalorder %s75, %s76
      %p85 = scmp.eq.s32.totalorder %s23, 0
      %p86 = por %p84, %p85
      %p87 = scmp.ne.s32.totalorder %s75, %s76
      %p88 = scmp.eq.s32.totalorder %s24, 1
      %p89 = por %p87, %p88
      %p91 = scmp.ne.s32.totalorder %s76, %s90
      %p92 = scmp.eq.s32.totalorder %s24, 0
      %p93 = por %p91, %p92
      %s95 = sadd.s32 %s94, 1
      %p98 = scmp.eq.s32.totalorder %s18, 1
      %p99 = scmp.ne.s32.totalorder %s94, %s96
      %p100 = scmp.eq.s32.totalorder %s18, 0
      %p101 = por %p99, %p100
      %p102 = scmp.ne.s32.totalorder %s94, %s96
      %p103 = scmp.eq.s32.totalorder %s23, 1
      %p104 = por %p102, %p103
      %p105 = scmp.ne.s32.totalorder %s96, %s97
      %p106 = scmp.eq.s32.totalorder %s23, 0
      %p107 = por %p105, %p106
      %p108 = scmp.ne.s32.totalorder %s96, %s97
      %p109 = scmp.eq.s32.totalorder %s24, 1
      %p110 = por %p108, %p109
      %p112 = scmp.ne.s32.totalorder %s97, %s111
      %p113 = scmp.eq.s32.totalorder %s24, 0
      %p114 = por %p112, %p113
      %s116 = sadd.s32 %s115, 1
      %p119 = scmp.eq.s32.totalorder %s18, 1
      %p120 = scmp.ne.s32.totalorder %s115, %s117
      %p121 = scmp.eq.s32.totalorder %s18, 0
      %p122 = por %p120, %p121
      %p123 = scmp.ne.s32.totalorder %s115, %s117
      %p124 = scmp.eq.s32.totalorder %s23, 1
      %p125 = por %p123, %p124
      %p126 = scmp.ne.s32.totalorder %s117, %s118
      %p127 = scmp.eq.s32.totalorder %s23, 0
      %p128 = por %p126, %p127
      %p129 = scmp.ne.s32.totalorder %s117, %s118
      %p130 = scmp.eq.s32.totalorder %s24, 1
      %p131 = por %p129, %p130
      %p133 = scmp.ne.s32.totalorder %s118, %s132
      %p134 = scmp.eq.s32.totalorder %s24, 0
      %p135 = por %p133, %p134
      %s137 = sadd.s32 %s136, 1
      %p140 = scmp.eq.s32.totalorder %s18, 1
      %p141 = scmp.ne.s32.totalorder %s136, %s138
      %p142 = scmp.eq.s32.totalorder %s18, 0
      %p143 = por %p141, %p142
      %p144 = scmp.ne.s32.totalorder %s136, %s138
      %p145 = scmp.eq.s32.totalorder %s23, 1
      %p146 = por %p144, %p145
      %p147 = scmp.ne.s32.totalorder %s138, %s139
      %p148 = scmp.eq.s32.totalorder %s23, 0
      %p149 = por %p147, %p148
      %p150 = scmp.ne.s32.totalorder %s138, %s139
      %p151 = scmp.eq.s32.totalorder %s24, 1
      %p152 = por %p150, %p151
      %p154 = scmp.ne.s32.totalorder %s139, %s153
      %p155 = scmp.eq.s32.totalorder %s24, 0
      %p156 = por %p154, %p155
      %s158 = sadd.s32 %s157, 1
      %p161 = scmp.eq.s32.totalorder %s18, 1
      %p162 = scmp.ne.s32.totalorder %s157, %s159
      %p163 = scmp.eq.s32.totalorder %s18, 0
      %p164 = por %p162, %p163
      %p165 = scmp.ne.s32.totalorder %s157, %s159
      %p166 = scmp.eq.s32.totalorder %s23, 1
      %p167 = por %p165, %p166
      %p168 = scmp.ne.s32.totalorder %s159, %s160
      %p169 = scmp.eq.s32.totalorder %s23, 0
      %p170 = por %p168, %p169
      %p171 = scmp.ne.s32.totalorder %s159, %s160
      %p172 = scmp.eq.s32.totalorder %s24, 1
      %p173 = por %p171, %p172
      %p175 = scmp.ne.s32.totalorder %s160, %s174
      %p176 = scmp.eq.s32.totalorder %s24, 0
      %p177 = por %p175, %p176
      %s179 = sadd.s32 %s178, 1
      %p182 = scmp.eq.s32.totalorder %s18, 1
      %p183 = scmp.ne.s32.totalorder %s178, %s180
      %p184 = scmp.eq.s32.totalorder %s18, 0
      %p185 = por %p183, %p184
      %p186 = scmp.ne.s32.totalorder %s178, %s180
      %p187 = scmp.eq.s32.totalorder %s23, 1
      %p188 = por %p186, %p187
      %p189 = scmp.ne.s32.totalorder %s180, %s181
      %p190 = scmp.eq.s32.totalorder %s23, 0
      %p191 = por %p189, %p190
      %p192 = scmp.ne.s32.totalorder %s180, %s181
      %p193 = scmp.eq.s32.totalorder %s24, 1
      %p194 = por %p192, %p193
      %p196 = scmp.ne.s32.totalorder %s181, %s195
      %p197 = scmp.eq.s32.totalorder %s24, 0
      %p198 = por %p196, %p197
      %s200 = sadd.s32 %s199, 1
      %p203 = scmp.eq.s32.totalorder %s18, 1
      %p204 = scmp.ne.s32.totalorder %s199, %s201
      %p205 = scmp.eq.s32.totalorder %s18, 0
      %p206 = por %p204, %p205
      %p207 = scmp.ne.s32.totalorder %s199, %s201
      %p208 = scmp.eq.s32.totalorder %s23, 1
      %p209 = por %p207, %p208
      %p210 = scmp.ne.s32.totalorder %s201, %s202
      %p211 = scmp.eq.s32.totalorder %s23, 0
      %p212 = por %p210, %p211
      %p213 = scmp.ne.s32.totalorder %s201, %s202
      %p214 = scmp.eq.s32.totalorder %s24, 1
      %p215 = por %p213, %p214
      %p217 = scmp.ne.s32.totalorder %s202, %s216
      %p218 = scmp.eq.s32.totalorder %s24, 0
      %p219 = por %p217, %p218
      %s220 = ssub.s32 %s18, %s25
      %p221 = scmp.eq.s32.totalorder %s220, 0
      %s223 = sadd.s32 %s222, 1
      %s224 = scalar_select %p221, %s222, %s223
      %p227 = pneg %p221
      %p228 = scmp.eq.s32.totalorder %s18, 1
      %p229 = por %p227, %p228
      %p230 = scmp.ne.s32.totalorder %s222, %s225
      %p231 = scmp.eq.s32.totalorder %s18, 0
      %p232 = por %p230, %p231
      %p233 = scmp.ne.s32.totalorder %s222, %s225
      %p234 = scmp.eq.s32.totalorder %s23, 1
      %p235 = por %p233, %p234
      %p236 = scmp.ne.s32.totalorder %s225, %s226
      %p237 = scmp.eq.s32.totalorder %s23, 0
      %p238 = por %p236, %p237
      %p239 = scmp.ne.s32.totalorder %s225, %s226
      %p240 = scmp.eq.s32.totalorder %s24, 1
      %p241 = por %p239, %p240
      %p243 = scmp.ne.s32.totalorder %s226, %s242
      %p244 = scmp.eq.s32.totalorder %s24, 0
      %p245 = por %p243, %p244
      %p246 = scmp.le.s32.totalorder 1, %s18
      %p247 = scmp.lt.s32.totalorder %s18, 3
      %p248 = pnand %p246, %p247
      %p249 = pneg %p248
      // Predicated region
      $region9: #{cnn_forward.1} parent=5 // pred_check
        _
      $region10: #{cnn_forward.1} parent=5 // pred_check_branch
        %251 = sbr.rel (%p248) target = $region12
      $region11: #{cnn_forward.1} parent=5 // pred_region
        %s252 = ssub.s32 %s18, 1
        // Predicated region
        $region13: #{cnn_forward.1} parent=11 // pred_check
          %p253 = pneg %p65
        $region14: #{cnn_forward.1} parent=11 // pred_check_branch
          %255 = sbr.rel (%p253) target = $region16
        $region15: #{cnn_forward.1} parent=11 // pred_region
          _
        $region16: #{cnn_forward.1} parent=11 // pred_fallthru
          _
        // Predicated region
        $region17: #{cnn_forward.1} parent=11 // pred_check
          %p256 = pneg %p86
        $region18: #{cnn_forward.1} parent=11 // pred_check_branch
          %258 = sbr.rel (%p256) target = $region20
        $region19: #{cnn_forward.1} parent=11 // pred_region
          _
        $region20: #{cnn_forward.1} parent=11 // pred_fallthru
          _
        // Predicated region
        $region21: #{cnn_forward.1} parent=11 // pred_check
          %p259 = pneg %p107
        $region22: #{cnn_forward.1} parent=11 // pred_check_branch
          %261 = sbr.rel (%p259) target = $region24
        $region23: #{cnn_forward.1} parent=11 // pred_region
          _
        $region24: #{cnn_forward.1} parent=11 // pred_fallthru
          _
        // Predicated region
        $region25: #{cnn_forward.1} parent=11 // pred_check
          %p262 = pneg %p128
        $region26: #{cnn_forward.1} parent=11 // pred_check_branch
          %264 = sbr.rel (%p262) target = $region28
        $region27: #{cnn_forward.1} parent=11 // pred_region
          _
        $region28: #{cnn_forward.1} parent=11 // pred_fallthru
          _
        // Predicated region
        $region29: #{cnn_forward.1} parent=11 // pred_check
          %p265 = pneg %p149
        $region30: #{cnn_forward.1} parent=11 // pred_check_branch
          %267 = sbr.rel (%p265) target = $region32
        $region31: #{cnn_forward.1} parent=11 // pred_region
          _
        $region32: #{cnn_forward.1} parent=11 // pred_fallthru
          _
        // Predicated region
        $region33: #{cnn_forward.1} parent=11 // pred_check
          %p268 = pneg %p170
        $region34: #{cnn_forward.1} parent=11 // pred_check_branch
          %270 = sbr.rel (%p268) target = $region36
        $region35: #{cnn_forward.1} parent=11 // pred_region
          _
        $region36: #{cnn_forward.1} parent=11 // pred_fallthru
          _
        // Predicated region
        $region37: #{cnn_forward.1} parent=11 // pred_check
          %p271 = pneg %p191
        $region38: #{cnn_forward.1} parent=11 // pred_check_branch
          %273 = sbr.rel (%p271) target = $region40
        $region39: #{cnn_forward.1} parent=11 // pred_region
          _
        $region40: #{cnn_forward.1} parent=11 // pred_fallthru
          _
        // Predicated region
        $region41: #{cnn_forward.1} parent=11 // pred_check
          %p274 = pneg %p212
        $region42: #{cnn_forward.1} parent=11 // pred_check_branch
          %276 = sbr.rel (%p274) target = $region44
        $region43: #{cnn_forward.1} parent=11 // pred_region
          _
        $region44: #{cnn_forward.1} parent=11 // pred_fallthru
          _
      $region12: #{cnn_forward.1} parent=5 // pred_fallthru
        _
      %p277 = scmp.lt.s32.totalorder %s18, 2
      // Predicated region
      $region45: #{cnn_forward.1} parent=5 // pred_check
        %p278 = pneg %p277
      $region46: #{cnn_forward.1} parent=5 // pred_check_branch
        %280 = sbr.rel (%p278) target = $region48
      $region47: #{cnn_forward.1} parent=5 // pred_region
        // Predicated region
        $region49: #{cnn_forward.1} parent=47 // pred_check
          %p281 = pneg %p38
        $region50: #{cnn_forward.1} parent=47 // pred_check_branch
          %283 = sbr.rel (%p281) target = $region52
        $region51: #{cnn_forward.1} parent=47 // pred_region
          %p284 = scmp.lt.s32.totalorder %s18, 1
          %s285 = scalar_select %p284, %s18, 1
          %s286 = smul.addr %s285, 36
          %s287 = smul.addr %s286, 8
          %s288 = scalar_lea.vmem %s0, %s287
        $region52: #{cnn_forward.1} parent=47 // pred_fallthru
          _
      $region48: #{cnn_forward.1} parent=5 // pred_fallthru
        _
      %p289 = scmp.le.s32.totalorder 1, %s18
      %p290 = scmp.lt.s32.totalorder %s18, 3
      %p291 = pnand %p289, %p290
      %p292 = pneg %p291
      // Predicated region
      $region53: #{cnn_forward.1} parent=5 // pred_check
        _
      $region54: #{cnn_forward.1} parent=5 // pred_check_branch
        %294 = sbr.rel (%p291) target = $region56
      $region55: #{cnn_forward.1} parent=5 // pred_region
        %s295 = ssub.s32 %s18, 1
        %p296 = scmp.lt.s32.totalorder %s23, 1
        %s297 = scalar_select %p296, %s23, 1
        %s298 = smul.addr %s297, 36
        %s299 = smul.addr %s298, 8
        %s300 = scalar_lea.vmem %s0, %s299
        %p301 = pneg %p44
        %p302 = pneg %p41
        %p303 = pneg %p65
        %p304 = pneg %p62
        %p305 = pneg %p86
        %p306 = pneg %p83
        %p307 = pneg %p107
        %p308 = pneg %p104
        %p309 = pneg %p128
        %p310 = pneg %p125
        %p311 = pneg %p149
        %p312 = pneg %p146
        %p313 = pneg %p170
        %p314 = pneg %p167
        %p315 = pneg %p191
        %p316 = pneg %p188
        %p317 = pneg %p212
        %p318 = pneg %p209
        %p319 = pneg %p238
        %p320 = pneg %p235
        %s321 = sand.u32 %s225, 1
        %s322 = scalar_lea.sflag [#allocation3], %s321
        %s323 = sand.u32 %s225, 1
        %s324 = scalar_lea.vmem [#allocation2], %s323
        %p325 = scmp.lt.s32.totalorder %s23, 1
        %s326 = scalar_select %p325, %s23, 1
        %s327 = smul.addr %s326, 36
        %s328 = smul.addr %s327, 8
        %s329 = scalar_lea.vmem %s0, %s328
        %v331 = vld [vmem:[%s2] sm:$0x7]
        %v332 = vld [vmem:[%s1] sm:$0x7]
        %v333 = vld [vmem:[%s329] sm:$0xff]
        %v334 = vld [vmem:[%s329 + $0x8] sm:$0xff]
        %v335 = vld [vmem:[%s329 + $0x10] sm:$0xff]
        %v336 = vld [vmem:[%s329 + $0x18] sm:$0xff]
        %v337 = vld [vmem:[%s329 + $0x20] sm:$0xff]
        %v338 = vld [vmem:[%s329 + $0x28] sm:$0xff]
        %v340 = vlaneseq
        %v341 = vshrl.u32 %v340, 7
        %v342 = vsub.s32 0, %v341
        %v343 = vrot.slane %v332, %v342
        %v344 = vlaneseq
        %v345 = vshrl.u32 %v344, 7
        %v346 = vsub.s32 1, %v345
        %v347 = vrot.slane %v332, %v346
        %v348 = vlaneseq
        %v349 = vshrl.u32 %v348, 7
        %v350 = vsub.s32 2, %v349
        %v351 = vrot.slane %v332, %v350
        %v355 = vmul.f32 %v333, %v343
        %v356 = vmul.f32 %v334, %v347
        %v357 = vmul.f32 %v335, %v351
        %v358 = vmul.f32 %v336, %v343
        %v359 = vmul.f32 %v337, %v347
        %v360 = vmul.f32 %v338, %v351
        %v361 = vadd.f32 %v355, 0.0
        %v362 = vadd.f32 %v356, 0.0
        %v363 = vadd.f32 %v357, 0.0
        %v364 = vadd.f32 %v358, 0.0
        %v365 = vadd.f32 %v359, 0.0
        %v366 = vadd.f32 %v360, 0.0
        %s367 = scalar_lea.vmem %s329, 72
        %v368 = vld [vmem:[%s367] sm:$0xff]
        %v369 = vld [vmem:[%s367 + $0x8] sm:$0xff]
        %v370 = vld [vmem:[%s367 + $0x10] sm:$0xff]
        %v371 = vld [vmem:[%s367 + $0x18] sm:$0xff]
        %v372 = vld [vmem:[%s367 + $0x20] sm:$0xff]
        %v373 = vld [vmem:[%s367 + $0x28] sm:$0xff]
        %v374 = vmul.f32 %v368, %v343
        %v375 = vmul.f32 %v369, %v347
        %v376 = vmul.f32 %v370, %v351
        %v377 = vmul.f32 %v371, %v343
        %v378 = vmul.f32 %v372, %v347
        %v379 = vmul.f32 %v373, %v351
        %v380 = vadd.f32 %v374, 0.0
        %v381 = vadd.f32 %v375, 0.0
        %v382 = vadd.f32 %v376, 0.0
        %v383 = vadd.f32 %v377, 0.0
        %v384 = vadd.f32 %v378, 0.0
        %v385 = vadd.f32 %v379, 0.0
        %s386 = scalar_lea.vmem %s1, 3
        %v387 = vld [vmem:[%s386] sm:$0x7]
        %v389 = vlaneseq
        %v390 = vshrl.u32 %v389, 7
        %v391 = vsub.s32 0, %v390
        %v392 = vrot.slane %v387, %v391
        %v393 = vlaneseq
        %v394 = vshrl.u32 %v393, 7
        %v395 = vsub.s32 1, %v394
        %v396 = vrot.slane %v387, %v395
        %v397 = vlaneseq
        %v398 = vshrl.u32 %v397, 7
        %v399 = vsub.s32 2, %v398
        %v400 = vrot.slane %v387, %v399
        %v404 = vmul.f32 %v368, %v392
        %v405 = vmul.f32 %v369, %v396
        %v406 = vmul.f32 %v370, %v400
        %v407 = vmul.f32 %v371, %v392
        %v408 = vmul.f32 %v372, %v396
        %v409 = vmul.f32 %v373, %v400
        %v410 = vadd.f32 %v361, %v404
        %v411 = vadd.f32 %v362, %v405
        %v412 = vadd.f32 %v363, %v406
        %v413 = vadd.f32 %v364, %v407
        %v414 = vadd.f32 %v365, %v408
        %v415 = vadd.f32 %v366, %v409
        %s416 = scalar_lea.vmem %s329, 144
        %v417 = vld [vmem:[%s416] sm:$0xff]
        %v418 = vld [vmem:[%s416 + $0x8] sm:$0xff]
        %v419 = vld [vmem:[%s416 + $0x10] sm:$0xff]
        %v420 = vld [vmem:[%s416 + $0x18] sm:$0xff]
        %v421 = vld [vmem:[%s416 + $0x20] sm:$0xff]
        %v422 = vld [vmem:[%s416 + $0x28] sm:$0xff]
        %v423 = vmul.f32 %v417, %v392
        %v424 = vmul.f32 %v418, %v396
        %v425 = vmul.f32 %v419, %v400
        %v426 = vmul.f32 %v420, %v392
        %v427 = vmul.f32 %v421, %v396
        %v428 = vmul.f32 %v422, %v400
        %v429 = vadd.f32 %v380, %v423
        %v430 = vadd.f32 %v381, %v424
        %v431 = vadd.f32 %v382, %v425
        %v432 = vadd.f32 %v383, %v426
        %v433 = vadd.f32 %v384, %v427
        %v434 = vadd.f32 %v385, %v428
        %s435 = scalar_lea.vmem %s1, 6
        %v436 = vld [vmem:[%s435] sm:$0x7]
        %v438 = vlaneseq
        %v439 = vshrl.u32 %v438, 7
        %v440 = vsub.s32 0, %v439
        %v441 = vrot.slane %v436, %v440
        %v442 = vlaneseq
        %v443 = vshrl.u32 %v442, 7
        %v444 = vsub.s32 1, %v443
        %v445 = vrot.slane %v436, %v444
        %v446 = vlaneseq
        %v447 = vshrl.u32 %v446, 7
        %v448 = vsub.s32 2, %v447
        %v449 = vrot.slane %v436, %v448
        %v453 = vmul.f32 %v417, %v441
        %v454 = vmul.f32 %v418, %v445
        %v455 = vmul.f32 %v419, %v449
        %v456 = vmul.f32 %v420, %v441
        %v457 = vmul.f32 %v421, %v445
        %v458 = vmul.f32 %v422, %v449
        %v459 = vadd.f32 %v410, %v453
        %v460 = vadd.f32 %v411, %v454
        %v461 = vadd.f32 %v412, %v455
        %v462 = vadd.f32 %v413, %v456
        %v463 = vadd.f32 %v414, %v457
        %v464 = vadd.f32 %v415, %v458
        %s465 = scalar_lea.vmem %s329, 216
        %v466 = vld [vmem:[%s465] sm:$0xff]
        %v467 = vld [vmem:[%s465 + $0x8] sm:$0xff]
        %v468 = vld [vmem:[%s465 + $0x10] sm:$0xff]
        %v469 = vld [vmem:[%s465 + $0x18] sm:$0xff]
        %v470 = vld [vmem:[%s465 + $0x20] sm:$0xff]
        %v471 = vld [vmem:[%s465 + $0x28] sm:$0xff]
        %v472 = vmul.f32 %v466, %v441
        %v473 = vmul.f32 %v467, %v445
        %v474 = vmul.f32 %v468, %v449
        %v475 = vmul.f32 %v469, %v441
        %v476 = vmul.f32 %v470, %v445
        %v477 = vmul.f32 %v471, %v449
        %v478 = vadd.f32 %v429, %v472
        %v479 = vadd.f32 %v430, %v473
        %v480 = vadd.f32 %v431, %v474
        %v481 = vadd.f32 %v432, %v475
        %v482 = vadd.f32 %v433, %v476
        %v483 = vadd.f32 %v434, %v477
        %s484 = scalar_lea.vmem %s1, 9
        %v485 = vld [vmem:[%s484] sm:$0x7]
        %v486 = vld [vmem:[%s329] sm:$0xfe]
        %v487 = vld [vmem:[%s329 + $0x8] sm:$0xfe]
        %v488 = vld [vmem:[%s329 + $0x10] sm:$0xfe]
        %v489 = vld [vmem:[%s329 + $0x30] sm:$0x1]
        %v490 = vld [vmem:[%s329 + $0x38] sm:$0x1]
        %v491 = vld [vmem:[%s329 + $0x40] sm:$0x1]
        %v493 = vlaneseq
        %v494 = vshrl.u32 %v493, 7
        %v495 = vsub.s32 0, %v494
        %v496 = vrot.slane %v485, %v495
        %v497 = vlaneseq
        %v498 = vshrl.u32 %v497, 7
        %v499 = vsub.s32 1, %v498
        %v500 = vrot.slane %v485, %v499
        %v501 = vlaneseq
        %v502 = vshrl.u32 %v501, 7
        %v503 = vsub.s32 2, %v502
        %v504 = vrot.slane %v485, %v503
        %v508 = vmul.f32 %v486, %v496
        %v509 = vmul.f32 %v487, %v500
        %v510 = vmul.f32 %v488, %v504
        %v511 = vmul.f32 %v336, %v496
        %v512 = vmul.f32 %v337, %v500
        %v513 = vmul.f32 %v338, %v504
        %v514 = vmul.f32 %v489, %v496
        %v515 = vmul.f32 %v490, %v500
        %v516 = vmul.f32 %v491, %v504
        %vm526 = vcmask 1046528
        %v527 = vrot.slane %v508, 1
        %v528 = vrot.slane %v511, 1
        %v529 = vsel %vm526, %v527, %v528
        %v530 = vrot.slane %v509, 1
        %v531 = vrot.slane %v512, 1
        %v532 = vsel %vm526, %v530, %v531
        %v533 = vrot.slane %v510, 1
        %v534 = vrot.slane %v513, 1
        %v535 = vsel %vm526, %v533, %v534
        %v536 = vrot.slane %v514, 1
        %v537 = vsel %vm526, %v528, %v536
        %v538 = vrot.slane %v515, 1
        %v539 = vsel %vm526, %v531, %v538
        %v540 = vrot.slane %v516, 1
        %v541 = vsel %vm526, %v534, %v540
        %v548 = vadd.f32 %v459, %v529
        %v549 = vadd.f32 %v460, %v532
        %v550 = vadd.f32 %v461, %v535
        %v551 = vadd.f32 %v462, %v537
        %v552 = vadd.f32 %v463, %v539
        %v553 = vadd.f32 %v464, %v541
        %v554 = vld [vmem:[%s367] sm:$0xfe]
        %v555 = vld [vmem:[%s367 + $0x8] sm:$0xfe]
        %v556 = vld [vmem:[%s367 + $0x10] sm:$0xfe]
        %v557 = vld [vmem:[%s367 + $0x30] sm:$0x1]
        %v558 = vld [vmem:[%s367 + $0x38] sm:$0x1]
        %v559 = vld [vmem:[%s367 + $0x40] sm:$0x1]
        %v560 = vmul.f32 %v554, %v496
        %v561 = vmul.f32 %v555, %v500
        %v562 = vmul.f32 %v556, %v504
        %v563 = vmul.f32 %v371, %v496
        %v564 = vmul.f32 %v372, %v500
        %v565 = vmul.f32 %v373, %v504
        %v566 = vmul.f32 %v557, %v496
        %v567 = vmul.f32 %v558, %v500
        %v568 = vmul.f32 %v559, %v504
        %v578 = vrot.slane %v560, 1
        %v579 = vrot.slane %v563, 1
        %v580 = vsel %vm526, %v578, %v579
        %v581 = vrot.slane %v561, 1
        %v582 = vrot.slane %v564, 1
        %v583 = vsel %vm526, %v581, %v582
        %v584 = vrot.slane %v562, 1
        %v585 = vrot.slane %v565, 1
        %v586 = vsel %vm526, %v584, %v585
        %v587 = vrot.slane %v566, 1
        %v588 = vsel %vm526, %v579, %v587
        %v589 = vrot.slane %v567, 1
        %v590 = vsel %vm526, %v582, %v589
        %v591 = vrot.slane %v568, 1
        %v592 = vsel %vm526, %v585, %v591
        %v599 = vadd.f32 %v478, %v580
        %v600 = vadd.f32 %v479, %v583
        %v601 = vadd.f32 %v480, %v586
        %v602 = vadd.f32 %v481, %v588
        %v603 = vadd.f32 %v482, %v590
        %v604 = vadd.f32 %v483, %v592
        %s605 = scalar_lea.vmem %s1, 12
        %v606 = vld [vmem:[%s605] sm:$0x7]
        %v608 = vlaneseq
        %v609 = vshrl.u32 %v608, 7
        %v610 = vsub.s32 0, %v609
        %v611 = vrot.slane %v606, %v610
        %v612 = vlaneseq
        %v613 = vshrl.u32 %v612, 7
        %v614 = vsub.s32 1, %v613
        %v615 = vrot.slane %v606, %v614
        %v616 = vlaneseq
        %v617 = vshrl.u32 %v616, 7
        %v618 = vsub.s32 2, %v617
        %v619 = vrot.slane %v606, %v618
        %v623 = vmul.f32 %v554, %v611
        %v624 = vmul.f32 %v555, %v615
        %v625 = vmul.f32 %v556, %v619
        %v626 = vmul.f32 %v371, %v611
        %v627 = vmul.f32 %v372, %v615
        %v628 = vmul.f32 %v373, %v619
        %v629 = vmul.f32 %v557, %v611
        %v630 = vmul.f32 %v558, %v615
        %v631 = vmul.f32 %v559, %v619
        %v641 = vrot.slane %v623, 1
        %v642 = vrot.slane %v626, 1
        %v643 = vsel %vm526, %v641, %v642
        %v644 = vrot.slane %v624, 1
        %v645 = vrot.slane %v627, 1
        %v646 = vsel %vm526, %v644, %v645
        %v647 = vrot.slane %v625, 1
        %v648 = vrot.slane %v628, 1
        %v649 = vsel %vm526, %v647, %v648
        %v650 = vrot.slane %v629, 1
        %v651 = vsel %vm526, %v642, %v650
        %v652 = vrot.slane %v630, 1
        %v653 = vsel %vm526, %v645, %v652
        %v654 = vrot.slane %v631, 1
        %v655 = vsel %vm526, %v648, %v654
        %v662 = vadd.f32 %v548, %v643
        %v663 = vadd.f32 %v549, %v646
        %v664 = vadd.f32 %v550, %v649
        %v665 = vadd.f32 %v551, %v651
        %v666 = vadd.f32 %v552, %v653
        %v667 = vadd.f32 %v553, %v655
        %v668 = vld [vmem:[%s416] sm:$0xfe]
        %v669 = vld [vmem:[%s416 + $0x8] sm:$0xfe]
        %v670 = vld [vmem:[%s416 + $0x10] sm:$0xfe]
        %v671 = vld [vmem:[%s416 + $0x30] sm:$0x1]
        %v672 = vld [vmem:[%s416 + $0x38] sm:$0x1]
        %v673 = vld [vmem:[%s416 + $0x40] sm:$0x1]
        %v674 = vmul.f32 %v668, %v611
        %v675 = vmul.f32 %v669, %v615
        %v676 = vmul.f32 %v670, %v619
        %v677 = vmul.f32 %v420, %v611
        %v678 = vmul.f32 %v421, %v615
        %v679 = vmul.f32 %v422, %v619
        %v680 = vmul.f32 %v671, %v611
        %v681 = vmul.f32 %v672, %v615
        %v682 = vmul.f32 %v673, %v619
        %v692 = vrot.slane %v674, 1
        %v693 = vrot.slane %v677, 1
        %v694 = vsel %vm526, %v692, %v693
        %v695 = vrot.slane %v675, 1
        %v696 = vrot.slane %v678, 1
        %v697 = vsel %vm526, %v695, %v696
        %v698 = vrot.slane %v676, 1
        %v699 = vrot.slane %v679, 1
        %v700 = vsel %vm526, %v698, %v699
        %v701 = vrot.slane %v680, 1
        %v702 = vsel %vm526, %v693, %v701
        %v703 = vrot.slane %v681, 1
        %v704 = vsel %vm526, %v696, %v703
        %v705 = vrot.slane %v682, 1
        %v706 = vsel %vm526, %v699, %v705
        %v713 = vadd.f32 %v599, %v694
        %v714 = vadd.f32 %v600, %v697
        %v715 = vadd.f32 %v601, %v700
        %v716 = vadd.f32 %v602, %v702
        %v717 = vadd.f32 %v603, %v704
        %v718 = vadd.f32 %v604, %v706
        %s719 = scalar_lea.vmem %s1, 15
        %v720 = vld [vmem:[%s719] sm:$0x7]
        %v722 = vlaneseq
        %v723 = vshrl.u32 %v722, 7
        %v724 = vsub.s32 0, %v723
        %v725 = vrot.slane %v720, %v724
        %v726 = vlaneseq
        %v727 = vshrl.u32 %v726, 7
        %v728 = vsub.s32 1, %v727
        %v729 = vrot.slane %v720, %v728
        %v730 = vlaneseq
        %v731 = vshrl.u32 %v730, 7
        %v732 = vsub.s32 2, %v731
        %v733 = vrot.slane %v720, %v732
        %v737 = vmul.f32 %v668, %v725
        %v738 = vmul.f32 %v669, %v729
        %v739 = vmul.f32 %v670, %v733
        %v740 = vmul.f32 %v420, %v725
        %v741 = vmul.f32 %v421, %v729
        %v742 = vmul.f32 %v422, %v733
        %v743 = vmul.f32 %v671, %v725
        %v744 = vmul.f32 %v672, %v729
        %v745 = vmul.f32 %v673, %v733
        %v755 = vrot.slane %v737, 1
        %v756 = vrot.slane %v740, 1
        %v757 = vsel %vm526, %v755, %v756
        %v758 = vrot.slane %v738, 1
        %v759 = vrot.slane %v741, 1
        %v760 = vsel %vm526, %v758, %v759
        %v761 = vrot.slane %v739, 1
        %v762 = vrot.slane %v742, 1
        %v763 = vsel %vm526, %v761, %v762
        %v764 = vrot.slane %v743, 1
        %v765 = vsel %vm526, %v756, %v764
        %v766 = vrot.slane %v744, 1
        %v767 = vsel %vm526, %v759, %v766
        %v768 = vrot.slane %v745, 1
        %v769 = vsel %vm526, %v762, %v768
        %v776 = vadd.f32 %v662, %v757
        %v777 = vadd.f32 %v663, %v760
        %v778 = vadd.f32 %v664, %v763
        %v779 = vadd.f32 %v665, %v765
        %v780 = vadd.f32 %v666, %v767
        %v781 = vadd.f32 %v667, %v769
        %v782 = vld [vmem:[%s465] sm:$0xfe]
        %v783 = vld [vmem:[%s465 + $0x8] sm:$0xfe]
        %v784 = vld [vmem:[%s465 + $0x10] sm:$0xfe]
        %v785 = vld [vmem:[%s465 + $0x30] sm:$0x1]
        %v786 = vld [vmem:[%s465 + $0x38] sm:$0x1]
        %v787 = vld [vmem:[%s465 + $0x40] sm:$0x1]
        %v788 = vmul.f32 %v782, %v725
        %v789 = vmul.f32 %v783, %v729
        %v790 = vmul.f32 %v784, %v733
        %v791 = vmul.f32 %v469, %v725
        %v792 = vmul.f32 %v470, %v729
        %v793 = vmul.f32 %v471, %v733
        %v794 = vmul.f32 %v785, %v725
        %v795 = vmul.f32 %v786, %v729
        %v796 = vmul.f32 %v787, %v733
        %v806 = vrot.slane %v788, 1
        %v807 = vrot.slane %v791, 1
        %v808 = vsel %vm526, %v806, %v807
        %v809 = vrot.slane %v789, 1
        %v810 = vrot.slane %v792, 1
        %v811 = vsel %vm526, %v809, %v810
        %v812 = vrot.slane %v790, 1
        %v813 = vrot.slane %v793, 1
        %v814 = vsel %vm526, %v812, %v813
        %v815 = vrot.slane %v794, 1
        %v816 = vsel %vm526, %v807, %v815
        %v817 = vrot.slane %v795, 1
        %v818 = vsel %vm526, %v810, %v817
        %v819 = vrot.slane %v796, 1
        %v820 = vsel %vm526, %v813, %v819
        %v827 = vadd.f32 %v713, %v808
        %v828 = vadd.f32 %v714, %v811
        %v829 = vadd.f32 %v715, %v814
        %v830 = vadd.f32 %v716, %v816
        %v831 = vadd.f32 %v717, %v818
        %v832 = vadd.f32 %v718, %v820
        %s833 = scalar_lea.vmem %s1, 18
        %v834 = vld [vmem:[%s833] sm:$0x7]
        %v835 = vld [vmem:[%s329] sm:$0xfc]
        %v836 = vld [vmem:[%s329 + $0x8] sm:$0xfc]
        %v837 = vld [vmem:[%s329 + $0x10] sm:$0xfc]
        %v838 = vld [vmem:[%s329 + $0x30] sm:$0x3]
        %v839 = vld [vmem:[%s329 + $0x38] sm:$0x3]
        %v840 = vld [vmem:[%s329 + $0x40] sm:$0x3]
        %v842 = vlaneseq
        %v843 = vshrl.u32 %v842, 7
        %v844 = vsub.s32 0, %v843
        %v845 = vrot.slane %v834, %v844
        %v846 = vlaneseq
        %v847 = vshrl.u32 %v846, 7
        %v848 = vsub.s32 1, %v847
        %v849 = vrot.slane %v834, %v848
        %v850 = vlaneseq
        %v851 = vshrl.u32 %v850, 7
        %v852 = vsub.s32 2, %v851
        %v853 = vrot.slane %v834, %v852
        %v857 = vmul.f32 %v835, %v845
        %v858 = vmul.f32 %v836, %v849
        %v859 = vmul.f32 %v837, %v853
        %v860 = vmul.f32 %v336, %v845
        %v861 = vmul.f32 %v337, %v849
        %v862 = vmul.f32 %v338, %v853
        %v863 = vmul.f32 %v838, %v845
        %v864 = vmul.f32 %v839, %v849
        %v865 = vmul.f32 %v840, %v853
        %vm875 = vcmask 1045504
        %v876 = vrot.slane %v857, 2
        %v877 = vrot.slane %v860, 2
        %v878 = vsel %vm875, %v876, %v877
        %v879 = vrot.slane %v858, 2
        %v880 = vrot.slane %v861, 2
        %v881 = vsel %vm875, %v879, %v880
        %v882 = vrot.slane %v859, 2
        %v883 = vrot.slane %v862, 2
        %v884 = vsel %vm875, %v882, %v883
        %v885 = vrot.slane %v863, 2
        %v886 = vsel %vm875, %v877, %v885
        %v887 = vrot.slane %v864, 2
        %v888 = vsel %vm875, %v880, %v887
        %v889 = vrot.slane %v865, 2
        %v890 = vsel %vm875, %v883, %v889
        %v897 = vadd.f32 %v776, %v878
        %v898 = vadd.f32 %v777, %v881
        %v899 = vadd.f32 %v778, %v884
        %v900 = vadd.f32 %v779, %v886
        %v901 = vadd.f32 %v780, %v888
        %v902 = vadd.f32 %v781, %v890
        %v903 = vld [vmem:[%s367] sm:$0xfc]
        %v904 = vld [vmem:[%s367 + $0x8] sm:$0xfc]
        %v905 = vld [vmem:[%s367 + $0x10] sm:$0xfc]
        %v906 = vld [vmem:[%s367 + $0x30] sm:$0x3]
        %v907 = vld [vmem:[%s367 + $0x38] sm:$0x3]
        %v908 = vld [vmem:[%s367 + $0x40] sm:$0x3]
        %v909 = vmul.f32 %v903, %v845
        %v910 = vmul.f32 %v904, %v849
        %v911 = vmul.f32 %v905, %v853
        %v912 = vmul.f32 %v371, %v845
        %v913 = vmul.f32 %v372, %v849
        %v914 = vmul.f32 %v373, %v853
        %v915 = vmul.f32 %v906, %v845
        %v916 = vmul.f32 %v907, %v849
        %v917 = vmul.f32 %v908, %v853
        %v927 = vrot.slane %v909, 2
        %v928 = vrot.slane %v912, 2
        %v929 = vsel %vm875, %v927, %v928
        %v930 = vrot.slane %v910, 2
        %v931 = vrot.slane %v913, 2
        %v932 = vsel %vm875, %v930, %v931
        %v933 = vrot.slane %v911, 2
        %v934 = vrot.slane %v914, 2
        %v935 = vsel %vm875, %v933, %v934
        %v936 = vrot.slane %v915, 2
        %v937 = vsel %vm875, %v928, %v936
        %v938 = vrot.slane %v916, 2
        %v939 = vsel %vm875, %v931, %v938
        %v940 = vrot.slane %v917, 2
        %v941 = vsel %vm875, %v934, %v940
        %v948 = vadd.f32 %v827, %v929
        %v949 = vadd.f32 %v828, %v932
        %v950 = vadd.f32 %v829, %v935
        %v951 = vadd.f32 %v830, %v937
        %v952 = vadd.f32 %v831, %v939
        %v953 = vadd.f32 %v832, %v941
        %s954 = scalar_lea.vmem %s1, 21
        %v955 = vld [vmem:[%s954] sm:$0x7]
        %v957 = vlaneseq
        %v958 = vshrl.u32 %v957, 7
        %v959 = vsub.s32 0, %v958
        %v960 = vrot.slane %v955, %v959
        %v961 = vlaneseq
        %v962 = vshrl.u32 %v961, 7
        %v963 = vsub.s32 1, %v962
        %v964 = vrot.slane %v955, %v963
        %v965 = vlaneseq
        %v966 = vshrl.u32 %v965, 7
        %v967 = vsub.s32 2, %v966
        %v968 = vrot.slane %v955, %v967
        %v972 = vmul.f32 %v903, %v960
        %v973 = vmul.f32 %v904, %v964
        %v974 = vmul.f32 %v905, %v968
        %v975 = vmul.f32 %v371, %v960
        %v976 = vmul.f32 %v372, %v964
        %v977 = vmul.f32 %v373, %v968
        %v978 = vmul.f32 %v906, %v960
        %v979 = vmul.f32 %v907, %v964
        %v980 = vmul.f32 %v908, %v968
        %v990 = vrot.slane %v972, 2
        %v991 = vrot.slane %v975, 2
        %v992 = vsel %vm875, %v990, %v991
        %v993 = vrot.slane %v973, 2
        %v994 = vrot.slane %v976, 2
        %v995 = vsel %vm875, %v993, %v994
        %v996 = vrot.slane %v974, 2
        %v997 = vrot.slane %v977, 2
        %v998 = vsel %vm875, %v996, %v997
        %v999 = vrot.slane %v978, 2
        %v1000 = vsel %vm875, %v991, %v999
        %v1001 = vrot.slane %v979, 2
        %v1002 = vsel %vm875, %v994, %v1001
        %v1003 = vrot.slane %v980, 2
        %v1004 = vsel %vm875, %v997, %v1003
        %v1011 = vadd.f32 %v897, %v992
        %v1012 = vadd.f32 %v898, %v995
        %v1013 = vadd.f32 %v899, %v998
        %v1014 = vadd.f32 %v900, %v1000
        %v1015 = vadd.f32 %v901, %v1002
        %v1016 = vadd.f32 %v902, %v1004
        %v1017 = vld [vmem:[%s416] sm:$0xfc]
        %v1018 = vld [vmem:[%s416 + $0x8] sm:$0xfc]
        %v1019 = vld [vmem:[%s416 + $0x10] sm:$0xfc]
        %v1020 = vld [vmem:[%s416 + $0x30] sm:$0x3]
        %v1021 = vld [vmem:[%s416 + $0x38] sm:$0x3]
        %v1022 = vld [vmem:[%s416 + $0x40] sm:$0x3]
        %v1023 = vmul.f32 %v1017, %v960
        %v1024 = vmul.f32 %v1018, %v964
        %v1025 = vmul.f32 %v1019, %v968
        %v1026 = vmul.f32 %v420, %v960
        %v1027 = vmul.f32 %v421, %v964
        %v1028 = vmul.f32 %v422, %v968
        %v1029 = vmul.f32 %v1020, %v960
        %v1030 = vmul.f32 %v1021, %v964
        %v1031 = vmul.f32 %v1022, %v968
        %v1041 = vrot.slane %v1023, 2
        %v1042 = vrot.slane %v1026, 2
        %v1043 = vsel %vm875, %v1041, %v1042
        %v1044 = vrot.slane %v1024, 2
        %v1045 = vrot.slane %v1027, 2
        %v1046 = vsel %vm875, %v1044, %v1045
        %v1047 = vrot.slane %v1025, 2
        %v1048 = vrot.slane %v1028, 2
        %v1049 = vsel %vm875, %v1047, %v1048
        %v1050 = vrot.slane %v1029, 2
        %v1051 = vsel %vm875, %v1042, %v1050
        %v1052 = vrot.slane %v1030, 2
        %v1053 = vsel %vm875, %v1045, %v1052
        %v1054 = vrot.slane %v1031, 2
        %v1055 = vsel %vm875, %v1048, %v1054
        %v1062 = vadd.f32 %v948, %v1043
        %v1063 = vadd.f32 %v949, %v1046
        %v1064 = vadd.f32 %v950, %v1049
        %v1065 = vadd.f32 %v951, %v1051
        %v1066 = vadd.f32 %v952, %v1053
        %v1067 = vadd.f32 %v953, %v1055
        %s1068 = scalar_lea.vmem %s1, 24
        %v1069 = vld [vmem:[%s1068] sm:$0x7]
        %v1071 = vlaneseq
        %v1072 = vshrl.u32 %v1071, 7
        %v1073 = vsub.s32 0, %v1072
        %v1074 = vrot.slane %v1069, %v1073
        %v1075 = vlaneseq
        %v1076 = vshrl.u32 %v1075, 7
        %v1077 = vsub.s32 1, %v1076
        %v1078 = vrot.slane %v1069, %v1077
        %v1079 = vlaneseq
        %v1080 = vshrl.u32 %v1079, 7
        %v1081 = vsub.s32 2, %v1080
        %v1082 = vrot.slane %v1069, %v1081
        %v1086 = vmul.f32 %v1017, %v1074
        %v1087 = vmul.f32 %v1018, %v1078
        %v1088 = vmul.f32 %v1019, %v1082
        %v1089 = vmul.f32 %v420, %v1074
        %v1090 = vmul.f32 %v421, %v1078
        %v1091 = vmul.f32 %v422, %v1082
        %v1092 = vmul.f32 %v1020, %v1074
        %v1093 = vmul.f32 %v1021, %v1078
        %v1094 = vmul.f32 %v1022, %v1082
        %v1104 = vrot.slane %v1086, 2
        %v1105 = vrot.slane %v1089, 2
        %v1106 = vsel %vm875, %v1104, %v1105
        %v1107 = vrot.slane %v1087, 2
        %v1108 = vrot.slane %v1090, 2
        %v1109 = vsel %vm875, %v1107, %v1108
        %v1110 = vrot.slane %v1088, 2
        %v1111 = vrot.slane %v1091, 2
        %v1112 = vsel %vm875, %v1110, %v1111
        %v1113 = vrot.slane %v1092, 2
        %v1114 = vsel %vm875, %v1105, %v1113
        %v1115 = vrot.slane %v1093, 2
        %v1116 = vsel %vm875, %v1108, %v1115
        %v1117 = vrot.slane %v1094, 2
        %v1118 = vsel %vm875, %v1111, %v1117
        %v1125 = vadd.f32 %v1011, %v1106
        %v1126 = vadd.f32 %v1012, %v1109
        %v1127 = vadd.f32 %v1013, %v1112
        %v1128 = vadd.f32 %v1014, %v1114
        %v1129 = vadd.f32 %v1015, %v1116
        %v1130 = vadd.f32 %v1016, %v1118
        %v1131 = vld [vmem:[%s465] sm:$0xfc]
        %v1132 = vld [vmem:[%s465 + $0x8] sm:$0xfc]
        %v1133 = vld [vmem:[%s465 + $0x10] sm:$0xfc]
        %v1134 = vld [vmem:[%s465 + $0x30] sm:$0x3]
        %v1135 = vld [vmem:[%s465 + $0x38] sm:$0x3]
        %v1136 = vld [vmem:[%s465 + $0x40] sm:$0x3]
        %v1137 = vmul.f32 %v1131, %v1074
        %v1138 = vmul.f32 %v1132, %v1078
        %v1139 = vmul.f32 %v1133, %v1082
        %v1140 = vmul.f32 %v469, %v1074
        %v1141 = vmul.f32 %v470, %v1078
        %v1142 = vmul.f32 %v471, %v1082
        %v1143 = vmul.f32 %v1134, %v1074
        %v1144 = vmul.f32 %v1135, %v1078
        %v1145 = vmul.f32 %v1136, %v1082
        %v1155 = vrot.slane %v1137, 2
        %v1156 = vrot.slane %v1140, 2
        %v1157 = vsel %vm875, %v1155, %v1156
        %v1158 = vrot.slane %v1138, 2
        %v1159 = vrot.slane %v1141, 2
        %v1160 = vsel %vm875, %v1158, %v1159
        %v1161 = vrot.slane %v1139, 2
        %v1162 = vrot.slane %v1142, 2
        %v1163 = vsel %vm875, %v1161, %v1162
        %v1164 = vrot.slane %v1143, 2
        %v1165 = vsel %vm875, %v1156, %v1164
        %v1166 = vrot.slane %v1144, 2
        %v1167 = vsel %vm875, %v1159, %v1166
        %v1168 = vrot.slane %v1145, 2
        %v1169 = vsel %vm875, %v1162, %v1168
        %v1176 = vadd.f32 %v1062, %v1157
        %v1177 = vadd.f32 %v1063, %v1160
        %v1178 = vadd.f32 %v1064, %v1163
        %v1179 = vadd.f32 %v1065, %v1165
        %v1180 = vadd.f32 %v1066, %v1167
        %v1181 = vadd.f32 %v1067, %v1169
        %v1182 = vmax.f32 %v1125, %v1176
        %v1183 = vmax.f32 %v1126, %v1177
        %v1184 = vmax.f32 %v1127, %v1178
        %v1185 = vmax.f32 %v1128, %v1179
        %v1186 = vmax.f32 %v1129, %v1180
        %v1187 = vmax.f32 %v1130, %v1181
        %v1191 = vrot.slane %v1182, 1
        %v1192 = vrot.slane %v1183, 1
        %v1193 = vrot.slane %v1184, 1
        %v1197 = vmax.f32 %v1182, %v1191
        %v1198 = vmax.f32 %v1183, %v1192
        %v1199 = vmax.f32 %v1184, %v1193
        %v1201 = vlaneseq
        %v1202 = vshrl.u32 %v1201, 7
        %v1203 = vsub.s32 0, %v1202
        %v1204 = vrot.slane %v331, %v1203
        %v1205 = vlaneseq
        %v1206 = vshrl.u32 %v1205, 7
        %v1207 = vsub.s32 1, %v1206
        %v1208 = vrot.slane %v331, %v1207
        %v1209 = vlaneseq
        %v1210 = vshrl.u32 %v1209, 7
        %v1211 = vsub.s32 2, %v1210
        %v1212 = vrot.slane %v331, %v1211
        %v1216 = vadd.f32 %v1197, %v1204
        %v1217 = vadd.f32 %v1198, %v1208
        %v1218 = vadd.f32 %v1199, %v1212
        %v1219 = vmax.f32 %v1216, 0.0
        %v1220 = vmax.f32 %v1217, 0.0
        %v1221 = vmax.f32 %v1218, 0.0
        %v1225 = vrot.slane %v1185, 1
        %v1226 = vrot.slane %v1186, 1
        %v1227 = vrot.slane %v1187, 1
        %v1231 = vmax.f32 %v1185, %v1225
        %v1232 = vmax.f32 %v1186, %v1226
        %v1233 = vmax.f32 %v1187, %v1227
        %v1234 = vadd.f32 %v1231, %v1204
        %v1235 = vadd.f32 %v1232, %v1208
        %v1236 = vadd.f32 %v1233, %v1212
        %v1237 = vmax.f32 %v1234, 0.0
        %v1238 = vmax.f32 %v1235, 0.0
        %v1239 = vmax.f32 %v1236, 0.0
        %v1243 = vrot.slane %v1219, 7
        %v1244 = vrot.slane %v1220, 7
        %v1245 = vrot.slane %v1221, 7
        %v1249 = vrot.slane %v1219, 1
        %v1250 = vrot.slane %v1220, 1
        %v1251 = vrot.slane %v1221, 1
        %v1255 = vrot.slane %v1219, 2
        %v1256 = vrot.slane %v1220, 2
        %v1257 = vrot.slane %v1221, 2
        %v1264 = vrot.slane %v1237, 3
        %v1265 = vrot.slane %v1238, 3
        %v1266 = vrot.slane %v1239, 3
        %v1270 = vrot.slane %v1237, 4
        %v1271 = vrot.slane %v1238, 4
        %v1272 = vrot.slane %v1239, 4
        %v1276 = vrot.slane %v1237, 5
        %v1277 = vrot.slane %v1238, 5
        %v1278 = vrot.slane %v1239, 5
        %v1282 = vrot.slane %v1237, 6
        %v1283 = vrot.slane %v1238, 6
        %v1284 = vrot.slane %v1239, 6
        %vm1288 = vcmask 1040384
        %v1289 = vsel %vm1288, 0.0, %v1243
        %v1290 = vsel %vm1288, 0.0, %v1244
        %v1291 = vsel %vm1288, 0.0, %v1245
        %vm1292 = vcmask 1041408
        %v1293 = vsel %vm1292, %v1289, %v1219
        %v1294 = vsel %vm1292, %v1290, %v1220
        %v1295 = vsel %vm1292, %v1291, %v1221
        %vm1296 = vcmask 1042432
        %v1297 = vsel %vm1296, %v1293, %v1249
        %v1298 = vsel %vm1296, %v1294, %v1250
        %v1299 = vsel %vm1296, %v1295, %v1251
        %vm1300 = vcmask 1043456
        %v1301 = vsel %vm1300, %v1297, %v1255
        %v1302 = vsel %vm1300, %v1298, %v1256
        %v1303 = vsel %vm1300, %v1299, %v1257
        %vm1304 = vcmask 1044480
        %v1305 = vsel %vm1304, %v1301, %v1264
        %v1306 = vsel %vm1304, %v1302, %v1265
        %v1307 = vsel %vm1304, %v1303, %v1266
        %v1308 = vsel %vm875, %v1305, %v1270
        %v1309 = vsel %vm875, %v1306, %v1271
        %v1310 = vsel %vm875, %v1307, %v1272
        %v1311 = vsel %vm526, %v1308, %v1276
        %v1312 = vsel %vm526, %v1309, %v1277
        %v1313 = vsel %vm526, %v1310, %v1278
        %v1314 = vsel %vm1288, %v1282, 0.0
        %v1315 = vsel %vm1288, %v1283, 0.0
        %v1316 = vsel %vm1288, %v1284, 0.0
        %v1317 = vpack.c.bf16 %v1311, %v1311
        %v1318 = vpack.c.bf16 %v1312, %v1312
        %v1319 = vpack.c.bf16 %v1313, %v1313
        %v1320 = vld [vmem:[%s3] sm:$0xff]
        %v1321 = vld [vmem:[%s3 + $0x8] sm:$0xff]
        %v1322 = vld [vmem:[%s3 + $0x10] sm:$0xff]
        %v1323 = vld [vmem:[%s3 + $0x18] sm:$0xff]
        %v1324 = vld [vmem:[%s3 + $0x20] sm:$0xff]
        %v1325 = vld [vmem:[%s3 + $0x28] sm:$0xff]
        %v1326 = vld [vmem:[%s3 + $0x30] sm:$0xff]
        %v1327 = vld [vmem:[%s3 + $0x38] sm:$0xff]
        %v1328 = vld [vmem:[%s3 + $0x40] sm:$0xff]
        %v1329 = vld [vmem:[%s3 + $0x48] sm:$0xff]
        %v1330 = vld [vmem:[%s3 + $0x50] sm:$0xff]
        %v1331 = vld [vmem:[%s3 + $0x58] sm:$0xff]
        %v1332 = vld [vmem:[%s3 + $0x60] sm:$0xff]
        %v1333 = vld [vmem:[%s3 + $0x68] sm:$0xff]
        %v1334 = vld [vmem:[%s3 + $0x70] sm:$0xff]
        %v1335 = vld [vmem:[%s3 + $0x78] sm:$0xff]
        %v1336 = vld [vmem:[%s3 + $0x80] sm:$0xff]
        %v1337 = vld [vmem:[%s3 + $0x88] sm:$0xff]
        %v1338 = vld [vmem:[%s3 + $0x90] sm:$0xff]
        %v1339 = vld [vmem:[%s3 + $0x98] sm:$0xff]
        %v1340 = vld [vmem:[%s3 + $0xa0] sm:$0xff]
        %v1341 = vld [vmem:[%s3 + $0xa8] sm:$0xff]
        %v1342 = vld [vmem:[%s3 + $0xb0] sm:$0xff]
        %v1343 = vld [vmem:[%s3 + $0xb8] sm:$0xff]
        %v1344 = vld [vmem:[%s3 + $0xc0] sm:$0xff]
        %v1345 = vld [vmem:[%s3 + $0xc8] sm:$0xff]
        %v1346 = vld [vmem:[%s3 + $0xd0] sm:$0xff]
        %v1347 = vld [vmem:[%s3 + $0xd8] sm:$0xff]
        %v1348 = vld [vmem:[%s3 + $0xe0] sm:$0xff]
        %v1349 = vld [vmem:[%s3 + $0xe8] sm:$0xff]
        %v1350 = vld [vmem:[%s3 + $0xf0] sm:$0xff]
        %v1351 = vld [vmem:[%s3 + $0xf8] sm:$0xff]
        %v1352 = vld [vmem:[%s3 + $0x100] sm:$0xff]
        %v1353 = vld [vmem:[%s3 + $0x108] sm:$0xff]
        %v1354 = vld [vmem:[%s3 + $0x110] sm:$0xff]
        %v1355 = vld [vmem:[%s3 + $0x118] sm:$0xff]
        %v1356 = vld [vmem:[%s3 + $0x120] sm:$0xff]
        %v1357 = vld [vmem:[%s3 + $0x128] sm:$0xff]
        %v1358 = vld [vmem:[%s3 + $0x130] sm:$0xff]
        %v1359 = vld [vmem:[%s3 + $0x138] sm:$0xff]
        %v1360 = vld [vmem:[%s3 + $0x140] sm:$0xff]
        %v1361 = vld [vmem:[%s3 + $0x148] sm:$0xff]
        %v1362 = vld [vmem:[%s3 + $0x150] sm:$0xff]
        %v1363 = vld [vmem:[%s3 + $0x158] sm:$0xff]
        %v1364 = vld [vmem:[%s3 + $0x160] sm:$0xff]
        %v1365 = vld [vmem:[%s3 + $0x168] sm:$0xff]
        %v1366 = vld [vmem:[%s3 + $0x170] sm:$0xff]
        %v1367 = vld [vmem:[%s3 + $0x178] sm:$0xff]
        %v1368 = vld [vmem:[%s3 + $0x180] sm:$0xff]
        %v1369 = vld [vmem:[%s3 + $0x188] sm:$0xff]
        %v1370 = vld [vmem:[%s3 + $0x190] sm:$0xff]
        %v1371 = vld [vmem:[%s3 + $0x198] sm:$0xff]
        %v1372 = vld [vmem:[%s3 + $0x1a0] sm:$0xff]
        %v1373 = vld [vmem:[%s3 + $0x1a8] sm:$0xff]
        %v1374 = vld [vmem:[%s3 + $0x1b0] sm:$0xff]
        %v1375 = vld [vmem:[%s3 + $0x1b8] sm:$0xff]
        %v1376 = vld [vmem:[%s3 + $0x1c0] sm:$0xff]
        %v1377 = vld [vmem:[%s3 + $0x1c8] sm:$0xff]
        %v1378 = vld [vmem:[%s3 + $0x1d0] sm:$0xff]
        %v1379 = vld [vmem:[%s3 + $0x1d8] sm:$0xff]
        %v1380 = vld [vmem:[%s3 + $0x1e0] sm:$0xff]
        %v1381 = vld [vmem:[%s3 + $0x1e8] sm:$0xff]
        %v1382 = vld [vmem:[%s3 + $0x1f0] sm:$0xff]
        %v1383 = vld [vmem:[%s3 + $0x1f8] sm:$0xff]
        %v1384 = vld [vmem:[%s3 + $0x200] sm:$0xff]
        %v1385 = vld [vmem:[%s3 + $0x208] sm:$0xff]
        %v1386 = vld [vmem:[%s3 + $0x210] sm:$0xff]
        %v1387 = vld [vmem:[%s3 + $0x218] sm:$0xff]
        %v1388 = vld [vmem:[%s3 + $0x220] sm:$0xff]
        %v1389 = vld [vmem:[%s3 + $0x228] sm:$0xff]
        %v1390 = vld [vmem:[%s3 + $0x230] sm:$0xff]
        %v1391 = vld [vmem:[%s3 + $0x238] sm:$0xff]
        %v1392 = vld [vmem:[%s3 + $0x240] sm:$0xff]
        %v1393 = vld [vmem:[%s3 + $0x248] sm:$0xff]
        %v1394 = vld [vmem:[%s3 + $0x250] sm:$0xff]
        %v1395 = vld [vmem:[%s3 + $0x258] sm:$0xff]
        %v1396 = vld [vmem:[%s3 + $0x260] sm:$0xff]
        %v1397 = vld [vmem:[%s3 + $0x268] sm:$0xff]
        %v1398 = vld [vmem:[%s3 + $0x270] sm:$0xff]
        %v1399 = vld [vmem:[%s3 + $0x278] sm:$0xff]
        %v1400 = vpack.c.bf16 %v1314, %v1311
        %v1401 = vpack.c.bf16 %v1315, %v1312
        %v1402 = vpack.c.bf16 %v1316, %v1313
        %s1403 = scalar_lea.vmem %s3, 640
        %v1404 = vld [vmem:[%s1403] sm:$0xff]
        %v1405 = vld [vmem:[%s1403 + $0x8] sm:$0xff]
        %v1406 = vld [vmem:[%s1403 + $0x10] sm:$0xff]
        %v1407 = vld [vmem:[%s1403 + $0x18] sm:$0xff]
        %v1408 = vld [vmem:[%s1403 + $0x20] sm:$0xff]
        %v1409 = vld [vmem:[%s1403 + $0x28] sm:$0xff]
        %v1410 = vld [vmem:[%s1403 + $0x30] sm:$0xff]
        %v1411 = vld [vmem:[%s1403 + $0x38] sm:$0xff]
        %v1412 = vld [vmem:[%s1403 + $0x40] sm:$0xff]
        %v1413 = vld [vmem:[%s1403 + $0x48] sm:$0xff]
        %v1414 = vld [vmem:[%s1403 + $0x50] sm:$0xff]
        %v1415 = vld [vmem:[%s1403 + $0x58] sm:$0xff]
        %v1416 = vld [vmem:[%s1403 + $0x60] sm:$0xff]
        %v1417 = vld [vmem:[%s1403 + $0x68] sm:$0xff]
        %v1418 = vld [vmem:[%s1403 + $0x70] sm:$0xff]
        %v1419 = vld [vmem:[%s1403 + $0x78] sm:$0xff]
        %v1420 = vld [vmem:[%s1403 + $0x80] sm:$0xff]
        %v1421 = vld [vmem:[%s1403 + $0x88] sm:$0xff]
        %v1422 = vld [vmem:[%s1403 + $0x90] sm:$0xff]
        %v1423 = vld [vmem:[%s1403 + $0x98] sm:$0xff]
        %v1424 = vld [vmem:[%s1403 + $0xa0] sm:$0xff]
        %v1425 = vld [vmem:[%s1403 + $0xa8] sm:$0xff]
        %v1426 = vld [vmem:[%s1403 + $0xb0] sm:$0xff]
        %v1427 = vld [vmem:[%s1403 + $0xb8] sm:$0xff]
        %v1428 = vld [vmem:[%s1403 + $0xc0] sm:$0xff]
        %v1429 = vld [vmem:[%s1403 + $0xc8] sm:$0xff]
        %v1430 = vld [vmem:[%s1403 + $0xd0] sm:$0xff]
        %v1431 = vld [vmem:[%s1403 + $0xd8] sm:$0xff]
        %v1432 = vld [vmem:[%s1403 + $0xe0] sm:$0xff]
        %v1433 = vld [vmem:[%s1403 + $0xe8] sm:$0xff]
        %v1434 = vld [vmem:[%s1403 + $0xf0] sm:$0xff]
        %v1435 = vld [vmem:[%s1403 + $0xf8] sm:$0xff]
        %v1436 = vld [vmem:[%s1403 + $0x100] sm:$0xff]
        %v1437 = vld [vmem:[%s1403 + $0x108] sm:$0xff]
        %v1438 = vld [vmem:[%s1403 + $0x110] sm:$0xff]
        %v1439 = vld [vmem:[%s1403 + $0x118] sm:$0xff]
        %v1440 = vld [vmem:[%s1403 + $0x120] sm:$0xff]
        %v1441 = vld [vmem:[%s1403 + $0x128] sm:$0xff]
        %v1442 = vld [vmem:[%s1403 + $0x130] sm:$0xff]
        %v1443 = vld [vmem:[%s1403 + $0x138] sm:$0xff]
        %v1444 = vld [vmem:[%s1403 + $0x140] sm:$0xff]
        %v1445 = vld [vmem:[%s1403 + $0x148] sm:$0xff]
        %v1446 = vld [vmem:[%s1403 + $0x150] sm:$0xff]
        %v1447 = vld [vmem:[%s1403 + $0x158] sm:$0xff]
        %v1448 = vld [vmem:[%s1403 + $0x160] sm:$0xff]
        %v1449 = vld [vmem:[%s1403 + $0x168] sm:$0xff]
        %v1450 = vld [vmem:[%s1403 + $0x170] sm:$0xff]
        %v1451 = vld [vmem:[%s1403 + $0x178] sm:$0xff]
        %v1452 = vld [vmem:[%s1403 + $0x180] sm:$0xff]
        %v1453 = vld [vmem:[%s1403 + $0x188] sm:$0xff]
        %v1454 = vld [vmem:[%s1403 + $0x190] sm:$0xff]
        %v1455 = vld [vmem:[%s1403 + $0x198] sm:$0xff]
        %v1456 = vld [vmem:[%s1403 + $0x1a0] sm:$0xff]
        %v1457 = vld [vmem:[%s1403 + $0x1a8] sm:$0xff]
        %v1458 = vld [vmem:[%s1403 + $0x1b0] sm:$0xff]
        %v1459 = vld [vmem:[%s1403 + $0x1b8] sm:$0xff]
        %v1460 = vld [vmem:[%s1403 + $0x1c0] sm:$0xff]
        %v1461 = vld [vmem:[%s1403 + $0x1c8] sm:$0xff]
        %v1462 = vld [vmem:[%s1403 + $0x1d0] sm:$0xff]
        %v1463 = vld [vmem:[%s1403 + $0x1d8] sm:$0xff]
        %v1464 = vld [vmem:[%s1403 + $0x1e0] sm:$0xff]
        %v1465 = vld [vmem:[%s1403 + $0x1e8] sm:$0xff]
        %v1466 = vld [vmem:[%s1403 + $0x1f0] sm:$0xff]
        %v1467 = vld [vmem:[%s1403 + $0x1f8] sm:$0xff]
        %v1468 = vld [vmem:[%s1403 + $0x200] sm:$0xff]
        %v1469 = vld [vmem:[%s1403 + $0x208] sm:$0xff]
        %v1470 = vld [vmem:[%s1403 + $0x210] sm:$0xff]
        %v1471 = vld [vmem:[%s1403 + $0x218] sm:$0xff]
        %v1472 = vld [vmem:[%s1403 + $0x220] sm:$0xff]
        %v1473 = vld [vmem:[%s1403 + $0x228] sm:$0xff]
        %v1474 = vld [vmem:[%s1403 + $0x230] sm:$0xff]
        %v1475 = vld [vmem:[%s1403 + $0x238] sm:$0xff]
        %v1476 = vld [vmem:[%s1403 + $0x240] sm:$0xff]
        %v1477 = vld [vmem:[%s1403 + $0x248] sm:$0xff]
        %v1478 = vld [vmem:[%s1403 + $0x250] sm:$0xff]
        %v1479 = vld [vmem:[%s1403 + $0x258] sm:$0xff]
        %v1480 = vld [vmem:[%s1403 + $0x260] sm:$0xff]
        %v1481 = vld [vmem:[%s1403 + $0x268] sm:$0xff]
        %v1482 = vld [vmem:[%s1403 + $0x270] sm:$0xff]
        %v1483 = vld [vmem:[%s1403 + $0x278] sm:$0xff]
        %v1485 = vshrl.u32 %v1400, 16
        %v1487 = vshll.u32 %v1400, 16
        %v1489 = vrot.slane %v1487, 1
        %v1490 = vor.u32 %v1485, %v1489
        %v1492 = vshrl.u32 %v1401, 16
        %v1494 = vshll.u32 %v1401, 16
        %v1496 = vrot.slane %v1494, 1
        %v1497 = vor.u32 %v1492, %v1496
        %v1499 = vshrl.u32 %v1402, 16
        %v1501 = vshll.u32 %v1402, 16
        %v1503 = vrot.slane %v1501, 1
        %v1504 = vor.u32 %v1499, %v1503
        %v1587 = vunpack.c.l.b16 %v1404
        %v1588 = vunpack.c.h.b16 %v1404
        %v1589 = vunpack.c.l.b16 %v1405
        %v1590 = vunpack.c.h.b16 %v1405
        %v1591 = vunpack.c.l.b16 %v1406
        %v1592 = vunpack.c.h.b16 %v1406
        %v1593 = vunpack.c.l.b16 %v1407
        %v1594 = vunpack.c.h.b16 %v1407
        %v1595 = vunpack.c.l.b16 %v1408
        %v1596 = vunpack.c.h.b16 %v1408
        %v1597 = vunpack.c.l.b16 %v1409
        %v1598 = vunpack.c.h.b16 %v1409
        %v1599 = vunpack.c.l.b16 %v1410
        %v1600 = vunpack.c.h.b16 %v1410
        %v1601 = vunpack.c.l.b16 %v1411
        %v1602 = vunpack.c.h.b16 %v1411
        %v1603 = vunpack.c.l.b16 %v1412
        %v1604 = vunpack.c.h.b16 %v1412
        %v1605 = vunpack.c.l.b16 %v1413
        %v1606 = vunpack.c.h.b16 %v1413
        %v1607 = vunpack.c.l.b16 %v1414
        %v1608 = vunpack.c.h.b16 %v1414
        %v1609 = vunpack.c.l.b16 %v1415
        %v1610 = vunpack.c.h.b16 %v1415
        %v1611 = vunpack.c.l.b16 %v1416
        %v1612 = vunpack.c.h.b16 %v1416
        %v1613 = vunpack.c.l.b16 %v1417
        %v1614 = vunpack.c.h.b16 %v1417
        %v1615 = vunpack.c.l.b16 %v1418
        %v1616 = vunpack.c.h.b16 %v1418
        %v1617 = vunpack.c.l.b16 %v1419
        %v1618 = vunpack.c.h.b16 %v1419
        %v1619 = vunpack.c.l.b16 %v1420
        %v1620 = vunpack.c.h.b16 %v1420
        %v1621 = vunpack.c.l.b16 %v1421
        %v1622 = vunpack.c.h.b16 %v1421
        %v1623 = vunpack.c.l.b16 %v1422
        %v1624 = vunpack.c.h.b16 %v1422
        %v1625 = vunpack.c.l.b16 %v1423
        %v1626 = vunpack.c.h.b16 %v1423
        %v1627 = vunpack.c.l.b16 %v1424
        %v1628 = vunpack.c.h.b16 %v1424
        %v1629 = vunpack.c.l.b16 %v1425
        %v1630 = vunpack.c.h.b16 %v1425
        %v1631 = vunpack.c.l.b16 %v1426
        %v1632 = vunpack.c.h.b16 %v1426
        %v1633 = vunpack.c.l.b16 %v1427
        %v1634 = vunpack.c.h.b16 %v1427
        %v1635 = vunpack.c.l.b16 %v1428
        %v1636 = vunpack.c.h.b16 %v1428
        %v1637 = vunpack.c.l.b16 %v1429
        %v1638 = vunpack.c.h.b16 %v1429
        %v1639 = vunpack.c.l.b16 %v1430
        %v1640 = vunpack.c.h.b16 %v1430
        %v1641 = vunpack.c.l.b16 %v1431
        %v1642 = vunpack.c.h.b16 %v1431
        %v1643 = vunpack.c.l.b16 %v1432
        %v1644 = vunpack.c.h.b16 %v1432
        %v1645 = vunpack.c.l.b16 %v1433
        %v1646 = vunpack.c.h.b16 %v1433
        %v1647 = vunpack.c.l.b16 %v1434
        %v1648 = vunpack.c.h.b16 %v1434
        %v1649 = vunpack.c.l.b16 %v1435
        %v1650 = vunpack.c.h.b16 %v1435
        %v1651 = vunpack.c.l.b16 %v1436
        %v1652 = vunpack.c.h.b16 %v1436
        %v1653 = vunpack.c.l.b16 %v1437
        %v1654 = vunpack.c.h.b16 %v1437
        %v1655 = vunpack.c.l.b16 %v1438
        %v1656 = vunpack.c.h.b16 %v1438
        %v1657 = vunpack.c.l.b16 %v1439
        %v1658 = vunpack.c.h.b16 %v1439
        %v1659 = vunpack.c.l.b16 %v1440
        %v1660 = vunpack.c.h.b16 %v1440
        %v1661 = vunpack.c.l.b16 %v1441
        %v1662 = vunpack.c.h.b16 %v1441
        %v1663 = vunpack.c.l.b16 %v1442
        %v1664 = vunpack.c.h.b16 %v1442
        %v1665 = vunpack.c.l.b16 %v1443
        %v1666 = vunpack.c.h.b16 %v1443
        %v1667 = vunpack.c.l.b16 %v1444
        %v1668 = vunpack.c.h.b16 %v1444
        %v1669 = vunpack.c.l.b16 %v1445
        %v1670 = vunpack.c.h.b16 %v1445
        %v1671 = vunpack.c.l.b16 %v1446
        %v1672 = vunpack.c.h.b16 %v1446
        %v1673 = vunpack.c.l.b16 %v1447
        %v1674 = vunpack.c.h.b16 %v1447
        %v1675 = vunpack.c.l.b16 %v1448
        %v1676 = vunpack.c.h.b16 %v1448
        %v1677 = vunpack.c.l.b16 %v1449
        %v1678 = vunpack.c.h.b16 %v1449
        %v1679 = vunpack.c.l.b16 %v1450
        %v1680 = vunpack.c.h.b16 %v1450
        %v1681 = vunpack.c.l.b16 %v1451
        %v1682 = vunpack.c.h.b16 %v1451
        %v1683 = vunpack.c.l.b16 %v1452
        %v1684 = vunpack.c.h.b16 %v1452
        %v1685 = vunpack.c.l.b16 %v1453
        %v1686 = vunpack.c.h.b16 %v1453
        %v1687 = vunpack.c.l.b16 %v1454
        %v1688 = vunpack.c.h.b16 %v1454
        %v1689 = vunpack.c.l.b16 %v1455
        %v1690 = vunpack.c.h.b16 %v1455
        %v1691 = vunpack.c.l.b16 %v1456
        %v1692 = vunpack.c.h.b16 %v1456
        %v1693 = vunpack.c.l.b16 %v1457
        %v1694 = vunpack.c.h.b16 %v1457
        %v1695 = vunpack.c.l.b16 %v1458
        %v1696 = vunpack.c.h.b16 %v1458
        %v1697 = vunpack.c.l.b16 %v1459
        %v1698 = vunpack.c.h.b16 %v1459
        %v1699 = vunpack.c.l.b16 %v1460
        %v1700 = vunpack.c.h.b16 %v1460
        %v1701 = vunpack.c.l.b16 %v1461
        %v1702 = vunpack.c.h.b16 %v1461
        %v1703 = vunpack.c.l.b16 %v1462
        %v1704 = vunpack.c.h.b16 %v1462
        %v1705 = vunpack.c.l.b16 %v1463
        %v1706 = vunpack.c.h.b16 %v1463
        %v1707 = vunpack.c.l.b16 %v1464
        %v1708 = vunpack.c.h.b16 %v1464
        %v1709 = vunpack.c.l.b16 %v1465
        %v1710 = vunpack.c.h.b16 %v1465
        %v1711 = vunpack.c.l.b16 %v1466
        %v1712 = vunpack.c.h.b16 %v1466
        %v1713 = vunpack.c.l.b16 %v1467
        %v1714 = vunpack.c.h.b16 %v1467
        %v1715 = vunpack.c.l.b16 %v1468
        %v1716 = vunpack.c.h.b16 %v1468
        %v1717 = vunpack.c.l.b16 %v1469
        %v1718 = vunpack.c.h.b16 %v1469
        %v1719 = vunpack.c.l.b16 %v1470
        %v1720 = vunpack.c.h.b16 %v1470
        %v1721 = vunpack.c.l.b16 %v1471
        %v1722 = vunpack.c.h.b16 %v1471
        %v1723 = vunpack.c.l.b16 %v1472
        %v1724 = vunpack.c.h.b16 %v1472
        %v1725 = vunpack.c.l.b16 %v1473
        %v1726 = vunpack.c.h.b16 %v1473
        %v1727 = vunpack.c.l.b16 %v1474
        %v1728 = vunpack.c.h.b16 %v1474
        %v1729 = vunpack.c.l.b16 %v1475
        %v1730 = vunpack.c.h.b16 %v1475
        %v1731 = vunpack.c.l.b16 %v1476
        %v1732 = vunpack.c.h.b16 %v1476
        %v1733 = vunpack.c.l.b16 %v1477
        %v1734 = vunpack.c.h.b16 %v1477
        %v1735 = vunpack.c.l.b16 %v1478
        %v1736 = vunpack.c.h.b16 %v1478
        %v1737 = vunpack.c.l.b16 %v1479
        %v1738 = vunpack.c.h.b16 %v1479
        %v1739 = vunpack.c.l.b16 %v1480
        %v1740 = vunpack.c.h.b16 %v1480
        %v1741 = vunpack.c.l.b16 %v1481
        %v1742 = vunpack.c.h.b16 %v1481
        %v1743 = vunpack.c.l.b16 %v1482
        %v1744 = vunpack.c.h.b16 %v1482
        %v1745 = vunpack.c.l.b16 %v1483
        %v1746 = vunpack.c.h.b16 %v1483
        %v1747 = vpack.c.b16 %v1591, %v1587
        %v1748 = vpack.c.b16 %v1592, %v1588
        %v1749 = vpack.c.b16 %v1593, %v1589
        %v1750 = vpack.c.b16 %v1594, %v1590
        %v1751 = vpack.c.b16 %v1599, %v1595
        %v1752 = vpack.c.b16 %v1600, %v1596
        %v1753 = vpack.c.b16 %v1601, %v1597
        %v1754 = vpack.c.b16 %v1602, %v1598
        %v1755 = vpack.c.b16 %v1607, %v1603
        %v1756 = vpack.c.b16 %v1608, %v1604
        %v1757 = vpack.c.b16 %v1609, %v1605
        %v1758 = vpack.c.b16 %v1610, %v1606
        %v1759 = vpack.c.b16 %v1615, %v1611
        %v1760 = vpack.c.b16 %v1616, %v1612
        %v1761 = vpack.c.b16 %v1617, %v1613
        %v1762 = vpack.c.b16 %v1618, %v1614
        %v1763 = vpack.c.b16 %v1623, %v1619
        %v1764 = vpack.c.b16 %v1624, %v1620
        %v1765 = vpack.c.b16 %v1625, %v1621
        %v1766 = vpack.c.b16 %v1626, %v1622
        %v1767 = vpack.c.b16 %v1631, %v1627
        %v1768 = vpack.c.b16 %v1632, %v1628
        %v1769 = vpack.c.b16 %v1633, %v1629
        %v1770 = vpack.c.b16 %v1634, %v1630
        %v1771 = vpack.c.b16 %v1639, %v1635
        %v1772 = vpack.c.b16 %v1640, %v1636
        %v1773 = vpack.c.b16 %v1641, %v1637
        %v1774 = vpack.c.b16 %v1642, %v1638
        %v1775 = vpack.c.b16 %v1647, %v1643
        %v1776 = vpack.c.b16 %v1648, %v1644
        %v1777 = vpack.c.b16 %v1649, %v1645
        %v1778 = vpack.c.b16 %v1650, %v1646
        %v1779 = vpack.c.b16 %v1655, %v1651
        %v1780 = vpack.c.b16 %v1656, %v1652
        %v1781 = vpack.c.b16 %v1657, %v1653
        %v1782 = vpack.c.b16 %v1658, %v1654
        %v1783 = vpack.c.b16 %v1663, %v1659
        %v1784 = vpack.c.b16 %v1664, %v1660
        %v1785 = vpack.c.b16 %v1665, %v1661
        %v1786 = vpack.c.b16 %v1666, %v1662
        %v1787 = vpack.c.b16 %v1671, %v1667
        %v1788 = vpack.c.b16 %v1672, %v1668
        %v1789 = vpack.c.b16 %v1673, %v1669
        %v1790 = vpack.c.b16 %v1674, %v1670
        %v1791 = vpack.c.b16 %v1679, %v1675
        %v1792 = vpack.c.b16 %v1680, %v1676
        %v1793 = vpack.c.b16 %v1681, %v1677
        %v1794 = vpack.c.b16 %v1682, %v1678
        %v1795 = vpack.c.b16 %v1687, %v1683
        %v1796 = vpack.c.b16 %v1688, %v1684
        %v1797 = vpack.c.b16 %v1689, %v1685
        %v1798 = vpack.c.b16 %v1690, %v1686
        %v1799 = vpack.c.b16 %v1695, %v1691
        %v1800 = vpack.c.b16 %v1696, %v1692
        %v1801 = vpack.c.b16 %v1697, %v1693
        %v1802 = vpack.c.b16 %v1698, %v1694
        %v1803 = vpack.c.b16 %v1703, %v1699
        %v1804 = vpack.c.b16 %v1704, %v1700
        %v1805 = vpack.c.b16 %v1705, %v1701
        %v1806 = vpack.c.b16 %v1706, %v1702
        %v1807 = vpack.c.b16 %v1711, %v1707
        %v1808 = vpack.c.b16 %v1712, %v1708
        %v1809 = vpack.c.b16 %v1713, %v1709
        %v1810 = vpack.c.b16 %v1714, %v1710
        %v1811 = vpack.c.b16 %v1719, %v1715
        %v1812 = vpack.c.b16 %v1720, %v1716
        %v1813 = vpack.c.b16 %v1721, %v1717
        %v1814 = vpack.c.b16 %v1722, %v1718
        %v1815 = vpack.c.b16 %v1727, %v1723
        %v1816 = vpack.c.b16 %v1728, %v1724
        %v1817 = vpack.c.b16 %v1729, %v1725
        %v1818 = vpack.c.b16 %v1730, %v1726
        %v1819 = vpack.c.b16 %v1735, %v1731
        %v1820 = vpack.c.b16 %v1736, %v1732
        %v1821 = vpack.c.b16 %v1737, %v1733
        %v1822 = vpack.c.b16 %v1738, %v1734
        %v1823 = vpack.c.b16 %v1743, %v1739
        %v1824 = vpack.c.b16 %v1744, %v1740
        %v1825 = vpack.c.b16 %v1745, %v1741
        %v1826 = vpack.c.b16 %v1746, %v1742
        %vm1907 = vcmask 523264
        %v1909 = vsel %vm1907, %v1504, 0
        %1911 = vmatprep.subr.bf16.mxu0 %v1776
        %1912 = vmatpush1.bf16.msra.mxu0 %v1775
        %1913 = vmatprep.subr.bf16.mxu0 %v1772
        %1914 = vmatpush1.bf16.msra.mxu0 %v1771
        %1915 = vmatprep.subr.bf16.mxu0 %v1768
        %1916 = vmatpush1.bf16.msra.mxu0 %v1767
        %1917 = vmatprep.subr.bf16.mxu0 %v1764
        %1918 = vmatpush1.bf16.msra.mxu0 %v1763
        %1919 = vmatprep.subr.bf16.mxu0 %v1760
        %1920 = vmatpush1.bf16.msra.mxu0 %v1759
        %1921 = vmatprep.subr.bf16.mxu0 %v1756
        %1922 = vmatpush1.bf16.msra.mxu0 %v1755
        %1923 = vmatprep.subr.bf16.mxu0 %v1752
        %1924 = vmatpush1.bf16.msra.mxu0 %v1751
        %1925 = vmatprep.subr.bf16.mxu0 %v1748
        %1926 = vmatpush1.bf16.msra.mxu0 %v1747
        %1927 = vmatprep.subr.bf16.mxu0 %v1808
        %1928 = vmatpush2.bf16.msra.mxu0 %v1807
        %1929 = vmatprep.subr.bf16.mxu0 %v1804
        %1930 = vmatpush2.bf16.msra.mxu0 %v1803
        %1931 = vmatprep.subr.bf16.mxu0 %v1800
        %1932 = vmatpush2.bf16.msra.mxu0 %v1799
        %1933 = vmatprep.subr.bf16.mxu0 %v1796
        %1934 = vmatpush2.bf16.msra.mxu0 %v1795
        %1935 = vmatprep.subr.bf16.mxu0 %v1792
        %1936 = vmatpush2.bf16.msra.mxu0 %v1791
        %1937 = vmatprep.subr.bf16.mxu0 %v1788
        %1938 = vmatpush2.bf16.msra.mxu0 %v1787
        %1939 = vmatprep.subr.bf16.mxu0 %v1784
        %1940 = vmatpush2.bf16.msra.mxu0 %v1783
        %1941 = vmatprep.subr.bf16.mxu0 %v1780
        %1942 = vmatpush2.bf16.msra.mxu0 %v1779
        %1943 = vmatprep.mubr.bf16.mxu0 %v1497
        %1944 = vmatmul.mubr.bf16.gmra.mxu0 %v1490
        %v1945 = vpop.f32.mrf.mxu0
        %v1946 = vadd.f32 0.0, %v1945
        %v1947 = vpop.f32.mrf.mxu0
        %v1948 = vadd.f32 0.0, %v1947
        %v1949 = vpop.f32.mrf.mxu0
        %v1950 = vpop.f32.mrf.mxu0
        %1951 = vdwg.mxu0
        %1952 = vmatprep.subr.bf16.mxu0 0
        %1953 = vmatpush1.bf16.msra.mxu0 0
        %1954 = vmatprep.subr.bf16.mxu0 0
        %1955 = vmatpush1.bf16.msra.mxu0 0
        %1956 = vmatprep.subr.bf16.mxu0 0
        %1957 = vmatpush1.bf16.msra.mxu0 0
        %1958 = vmatprep.subr.bf16.mxu0 0
        %1959 = vmatpush1.bf16.msra.mxu0 0
        %1960 = vmatprep.subr.bf16.mxu0 %v1824
        %1961 = vmatpush1.bf16.msra.mxu0 %v1823
        %1962 = vmatprep.subr.bf16.mxu0 %v1820
        %1963 = vmatpush1.bf16.msra.mxu0 %v1819
        %1964 = vmatprep.subr.bf16.mxu0 %v1816
        %1965 = vmatpush1.bf16.msra.mxu0 %v1815
        %1966 = vmatprep.subr.bf16.mxu0 %v1812
        %1967 = vmatpush1.bf16.msra.mxu0 %v1811
        %1968 = vmatprep.subr.bf16.mxu0 0
        %1969 = vmatpush2.bf16.msra.mxu0 0
        %1970 = vmatprep.subr.bf16.mxu0 0
        %1971 = vmatpush2.bf16.msra.mxu0 0
        %1972 = vmatprep.subr.bf16.mxu0 0
        %1973 = vmatpush2.bf16.msra.mxu0 0
        %1974 = vmatprep.subr.bf16.mxu0 0
        %1975 = vmatpush2.bf16.msra.mxu0 0
        %1976 = vmatprep.subr.bf16.mxu0 0
        %1977 = vmatpush2.bf16.msra.mxu0 0
        %1978 = vmatprep.subr.bf16.mxu0 0
        %1979 = vmatpush2.bf16.msra.mxu0 0
        %1980 = vmatprep.subr.bf16.mxu0 0
        %1981 = vmatpush2.bf16.msra.mxu0 0
        %1982 = vmatprep.subr.bf16.mxu0 0
        %1983 = vmatpush2.bf16.msra.mxu0 0
        %1984 = vmatprep.mubr.bf16.mxu0 0
        %1985 = vmatmul.mubr.bf16.gmra.mxu0 %v1909
        %v1986 = vpop.f32.mrf.mxu0
        %v1987 = vadd.f32 %v1946, %v1986
        %v1988 = vpop.f32.mrf.mxu0
        %v1989 = vadd.f32 %v1948, %v1988
        %v1990 = vpop.f32.mrf.mxu0
        %v1991 = vpop.f32.mrf.mxu0
        %1992 = vdwg.mxu0
        %1993 = vmatprep.subr.bf16.mxu0 %v1778
        %1994 = vmatpush1.bf16.msra.mxu0 %v1777
        %1995 = vmatprep.subr.bf16.mxu0 %v1774
        %1996 = vmatpush1.bf16.msra.mxu0 %v1773
        %1997 = vmatprep.subr.bf16.mxu0 %v1770
        %1998 = vmatpush1.bf16.msra.mxu0 %v1769
        %1999 = vmatprep.subr.bf16.mxu0 %v1766
        %2000 = vmatpush1.bf16.msra.mxu0 %v1765
        %2001 = vmatprep.subr.bf16.mxu0 %v1762
        %2002 = vmatpush1.bf16.msra.mxu0 %v1761
        %2003 = vmatprep.subr.bf16.mxu0 %v1758
        %2004 = vmatpush1.bf16.msra.mxu0 %v1757
        %2005 = vmatprep.subr.bf16.mxu0 %v1754
        %2006 = vmatpush1.bf16.msra.mxu0 %v1753
        %2007 = vmatprep.subr.bf16.mxu0 %v1750
        %2008 = vmatpush1.bf16.msra.mxu0 %v1749
        %2009 = vmatprep.subr.bf16.mxu0 %v1810
        %2010 = vmatpush2.bf16.msra.mxu0 %v1809
        %2011 = vmatprep.subr.bf16.mxu0 %v1806
        %2012 = vmatpush2.bf16.msra.mxu0 %v1805
        %2013 = vmatprep.subr.bf16.mxu0 %v1802
        %2014 = vmatpush2.bf16.msra.mxu0 %v1801
        %2015 = vmatprep.subr.bf16.mxu0 %v1798
        %2016 = vmatpush2.bf16.msra.mxu0 %v1797
        %2017 = vmatprep.subr.bf16.mxu0 %v1794
        %2018 = vmatpush2.bf16.msra.mxu0 %v1793
        %2019 = vmatprep.subr.bf16.mxu0 %v1790
        %2020 = vmatpush2.bf16.msra.mxu0 %v1789
        %2021 = vmatprep.subr.bf16.mxu0 %v1786
        %2022 = vmatpush2.bf16.msra.mxu0 %v1785
        %2023 = vmatprep.subr.bf16.mxu0 %v1782
        %2024 = vmatpush2.bf16.msra.mxu0 %v1781
        %2025 = vmatprep.mubr.bf16.mxu0 %v1497
        %2026 = vmatmul.mubr.bf16.gmra.mxu0 %v1490
        %v2027 = vpop.f32.mrf.mxu0
        %v2028 = vadd.f32 0.0, %v2027
        %v2029 = vpop.f32.mrf.mxu0
        %v2030 = vadd.f32 0.0, %v2029
        %v2031 = vpop.f32.mrf.mxu0
        %v2032 = vpop.f32.mrf.mxu0
        %2033 = vdwg.mxu0
        %2034 = vmatprep.subr.bf16.mxu0 0
        %2035 = vmatpush1.bf16.msra.mxu0 0
        %2036 = vmatprep.subr.bf16.mxu0 0
        %2037 = vmatpush1.bf16.msra.mxu0 0
        %2038 = vmatprep.subr.bf16.mxu0 0
        %2039 = vmatpush1.bf16.msra.mxu0 0
        %2040 = vmatprep.subr.bf16.mxu0 0
        %2041 = vmatpush1.bf16.msra.mxu0 0
        %2042 = vmatprep.subr.bf16.mxu0 %v1826
        %2043 = vmatpush1.bf16.msra.mxu0 %v1825
        %2044 = vmatprep.subr.bf16.mxu0 %v1822
        %2045 = vmatpush1.bf16.msra.mxu0 %v1821
        %2046 = vmatprep.subr.bf16.mxu0 %v1818
        %2047 = vmatpush1.bf16.msra.mxu0 %v1817
        %2048 = vmatprep.subr.bf16.mxu0 %v1814
        %2049 = vmatpush1.bf16.msra.mxu0 %v1813
        %2050 = vmatprep.subr.bf16.mxu0 0
        %2051 = vmatpush2.bf16.msra.mxu0 0
        %2052 = vmatprep.subr.bf16.mxu0 0
        %2053 = vmatpush2.bf16.msra.mxu0 0
        %2054 = vmatprep.subr.bf16.mxu0 0
        %2055 = vmatpush2.bf16.msra.mxu0 0
        %2056 = vmatprep.subr.bf16.mxu0 0
        %2057 = vmatpush2.bf16.msra.mxu0 0
        %2058 = vmatprep.subr.bf16.mxu0 0
        %2059 = vmatpush2.bf16.msra.mxu0 0
        %2060 = vmatprep.subr.bf16.mxu0 0
        %2061 = vmatpush2.bf16.msra.mxu0 0
        %2062 = vmatprep.subr.bf16.mxu0 0
        %2063 = vmatpush2.bf16.msra.mxu0 0
        %2064 = vmatprep.subr.bf16.mxu0 0
        %2065 = vmatpush2.bf16.msra.mxu0 0
        %2066 = vmatprep.mubr.bf16.mxu0 0
        %2067 = vmatmul.mubr.bf16.gmra.mxu0 %v1909
        %v2068 = vpop.f32.mrf.mxu0
        %v2069 = vadd.f32 %v2028, %v2068
        %v2070 = vpop.f32.mrf.mxu0
        %v2071 = vadd.f32 %v2030, %v2070
        %v2072 = vpop.f32.mrf.mxu0
        %v2073 = vpop.f32.mrf.mxu0
        %2074 = vdwg.mxu0
        %v2155 = vunpack.c.l.b16 %v1320
        %v2156 = vunpack.c.h.b16 %v1320
        %v2157 = vunpack.c.l.b16 %v1321
        %v2158 = vunpack.c.h.b16 %v1321
        %v2159 = vunpack.c.l.b16 %v1322
        %v2160 = vunpack.c.h.b16 %v1322
        %v2161 = vunpack.c.l.b16 %v1323
        %v2162 = vunpack.c.h.b16 %v1323
        %v2163 = vunpack.c.l.b16 %v1324
        %v2164 = vunpack.c.h.b16 %v1324
        %v2165 = vunpack.c.l.b16 %v1325
        %v2166 = vunpack.c.h.b16 %v1325
        %v2167 = vunpack.c.l.b16 %v1326
        %v2168 = vunpack.c.h.b16 %v1326
        %v2169 = vunpack.c.l.b16 %v1327
        %v2170 = vunpack.c.h.b16 %v1327
        %v2171 = vunpack.c.l.b16 %v1328
        %v2172 = vunpack.c.h.b16 %v1328
        %v2173 = vunpack.c.l.b16 %v1329
        %v2174 = vunpack.c.h.b16 %v1329
        %v2175 = vunpack.c.l.b16 %v1330
        %v2176 = vunpack.c.h.b16 %v1330
        %v2177 = vunpack.c.l.b16 %v1331
        %v2178 = vunpack.c.h.b16 %v1331
        %v2179 = vunpack.c.l.b16 %v1332
        %v2180 = vunpack.c.h.b16 %v1332
        %v2181 = vunpack.c.l.b16 %v1333
        %v2182 = vunpack.c.h.b16 %v1333
        %v2183 = vunpack.c.l.b16 %v1334
        %v2184 = vunpack.c.h.b16 %v1334
        %v2185 = vunpack.c.l.b16 %v1335
        %v2186 = vunpack.c.h.b16 %v1335
        %v2187 = vunpack.c.l.b16 %v1336
        %v2188 = vunpack.c.h.b16 %v1336
        %v2189 = vunpack.c.l.b16 %v1337
        %v2190 = vunpack.c.h.b16 %v1337
        %v2191 = vunpack.c.l.b16 %v1338
        %v2192 = vunpack.c.h.b16 %v1338
        %v2193 = vunpack.c.l.b16 %v1339
        %v2194 = vunpack.c.h.b16 %v1339
        %v2195 = vunpack.c.l.b16 %v1340
        %v2196 = vunpack.c.h.b16 %v1340
        %v2197 = vunpack.c.l.b16 %v1341
        %v2198 = vunpack.c.h.b16 %v1341
        %v2199 = vunpack.c.l.b16 %v1342
        %v2200 = vunpack.c.h.b16 %v1342
        %v2201 = vunpack.c.l.b16 %v1343
        %v2202 = vunpack.c.h.b16 %v1343
        %v2203 = vunpack.c.l.b16 %v1344
        %v2204 = vunpack.c.h.b16 %v1344
        %v2205 = vunpack.c.l.b16 %v1345
        %v2206 = vunpack.c.h.b16 %v1345
        %v2207 = vunpack.c.l.b16 %v1346
        %v2208 = vunpack.c.h.b16 %v1346
        %v2209 = vunpack.c.l.b16 %v1347
        %v2210 = vunpack.c.h.b16 %v1347
        %v2211 = vunpack.c.l.b16 %v1348
        %v2212 = vunpack.c.h.b16 %v1348
        %v2213 = vunpack.c.l.b16 %v1349
        %v2214 = vunpack.c.h.b16 %v1349
        %v2215 = vunpack.c.l.b16 %v1350
        %v2216 = vunpack.c.h.b16 %v1350
        %v2217 = vunpack.c.l.b16 %v1351
        %v2218 = vunpack.c.h.b16 %v1351
        %v2219 = vunpack.c.l.b16 %v1352
        %v2220 = vunpack.c.h.b16 %v1352
        %v2221 = vunpack.c.l.b16 %v1353
        %v2222 = vunpack.c.h.b16 %v1353
        %v2223 = vunpack.c.l.b16 %v1354
        %v2224 = vunpack.c.h.b16 %v1354
        %v2225 = vunpack.c.l.b16 %v1355
        %v2226 = vunpack.c.h.b16 %v1355
        %v2227 = vunpack.c.l.b16 %v1356
        %v2228 = vunpack.c.h.b16 %v1356
        %v2229 = vunpack.c.l.b16 %v1357
        %v2230 = vunpack.c.h.b16 %v1357
        %v2231 = vunpack.c.l.b16 %v1358
        %v2232 = vunpack.c.h.b16 %v1358
        %v2233 = vunpack.c.l.b16 %v1359
        %v2234 = vunpack.c.h.b16 %v1359
        %v2235 = vunpack.c.l.b16 %v1360
        %v2236 = vunpack.c.h.b16 %v1360
        %v2237 = vunpack.c.l.b16 %v1361
        %v2238 = vunpack.c.h.b16 %v1361
        %v2239 = vunpack.c.l.b16 %v1362
        %v2240 = vunpack.c.h.b16 %v1362
        %v2241 = vunpack.c.l.b16 %v1363
        %v2242 = vunpack.c.h.b16 %v1363
        %v2243 = vunpack.c.l.b16 %v1364
        %v2244 = vunpack.c.h.b16 %v1364
        %v2245 = vunpack.c.l.b16 %v1365
        %v2246 = vunpack.c.h.b16 %v1365
        %v2247 = vunpack.c.l.b16 %v1366
        %v2248 = vunpack.c.h.b16 %v1366
        %v2249 = vunpack.c.l.b16 %v1367
        %v2250 = vunpack.c.h.b16 %v1367
        %v2251 = vunpack.c.l.b16 %v1368
        %v2252 = vunpack.c.h.b16 %v1368
        %v2253 = vunpack.c.l.b16 %v1369
        %v2254 = vunpack.c.h.b16 %v1369
        %v2255 = vunpack.c.l.b16 %v1370
        %v2256 = vunpack.c.h.b16 %v1370
        %v2257 = vunpack.c.l.b16 %v1371
        %v2258 = vunpack.c.h.b16 %v1371
        %v2259 = vunpack.c.l.b16 %v1372
        %v2260 = vunpack.c.h.b16 %v1372
        %v2261 = vunpack.c.l.b16 %v1373
        %v2262 = vunpack.c.h.b16 %v1373
        %v2263 = vunpack.c.l.b16 %v1374
        %v2264 = vunpack.c.h.b16 %v1374
        %v2265 = vunpack.c.l.b16 %v1375
        %v2266 = vunpack.c.h.b16 %v1375
        %v2267 = vunpack.c.l.b16 %v1376
        %v2268 = vunpack.c.h.b16 %v1376
        %v2269 = vunpack.c.l.b16 %v1377
        %v2270 = vunpack.c.h.b16 %v1377
        %v2271 = vunpack.c.l.b16 %v1378
        %v2272 = vunpack.c.h.b16 %v1378
        %v2273 = vunpack.c.l.b16 %v1379
        %v2274 = vunpack.c.h.b16 %v1379
        %v2275 = vunpack.c.l.b16 %v1380
        %v2276 = vunpack.c.h.b16 %v1380
        %v2277 = vunpack.c.l.b16 %v1381
        %v2278 = vunpack.c.h.b16 %v1381
        %v2279 = vunpack.c.l.b16 %v1382
        %v2280 = vunpack.c.h.b16 %v1382
        %v2281 = vunpack.c.l.b16 %v1383
        %v2282 = vunpack.c.h.b16 %v1383
        %v2283 = vunpack.c.l.b16 %v1384
        %v2284 = vunpack.c.h.b16 %v1384
        %v2285 = vunpack.c.l.b16 %v1385
        %v2286 = vunpack.c.h.b16 %v1385
        %v2287 = vunpack.c.l.b16 %v1386
        %v2288 = vunpack.c.h.b16 %v1386
        %v2289 = vunpack.c.l.b16 %v1387
        %v2290 = vunpack.c.h.b16 %v1387
        %v2291 = vunpack.c.l.b16 %v1388
        %v2292 = vunpack.c.h.b16 %v1388
        %v2293 = vunpack.c.l.b16 %v1389
        %v2294 = vunpack.c.h.b16 %v1389
        %v2295 = vunpack.c.l.b16 %v1390
        %v2296 = vunpack.c.h.b16 %v1390
        %v2297 = vunpack.c.l.b16 %v1391
        %v2298 = vunpack.c.h.b16 %v1391
        %v2299 = vunpack.c.l.b16 %v1392
        %v2300 = vunpack.c.h.b16 %v1392
        %v2301 = vunpack.c.l.b16 %v1393
        %v2302 = vunpack.c.h.b16 %v1393
        %v2303 = vunpack.c.l.b16 %v1394
        %v2304 = vunpack.c.h.b16 %v1394
        %v2305 = vunpack.c.l.b16 %v1395
        %v2306 = vunpack.c.h.b16 %v1395
        %v2307 = vunpack.c.l.b16 %v1396
        %v2308 = vunpack.c.h.b16 %v1396
        %v2309 = vunpack.c.l.b16 %v1397
        %v2310 = vunpack.c.h.b16 %v1397
        %v2311 = vunpack.c.l.b16 %v1398
        %v2312 = vunpack.c.h.b16 %v1398
        %v2313 = vunpack.c.l.b16 %v1399
        %v2314 = vunpack.c.h.b16 %v1399
        %v2315 = vpack.c.b16 %v2159, %v2155
        %v2316 = vpack.c.b16 %v2160, %v2156
        %v2317 = vpack.c.b16 %v2161, %v2157
        %v2318 = vpack.c.b16 %v2162, %v2158
        %v2319 = vpack.c.b16 %v2167, %v2163
        %v2320 = vpack.c.b16 %v2168, %v2164
        %v2321 = vpack.c.b16 %v2169, %v2165
        %v2322 = vpack.c.b16 %v2170, %v2166
        %v2323 = vpack.c.b16 %v2175, %v2171
        %v2324 = vpack.c.b16 %v2176, %v2172
        %v2325 = vpack.c.b16 %v2177, %v2173
        %v2326 = vpack.c.b16 %v2178, %v2174
        %v2327 = vpack.c.b16 %v2183, %v2179
        %v2328 = vpack.c.b16 %v2184, %v2180
        %v2329 = vpack.c.b16 %v2185, %v2181
        %v2330 = vpack.c.b16 %v2186, %v2182
        %v2331 = vpack.c.b16 %v2191, %v2187
        %v2332 = vpack.c.b16 %v2192, %v2188
        %v2333 = vpack.c.b16 %v2193, %v2189
        %v2334 = vpack.c.b16 %v2194, %v2190
        %v2335 = vpack.c.b16 %v2199, %v2195
        %v2336 = vpack.c.b16 %v2200, %v2196
        %v2337 = vpack.c.b16 %v2201, %v2197
        %v2338 = vpack.c.b16 %v2202, %v2198
        %v2339 = vpack.c.b16 %v2207, %v2203
        %v2340 = vpack.c.b16 %v2208, %v2204
        %v2341 = vpack.c.b16 %v2209, %v2205
        %v2342 = vpack.c.b16 %v2210, %v2206
        %v2343 = vpack.c.b16 %v2215, %v2211
        %v2344 = vpack.c.b16 %v2216, %v2212
        %v2345 = vpack.c.b16 %v2217, %v2213
        %v2346 = vpack.c.b16 %v2218, %v2214
        %v2347 = vpack.c.b16 %v2223, %v2219
        %v2348 = vpack.c.b16 %v2224, %v2220
        %v2349 = vpack.c.b16 %v2225, %v2221
        %v2350 = vpack.c.b16 %v2226, %v2222
        %v2351 = vpack.c.b16 %v2231, %v2227
        %v2352 = vpack.c.b16 %v2232, %v2228
        %v2353 = vpack.c.b16 %v2233, %v2229
        %v2354 = vpack.c.b16 %v2234, %v2230
        %v2355 = vpack.c.b16 %v2239, %v2235
        %v2356 = vpack.c.b16 %v2240, %v2236
        %v2357 = vpack.c.b16 %v2241, %v2237
        %v2358 = vpack.c.b16 %v2242, %v2238
        %v2359 = vpack.c.b16 %v2247, %v2243
        %v2360 = vpack.c.b16 %v2248, %v2244
        %v2361 = vpack.c.b16 %v2249, %v2245
        %v2362 = vpack.c.b16 %v2250, %v2246
        %v2363 = vpack.c.b16 %v2255, %v2251
        %v2364 = vpack.c.b16 %v2256, %v2252
        %v2365 = vpack.c.b16 %v2257, %v2253
        %v2366 = vpack.c.b16 %v2258, %v2254
        %v2367 = vpack.c.b16 %v2263, %v2259
        %v2368 = vpack.c.b16 %v2264, %v2260
        %v2369 = vpack.c.b16 %v2265, %v2261
        %v2370 = vpack.c.b16 %v2266, %v2262
        %v2371 = vpack.c.b16 %v2271, %v2267
        %v2372 = vpack.c.b16 %v2272, %v2268
        %v2373 = vpack.c.b16 %v2273, %v2269
        %v2374 = vpack.c.b16 %v2274, %v2270
        %v2375 = vpack.c.b16 %v2279, %v2275
        %v2376 = vpack.c.b16 %v2280, %v2276
        %v2377 = vpack.c.b16 %v2281, %v2277
        %v2378 = vpack.c.b16 %v2282, %v2278
        %v2379 = vpack.c.b16 %v2287, %v2283
        %v2380 = vpack.c.b16 %v2288, %v2284
        %v2381 = vpack.c.b16 %v2289, %v2285
        %v2382 = vpack.c.b16 %v2290, %v2286
        %v2383 = vpack.c.b16 %v2295, %v2291
        %v2384 = vpack.c.b16 %v2296, %v2292
        %v2385 = vpack.c.b16 %v2297, %v2293
        %v2386 = vpack.c.b16 %v2298, %v2294
        %v2387 = vpack.c.b16 %v2303, %v2299
        %v2388 = vpack.c.b16 %v2304, %v2300
        %v2389 = vpack.c.b16 %v2305, %v2301
        %v2390 = vpack.c.b16 %v2306, %v2302
        %v2391 = vpack.c.b16 %v2311, %v2307
        %v2392 = vpack.c.b16 %v2312, %v2308
        %v2393 = vpack.c.b16 %v2313, %v2309
        %v2394 = vpack.c.b16 %v2314, %v2310
        %v2476 = vsel %vm1907, %v1319, 0
        %2478 = vmatprep.subr.bf16.mxu0 %v2344
        %2479 = vmatpush1.bf16.msra.mxu0 %v2343
        %2480 = vmatprep.subr.bf16.mxu0 %v2340
        %2481 = vmatpush1.bf16.msra.mxu0 %v2339
        %2482 = vmatprep.subr.bf16.mxu0 %v2336
        %2483 = vmatpush1.bf16.msra.mxu0 %v2335
        %2484 = vmatprep.subr.bf16.mxu0 %v2332
        %2485 = vmatpush1.bf16.msra.mxu0 %v2331
        %2486 = vmatprep.subr.bf16.mxu0 %v2328
        %2487 = vmatpush1.bf16.msra.mxu0 %v2327
        %2488 = vmatprep.subr.bf16.mxu0 %v2324
        %2489 = vmatpush1.bf16.msra.mxu0 %v2323
        %2490 = vmatprep.subr.bf16.mxu0 %v2320
        %2491 = vmatpush1.bf16.msra.mxu0 %v2319
        %2492 = vmatprep.subr.bf16.mxu0 %v2316
        %2493 = vmatpush1.bf16.msra.mxu0 %v2315
        %2494 = vmatprep.subr.bf16.mxu0 %v2376
        %2495 = vmatpush2.bf16.msra.mxu0 %v2375
        %2496 = vmatprep.subr.bf16.mxu0 %v2372
        %2497 = vmatpush2.bf16.msra.mxu0 %v2371
        %2498 = vmatprep.subr.bf16.mxu0 %v2368
        %2499 = vmatpush2.bf16.msra.mxu0 %v2367
        %2500 = vmatprep.subr.bf16.mxu0 %v2364
        %2501 = vmatpush2.bf16.msra.mxu0 %v2363
        %2502 = vmatprep.subr.bf16.mxu0 %v2360
        %2503 = vmatpush2.bf16.msra.mxu0 %v2359
        %2504 = vmatprep.subr.bf16.mxu0 %v2356
        %2505 = vmatpush2.bf16.msra.mxu0 %v2355
        %2506 = vmatprep.subr.bf16.mxu0 %v2352
        %2507 = vmatpush2.bf16.msra.mxu0 %v2351
        %2508 = vmatprep.subr.bf16.mxu0 %v2348
        %2509 = vmatpush2.bf16.msra.mxu0 %v2347
        %2510 = vmatprep.mubr.bf16.mxu0 %v1318
        %2511 = vmatmul.mubr.bf16.gmra.mxu0 %v1317
        %v2512 = vpop.f32.mrf.mxu0
        %v2513 = vadd.f32 %v1987, %v2512
        %v2514 = vpop.f32.mrf.mxu0
        %v2515 = vadd.f32 %v1989, %v2514
        %v2516 = vpop.f32.mrf.mxu0
        %v2517 = vpop.f32.mrf.mxu0
        %2518 = vdwg.mxu0
        %2519 = vmatprep.subr.bf16.mxu0 0
        %2520 = vmatpush1.bf16.msra.mxu0 0
        %2521 = vmatprep.subr.bf16.mxu0 0
        %2522 = vmatpush1.bf16.msra.mxu0 0
        %2523 = vmatprep.subr.bf16.mxu0 0
        %2524 = vmatpush1.bf16.msra.mxu0 0
        %2525 = vmatprep.subr.bf16.mxu0 0
        %2526 = vmatpush1.bf16.msra.mxu0 0
        %2527 = vmatprep.subr.bf16.mxu0 %v2392
        %2528 = vmatpush1.bf16.msra.mxu0 %v2391
        %2529 = vmatprep.subr.bf16.mxu0 %v2388
        %2530 = vmatpush1.bf16.msra.mxu0 %v2387
        %2531 = vmatprep.subr.bf16.mxu0 %v2384
        %2532 = vmatpush1.bf16.msra.mxu0 %v2383
        %2533 = vmatprep.subr.bf16.mxu0 %v2380
        %2534 = vmatpush1.bf16.msra.mxu0 %v2379
        %2535 = vmatprep.subr.bf16.mxu0 0
        %2536 = vmatpush2.bf16.msra.mxu0 0
        %2537 = vmatprep.subr.bf16.mxu0 0
        %2538 = vmatpush2.bf16.msra.mxu0 0
        %2539 = vmatprep.subr.bf16.mxu0 0
        %2540 = vmatpush2.bf16.msra.mxu0 0
        %2541 = vmatprep.subr.bf16.mxu0 0
        %2542 = vmatpush2.bf16.msra.mxu0 0
        %2543 = vmatprep.subr.bf16.mxu0 0
        %2544 = vmatpush2.bf16.msra.mxu0 0
        %2545 = vmatprep.subr.bf16.mxu0 0
        %2546 = vmatpush2.bf16.msra.mxu0 0
        %2547 = vmatprep.subr.bf16.mxu0 0
        %2548 = vmatpush2.bf16.msra.mxu0 0
        %2549 = vmatprep.subr.bf16.mxu0 0
        %2550 = vmatpush2.bf16.msra.mxu0 0
        %2551 = vmatprep.mubr.bf16.mxu0 0
        %2552 = vmatmul.mubr.bf16.gmra.mxu0 %v2476
        %v2553 = vpop.f32.mrf.mxu0
        %v2554 = vadd.f32 %v2513, %v2553
        %v2555 = vpop.f32.mrf.mxu0
        %v2556 = vadd.f32 %v2515, %v2555
        %v2557 = vpop.f32.mrf.mxu0
        %v2558 = vpop.f32.mrf.mxu0
        %2559 = vdwg.mxu0
        %2560 = vmatprep.subr.bf16.mxu0 %v2346
        %2561 = vmatpush1.bf16.msra.mxu0 %v2345
        %2562 = vmatprep.subr.bf16.mxu0 %v2342
        %2563 = vmatpush1.bf16.msra.mxu0 %v2341
        %2564 = vmatprep.subr.bf16.mxu0 %v2338
        %2565 = vmatpush1.bf16.msra.mxu0 %v2337
        %2566 = vmatprep.subr.bf16.mxu0 %v2334
        %2567 = vmatpush1.bf16.msra.mxu0 %v2333
        %2568 = vmatprep.subr.bf16.mxu0 %v2330
        %2569 = vmatpush1.bf16.msra.mxu0 %v2329
        %2570 = vmatprep.subr.bf16.mxu0 %v2326
        %2571 = vmatpush1.bf16.msra.mxu0 %v2325
        %2572 = vmatprep.subr.bf16.mxu0 %v2322
        %2573 = vmatpush1.bf16.msra.mxu0 %v2321
        %2574 = vmatprep.subr.bf16.mxu0 %v2318
        %2575 = vmatpush1.bf16.msra.mxu0 %v2317
        %2576 = vmatprep.subr.bf16.mxu0 %v2378
        %2577 = vmatpush2.bf16.msra.mxu0 %v2377
        %2578 = vmatprep.subr.bf16.mxu0 %v2374
        %2579 = vmatpush2.bf16.msra.mxu0 %v2373
        %2580 = vmatprep.subr.bf16.mxu0 %v2370
        %2581 = vmatpush2.bf16.msra.mxu0 %v2369
        %2582 = vmatprep.subr.bf16.mxu0 %v2366
        %2583 = vmatpush2.bf16.msra.mxu0 %v2365
        %2584 = vmatprep.subr.bf16.mxu0 %v2362
        %2585 = vmatpush2.bf16.msra.mxu0 %v2361
        %2586 = vmatprep.subr.bf16.mxu0 %v2358
        %2587 = vmatpush2.bf16.msra.mxu0 %v2357
        %2588 = vmatprep.subr.bf16.mxu0 %v2354
        %2589 = vmatpush2.bf16.msra.mxu0 %v2353
        %2590 = vmatprep.subr.bf16.mxu0 %v2350
        %2591 = vmatpush2.bf16.msra.mxu0 %v2349
        %2592 = vmatprep.mubr.bf16.mxu0 %v1318
        %2593 = vmatmul.mubr.bf16.gmra.mxu0 %v1317
        %v2594 = vpop.f32.mrf.mxu0
        %v2595 = vadd.f32 %v2069, %v2594
        %v2596 = vpop.f32.mrf.mxu0
        %v2597 = vadd.f32 %v2071, %v2596
        %v2598 = vpop.f32.mrf.mxu0
        %v2599 = vpop.f32.mrf.mxu0
        %2600 = vdwg.mxu0
        %2601 = vmatprep.subr.bf16.mxu0 0
        %2602 = vmatpush1.bf16.msra.mxu0 0
        %2603 = vmatprep.subr.bf16.mxu0 0
        %2604 = vmatpush1.bf16.msra.mxu0 0
        %2605 = vmatprep.subr.bf16.mxu0 0
        %2606 = vmatpush1.bf16.msra.mxu0 0
        %2607 = vmatprep.subr.bf16.mxu0 0
        %2608 = vmatpush1.bf16.msra.mxu0 0
        %2609 = vmatprep.subr.bf16.mxu0 %v2394
        %2610 = vmatpush1.bf16.msra.mxu0 %v2393
        %2611 = vmatprep.subr.bf16.mxu0 %v2390
        %2612 = vmatpush1.bf16.msra.mxu0 %v2389
        %2613 = vmatprep.subr.bf16.mxu0 %v2386
        %2614 = vmatpush1.bf16.msra.mxu0 %v2385
        %2615 = vmatprep.subr.bf16.mxu0 %v2382
        %2616 = vmatpush1.bf16.msra.mxu0 %v2381
        %2617 = vmatprep.subr.bf16.mxu0 0
        %2618 = vmatpush2.bf16.msra.mxu0 0
        %2619 = vmatprep.subr.bf16.mxu0 0
        %2620 = vmatpush2.bf16.msra.mxu0 0
        %2621 = vmatprep.subr.bf16.mxu0 0
        %2622 = vmatpush2.bf16.msra.mxu0 0
        %2623 = vmatprep.subr.bf16.mxu0 0
        %2624 = vmatpush2.bf16.msra.mxu0 0
        %2625 = vmatprep.subr.bf16.mxu0 0
        %2626 = vmatpush2.bf16.msra.mxu0 0
        %2627 = vmatprep.subr.bf16.mxu0 0
        %2628 = vmatpush2.bf16.msra.mxu0 0
        %2629 = vmatprep.subr.bf16.mxu0 0
        %2630 = vmatpush2.bf16.msra.mxu0 0
        %2631 = vmatprep.subr.bf16.mxu0 0
        %2632 = vmatpush2.bf16.msra.mxu0 0
        %2633 = vmatprep.mubr.bf16.mxu0 0
        %2634 = vmatmul.mubr.bf16.gmra.mxu0 %v2476
        %v2635 = vpop.f32.mrf.mxu0
        %v2636 = vadd.f32 %v2595, %v2635
        %v2637 = vpop.f32.mrf.mxu0
        %v2638 = vadd.f32 %v2597, %v2637
        %v2639 = vpop.f32.mrf.mxu0
        %v2640 = vpop.f32.mrf.mxu0
        %2641 = vdwg.mxu0
        %s2642 = scalar_lea.vmem %s3, 1280
        %v2643 = vld [vmem:[%s2642] sm:$0xff]
        %v2644 = vld [vmem:[%s2642 + $0x8] sm:$0xff]
        %v2645 = vld [vmem:[%s2642 + $0x10] sm:$0xff]
        %v2646 = vld [vmem:[%s2642 + $0x18] sm:$0xff]
        %v2647 = vld [vmem:[%s2642 + $0x20] sm:$0xff]
        %v2648 = vld [vmem:[%s2642 + $0x28] sm:$0xff]
        %v2649 = vld [vmem:[%s2642 + $0x30] sm:$0xff]
        %v2650 = vld [vmem:[%s2642 + $0x38] sm:$0xff]
        %v2651 = vld [vmem:[%s2642 + $0x40] sm:$0xff]
        %v2652 = vld [vmem:[%s2642 + $0x48] sm:$0xff]
        %v2653 = vld [vmem:[%s2642 + $0x50] sm:$0xff]
        %v2654 = vld [vmem:[%s2642 + $0x58] sm:$0xff]
        %v2655 = vld [vmem:[%s2642 + $0x60] sm:$0xff]
        %v2656 = vld [vmem:[%s2642 + $0x68] sm:$0xff]
        %v2657 = vld [vmem:[%s2642 + $0x70] sm:$0xff]
        %v2658 = vld [vmem:[%s2642 + $0x78] sm:$0xff]
        %v2659 = vld [vmem:[%s2642 + $0x80] sm:$0xff]
        %v2660 = vld [vmem:[%s2642 + $0x88] sm:$0xff]
        %v2661 = vld [vmem:[%s2642 + $0x90] sm:$0xff]
        %v2662 = vld [vmem:[%s2642 + $0x98] sm:$0xff]
        %v2663 = vld [vmem:[%s2642 + $0xa0] sm:$0xff]
        %v2664 = vld [vmem:[%s2642 + $0xa8] sm:$0xff]
        %v2665 = vld [vmem:[%s2642 + $0xb0] sm:$0xff]
        %v2666 = vld [vmem:[%s2642 + $0xb8] sm:$0xff]
        %v2667 = vld [vmem:[%s2642 + $0xc0] sm:$0xff]
        %v2668 = vld [vmem:[%s2642 + $0xc8] sm:$0xff]
        %v2669 = vld [vmem:[%s2642 + $0xd0] sm:$0xff]
        %v2670 = vld [vmem:[%s2642 + $0xd8] sm:$0xff]
        %v2671 = vld [vmem:[%s2642 + $0xe0] sm:$0xff]
        %v2672 = vld [vmem:[%s2642 + $0xe8] sm:$0xff]
        %v2673 = vld [vmem:[%s2642 + $0xf0] sm:$0xff]
        %v2674 = vld [vmem:[%s2642 + $0xf8] sm:$0xff]
        %v2675 = vld [vmem:[%s2642 + $0x100] sm:$0xff]
        %v2676 = vld [vmem:[%s2642 + $0x108] sm:$0xff]
        %v2677 = vld [vmem:[%s2642 + $0x110] sm:$0xff]
        %v2678 = vld [vmem:[%s2642 + $0x118] sm:$0xff]
        %v2679 = vld [vmem:[%s2642 + $0x120] sm:$0xff]
        %v2680 = vld [vmem:[%s2642 + $0x128] sm:$0xff]
        %v2681 = vld [vmem:[%s2642 + $0x130] sm:$0xff]
        %v2682 = vld [vmem:[%s2642 + $0x138] sm:$0xff]
        %v2683 = vld [vmem:[%s2642 + $0x140] sm:$0xff]
        %v2684 = vld [vmem:[%s2642 + $0x148] sm:$0xff]
        %v2685 = vld [vmem:[%s2642 + $0x150] sm:$0xff]
        %v2686 = vld [vmem:[%s2642 + $0x158] sm:$0xff]
        %v2687 = vld [vmem:[%s2642 + $0x160] sm:$0xff]
        %v2688 = vld [vmem:[%s2642 + $0x168] sm:$0xff]
        %v2689 = vld [vmem:[%s2642 + $0x170] sm:$0xff]
        %v2690 = vld [vmem:[%s2642 + $0x178] sm:$0xff]
        %v2691 = vld [vmem:[%s2642 + $0x180] sm:$0xff]
        %v2692 = vld [vmem:[%s2642 + $0x188] sm:$0xff]
        %v2693 = vld [vmem:[%s2642 + $0x190] sm:$0xff]
        %v2694 = vld [vmem:[%s2642 + $0x198] sm:$0xff]
        %v2695 = vld [vmem:[%s2642 + $0x1a0] sm:$0xff]
        %v2696 = vld [vmem:[%s2642 + $0x1a8] sm:$0xff]
        %v2697 = vld [vmem:[%s2642 + $0x1b0] sm:$0xff]
        %v2698 = vld [vmem:[%s2642 + $0x1b8] sm:$0xff]
        %v2699 = vld [vmem:[%s2642 + $0x1c0] sm:$0xff]
        %v2700 = vld [vmem:[%s2642 + $0x1c8] sm:$0xff]
        %v2701 = vld [vmem:[%s2642 + $0x1d0] sm:$0xff]
        %v2702 = vld [vmem:[%s2642 + $0x1d8] sm:$0xff]
        %v2703 = vld [vmem:[%s2642 + $0x1e0] sm:$0xff]
        %v2704 = vld [vmem:[%s2642 + $0x1e8] sm:$0xff]
        %v2705 = vld [vmem:[%s2642 + $0x1f0] sm:$0xff]
        %v2706 = vld [vmem:[%s2642 + $0x1f8] sm:$0xff]
        %v2707 = vld [vmem:[%s2642 + $0x200] sm:$0xff]
        %v2708 = vld [vmem:[%s2642 + $0x208] sm:$0xff]
        %v2709 = vld [vmem:[%s2642 + $0x210] sm:$0xff]
        %v2710 = vld [vmem:[%s2642 + $0x218] sm:$0xff]
        %v2711 = vld [vmem:[%s2642 + $0x220] sm:$0xff]
        %v2712 = vld [vmem:[%s2642 + $0x228] sm:$0xff]
        %v2713 = vld [vmem:[%s2642 + $0x230] sm:$0xff]
        %v2714 = vld [vmem:[%s2642 + $0x238] sm:$0xff]
        %v2715 = vld [vmem:[%s2642 + $0x240] sm:$0xff]
        %v2716 = vld [vmem:[%s2642 + $0x248] sm:$0xff]
        %v2717 = vld [vmem:[%s2642 + $0x250] sm:$0xff]
        %v2718 = vld [vmem:[%s2642 + $0x258] sm:$0xff]
        %v2719 = vld [vmem:[%s2642 + $0x260] sm:$0xff]
        %v2720 = vld [vmem:[%s2642 + $0x268] sm:$0xff]
        %v2721 = vld [vmem:[%s2642 + $0x270] sm:$0xff]
        %v2722 = vld [vmem:[%s2642 + $0x278] sm:$0xff]
        %v2726 = vrot.slane %v1400, 1
        %v2727 = vrot.slane %v1401, 1
        %v2728 = vrot.slane %v1402, 1
        %v2811 = vunpack.c.l.b16 %v2643
        %v2812 = vunpack.c.h.b16 %v2643
        %v2813 = vunpack.c.l.b16 %v2644
        %v2814 = vunpack.c.h.b16 %v2644
        %v2815 = vunpack.c.l.b16 %v2645
        %v2816 = vunpack.c.h.b16 %v2645
        %v2817 = vunpack.c.l.b16 %v2646
        %v2818 = vunpack.c.h.b16 %v2646
        %v2819 = vunpack.c.l.b16 %v2647
        %v2820 = vunpack.c.h.b16 %v2647
        %v2821 = vunpack.c.l.b16 %v2648
        %v2822 = vunpack.c.h.b16 %v2648
        %v2823 = vunpack.c.l.b16 %v2649
        %v2824 = vunpack.c.h.b16 %v2649
        %v2825 = vunpack.c.l.b16 %v2650
        %v2826 = vunpack.c.h.b16 %v2650
        %v2827 = vunpack.c.l.b16 %v2651
        %v2828 = vunpack.c.h.b16 %v2651
        %v2829 = vunpack.c.l.b16 %v2652
        %v2830 = vunpack.c.h.b16 %v2652
        %v2831 = vunpack.c.l.b16 %v2653
        %v2832 = vunpack.c.h.b16 %v2653
        %v2833 = vunpack.c.l.b16 %v2654
        %v2834 = vunpack.c.h.b16 %v2654
        %v2835 = vunpack.c.l.b16 %v2655
        %v2836 = vunpack.c.h.b16 %v2655
        %v2837 = vunpack.c.l.b16 %v2656
        %v2838 = vunpack.c.h.b16 %v2656
        %v2839 = vunpack.c.l.b16 %v2657
        %v2840 = vunpack.c.h.b16 %v2657
        %v2841 = vunpack.c.l.b16 %v2658
        %v2842 = vunpack.c.h.b16 %v2658
        %v2843 = vunpack.c.l.b16 %v2659
        %v2844 = vunpack.c.h.b16 %v2659
        %v2845 = vunpack.c.l.b16 %v2660
        %v2846 = vunpack.c.h.b16 %v2660
        %v2847 = vunpack.c.l.b16 %v2661
        %v2848 = vunpack.c.h.b16 %v2661
        %v2849 = vunpack.c.l.b16 %v2662
        %v2850 = vunpack.c.h.b16 %v2662
        %v2851 = vunpack.c.l.b16 %v2663
        %v2852 = vunpack.c.h.b16 %v2663
        %v2853 = vunpack.c.l.b16 %v2664
        %v2854 = vunpack.c.h.b16 %v2664
        %v2855 = vunpack.c.l.b16 %v2665
        %v2856 = vunpack.c.h.b16 %v2665
        %v2857 = vunpack.c.l.b16 %v2666
        %v2858 = vunpack.c.h.b16 %v2666
        %v2859 = vunpack.c.l.b16 %v2667
        %v2860 = vunpack.c.h.b16 %v2667
        %v2861 = vunpack.c.l.b16 %v2668
        %v2862 = vunpack.c.h.b16 %v2668
        %v2863 = vunpack.c.l.b16 %v2669
        %v2864 = vunpack.c.h.b16 %v2669
        %v2865 = vunpack.c.l.b16 %v2670
        %v2866 = vunpack.c.h.b16 %v2670
        %v2867 = vunpack.c.l.b16 %v2671
        %v2868 = vunpack.c.h.b16 %v2671
        %v2869 = vunpack.c.l.b16 %v2672
        %v2870 = vunpack.c.h.b16 %v2672
        %v2871 = vunpack.c.l.b16 %v2673
        %v2872 = vunpack.c.h.b16 %v2673
        %v2873 = vunpack.c.l.b16 %v2674
        %v2874 = vunpack.c.h.b16 %v2674
        %v2875 = vunpack.c.l.b16 %v2675
        %v2876 = vunpack.c.h.b16 %v2675
        %v2877 = vunpack.c.l.b16 %v2676
        %v2878 = vunpack.c.h.b16 %v2676
        %v2879 = vunpack.c.l.b16 %v2677
        %v2880 = vunpack.c.h.b16 %v2677
        %v2881 = vunpack.c.l.b16 %v2678
        %v2882 = vunpack.c.h.b16 %v2678
        %v2883 = vunpack.c.l.b16 %v2679
        %v2884 = vunpack.c.h.b16 %v2679
        %v2885 = vunpack.c.l.b16 %v2680
        %v2886 = vunpack.c.h.b16 %v2680
        %v2887 = vunpack.c.l.b16 %v2681
        %v2888 = vunpack.c.h.b16 %v2681
        %v2889 = vunpack.c.l.b16 %v2682
        %v2890 = vunpack.c.h.b16 %v2682
        %v2891 = vunpack.c.l.b16 %v2683
        %v2892 = vunpack.c.h.b16 %v2683
        %v2893 = vunpack.c.l.b16 %v2684
        %v2894 = vunpack.c.h.b16 %v2684
        %v2895 = vunpack.c.l.b16 %v2685
        %v2896 = vunpack.c.h.b16 %v2685
        %v2897 = vunpack.c.l.b16 %v2686
        %v2898 = vunpack.c.h.b16 %v2686
        %v2899 = vunpack.c.l.b16 %v2687
        %v2900 = vunpack.c.h.b16 %v2687
        %v2901 = vunpack.c.l.b16 %v2688
        %v2902 = vunpack.c.h.b16 %v2688
        %v2903 = vunpack.c.l.b16 %v2689
        %v2904 = vunpack.c.h.b16 %v2689
        %v2905 = vunpack.c.l.b16 %v2690
        %v2906 = vunpack.c.h.b16 %v2690
        %v2907 = vunpack.c.l.b16 %v2691
        %v2908 = vunpack.c.h.b16 %v2691
        %v2909 = vunpack.c.l.b16 %v2692
        %v2910 = vunpack.c.h.b16 %v2692
        %v2911 = vunpack.c.l.b16 %v2693
        %v2912 = vunpack.c.h.b16 %v2693
        %v2913 = vunpack.c.l.b16 %v2694
        %v2914 = vunpack.c.h.b16 %v2694
        %v2915 = vunpack.c.l.b16 %v2695
        %v2916 = vunpack.c.h.b16 %v2695
        %v2917 = vunpack.c.l.b16 %v2696
        %v2918 = vunpack.c.h.b16 %v2696
        %v2919 = vunpack.c.l.b16 %v2697
        %v2920 = vunpack.c.h.b16 %v2697
        %v2921 = vunpack.c.l.b16 %v2698
        %v2922 = vunpack.c.h.b16 %v2698
        %v2923 = vunpack.c.l.b16 %v2699
        %v2924 = vunpack.c.h.b16 %v2699
        %v2925 = vunpack.c.l.b16 %v2700
        %v2926 = vunpack.c.h.b16 %v2700
        %v2927 = vunpack.c.l.b16 %v2701
        %v2928 = vunpack.c.h.b16 %v2701
        %v2929 = vunpack.c.l.b16 %v2702
        %v2930 = vunpack.c.h.b16 %v2702
        %v2931 = vunpack.c.l.b16 %v2703
        %v2932 = vunpack.c.h.b16 %v2703
        %v2933 = vunpack.c.l.b16 %v2704
        %v2934 = vunpack.c.h.b16 %v2704
        %v2935 = vunpack.c.l.b16 %v2705
        %v2936 = vunpack.c.h.b16 %v2705
        %v2937 = vunpack.c.l.b16 %v2706
        %v2938 = vunpack.c.h.b16 %v2706
        %v2939 = vunpack.c.l.b16 %v2707
        %v2940 = vunpack.c.h.b16 %v2707
        %v2941 = vunpack.c.l.b16 %v2708
        %v2942 = vunpack.c.h.b16 %v2708
        %v2943 = vunpack.c.l.b16 %v2709
        %v2944 = vunpack.c.h.b16 %v2709
        %v2945 = vunpack.c.l.b16 %v2710
        %v2946 = vunpack.c.h.b16 %v2710
        %v2947 = vunpack.c.l.b16 %v2711
        %v2948 = vunpack.c.h.b16 %v2711
        %v2949 = vunpack.c.l.b16 %v2712
        %v2950 = vunpack.c.h.b16 %v2712
        %v2951 = vunpack.c.l.b16 %v2713
        %v2952 = vunpack.c.h.b16 %v2713
        %v2953 = vunpack.c.l.b16 %v2714
        %v2954 = vunpack.c.h.b16 %v2714
        %v2955 = vunpack.c.l.b16 %v2715
        %v2956 = vunpack.c.h.b16 %v2715
        %v2957 = vunpack.c.l.b16 %v2716
        %v2958 = vunpack.c.h.b16 %v2716
        %v2959 = vunpack.c.l.b16 %v2717
        %v2960 = vunpack.c.h.b16 %v2717
        %v2961 = vunpack.c.l.b16 %v2718
        %v2962 = vunpack.c.h.b16 %v2718
        %v2963 = vunpack.c.l.b16 %v2719
        %v2964 = vunpack.c.h.b16 %v2719
        %v2965 = vunpack.c.l.b16 %v2720
        %v2966 = vunpack.c.h.b16 %v2720
        %v2967 = vunpack.c.l.b16 %v2721
        %v2968 = vunpack.c.h.b16 %v2721
        %v2969 = vunpack.c.l.b16 %v2722
        %v2970 = vunpack.c.h.b16 %v2722
        %v2971 = vpack.c.b16 %v2815, %v2811
        %v2972 = vpack.c.b16 %v2816, %v2812
        %v2973 = vpack.c.b16 %v2817, %v2813
        %v2974 = vpack.c.b16 %v2818, %v2814
        %v2975 = vpack.c.b16 %v2823, %v2819
        %v2976 = vpack.c.b16 %v2824, %v2820
        %v2977 = vpack.c.b16 %v2825, %v2821
        %v2978 = vpack.c.b16 %v2826, %v2822
        %v2979 = vpack.c.b16 %v2831, %v2827
        %v2980 = vpack.c.b16 %v2832, %v2828
        %v2981 = vpack.c.b16 %v2833, %v2829
        %v2982 = vpack.c.b16 %v2834, %v2830
        %v2983 = vpack.c.b16 %v2839, %v2835
        %v2984 = vpack.c.b16 %v2840, %v2836
        %v2985 = vpack.c.b16 %v2841, %v2837
        %v2986 = vpack.c.b16 %v2842, %v2838
        %v2987 = vpack.c.b16 %v2847, %v2843
        %v2988 = vpack.c.b16 %v2848, %v2844
        %v2989 = vpack.c.b16 %v2849, %v2845
        %v2990 = vpack.c.b16 %v2850, %v2846
        %v2991 = vpack.c.b16 %v2855, %v2851
        %v2992 = vpack.c.b16 %v2856, %v2852
        %v2993 = vpack.c.b16 %v2857, %v2853
        %v2994 = vpack.c.b16 %v2858, %v2854
        %v2995 = vpack.c.b16 %v2863, %v2859
        %v2996 = vpack.c.b16 %v2864, %v2860
        %v2997 = vpack.c.b16 %v2865, %v2861
        %v2998 = vpack.c.b16 %v2866, %v2862
        %v2999 = vpack.c.b16 %v2871, %v2867
        %v3000 = vpack.c.b16 %v2872, %v2868
        %v3001 = vpack.c.b16 %v2873, %v2869
        %v3002 = vpack.c.b16 %v2874, %v2870
        %v3003 = vpack.c.b16 %v2879, %v2875
        %v3004 = vpack.c.b16 %v2880, %v2876
        %v3005 = vpack.c.b16 %v2881, %v2877
        %v3006 = vpack.c.b16 %v2882, %v2878
        %v3007 = vpack.c.b16 %v2887, %v2883
        %v3008 = vpack.c.b16 %v2888, %v2884
        %v3009 = vpack.c.b16 %v2889, %v2885
        %v3010 = vpack.c.b16 %v2890, %v2886
        %v3011 = vpack.c.b16 %v2895, %v2891
        %v3012 = vpack.c.b16 %v2896, %v2892
        %v3013 = vpack.c.b16 %v2897, %v2893
        %v3014 = vpack.c.b16 %v2898, %v2894
        %v3015 = vpack.c.b16 %v2903, %v2899
        %v3016 = vpack.c.b16 %v2904, %v2900
        %v3017 = vpack.c.b16 %v2905, %v2901
        %v3018 = vpack.c.b16 %v2906, %v2902
        %v3019 = vpack.c.b16 %v2911, %v2907
        %v3020 = vpack.c.b16 %v2912, %v2908
        %v3021 = vpack.c.b16 %v2913, %v2909
        %v3022 = vpack.c.b16 %v2914, %v2910
        %v3023 = vpack.c.b16 %v2919, %v2915
        %v3024 = vpack.c.b16 %v2920, %v2916
        %v3025 = vpack.c.b16 %v2921, %v2917
        %v3026 = vpack.c.b16 %v2922, %v2918
        %v3027 = vpack.c.b16 %v2927, %v2923
        %v3028 = vpack.c.b16 %v2928, %v2924
        %v3029 = vpack.c.b16 %v2929, %v2925
        %v3030 = vpack.c.b16 %v2930, %v2926
        %v3031 = vpack.c.b16 %v2935, %v2931
        %v3032 = vpack.c.b16 %v2936, %v2932
        %v3033 = vpack.c.b16 %v2937, %v2933
        %v3034 = vpack.c.b16 %v2938, %v2934
        %v3035 = vpack.c.b16 %v2943, %v2939
        %v3036 = vpack.c.b16 %v2944, %v2940
        %v3037 = vpack.c.b16 %v2945, %v2941
        %v3038 = vpack.c.b16 %v2946, %v2942
        %v3039 = vpack.c.b16 %v2951, %v2947
        %v3040 = vpack.c.b16 %v2952, %v2948
        %v3041 = vpack.c.b16 %v2953, %v2949
        %v3042 = vpack.c.b16 %v2954, %v2950
        %v3043 = vpack.c.b16 %v2959, %v2955
        %v3044 = vpack.c.b16 %v2960, %v2956
        %v3045 = vpack.c.b16 %v2961, %v2957
        %v3046 = vpack.c.b16 %v2962, %v2958
        %v3047 = vpack.c.b16 %v2967, %v2963
        %v3048 = vpack.c.b16 %v2968, %v2964
        %v3049 = vpack.c.b16 %v2969, %v2965
        %v3050 = vpack.c.b16 %v2970, %v2966
        %v3132 = vsel %vm1907, %v2728, 0
        %3134 = vmatprep.subr.bf16.mxu0 %v3000
        %3135 = vmatpush1.bf16.msra.mxu0 %v2999
        %3136 = vmatprep.subr.bf16.mxu0 %v2996
        %3137 = vmatpush1.bf16.msra.mxu0 %v2995
        %3138 = vmatprep.subr.bf16.mxu0 %v2992
        %3139 = vmatpush1.bf16.msra.mxu0 %v2991
        %3140 = vmatprep.subr.bf16.mxu0 %v2988
        %3141 = vmatpush1.bf16.msra.mxu0 %v2987
        %3142 = vmatprep.subr.bf16.mxu0 %v2984
        %3143 = vmatpush1.bf16.msra.mxu0 %v2983
        %3144 = vmatprep.subr.bf16.mxu0 %v2980
        %3145 = vmatpush1.bf16.msra.mxu0 %v2979
        %3146 = vmatprep.subr.bf16.mxu0 %v2976
        %3147 = vmatpush1.bf16.msra.mxu0 %v2975
        %3148 = vmatprep.subr.bf16.mxu0 %v2972
        %3149 = vmatpush1.bf16.msra.mxu0 %v2971
        %3150 = vmatprep.subr.bf16.mxu0 %v3032
        %3151 = vmatpush2.bf16.msra.mxu0 %v3031
        %3152 = vmatprep.subr.bf16.mxu0 %v3028
        %3153 = vmatpush2.bf16.msra.mxu0 %v3027
        %3154 = vmatprep.subr.bf16.mxu0 %v3024
        %3155 = vmatpush2.bf16.msra.mxu0 %v3023
        %3156 = vmatprep.subr.bf16.mxu0 %v3020
        %3157 = vmatpush2.bf16.msra.mxu0 %v3019
        %3158 = vmatprep.subr.bf16.mxu0 %v3016
        %3159 = vmatpush2.bf16.msra.mxu0 %v3015
        %3160 = vmatprep.subr.bf16.mxu0 %v3012
        %3161 = vmatpush2.bf16.msra.mxu0 %v3011
        %3162 = vmatprep.subr.bf16.mxu0 %v3008
        %3163 = vmatpush2.bf16.msra.mxu0 %v3007
        %3164 = vmatprep.subr.bf16.mxu0 %v3004
        %3165 = vmatpush2.bf16.msra.mxu0 %v3003
        %3166 = vmatprep.mubr.bf16.mxu0 %v2727
        %3167 = vmatmul.mubr.bf16.gmra.mxu0 %v2726
        %v3168 = vpop.f32.mrf.mxu0
        %v3169 = vadd.f32 0.0, %v3168
        %v3170 = vpop.f32.mrf.mxu0
        %v3171 = vadd.f32 0.0, %v3170
        %v3172 = vpop.f32.mrf.mxu0
        %v3173 = vpop.f32.mrf.mxu0
        %3174 = vdwg.mxu0
        %3175 = vmatprep.subr.bf16.mxu0 0
        %3176 = vmatpush1.bf16.msra.mxu0 0
        %3177 = vmatprep.subr.bf16.mxu0 0
        %3178 = vmatpush1.bf16.msra.mxu0 0
        %3179 = vmatprep.subr.bf16.mxu0 0
        %3180 = vmatpush1.bf16.msra.mxu0 0
        %3181 = vmatprep.subr.bf16.mxu0 0
        %3182 = vmatpush1.bf16.msra.mxu0 0
        %3183 = vmatprep.subr.bf16.mxu0 %v3048
        %3184 = vmatpush1.bf16.msra.mxu0 %v3047
        %3185 = vmatprep.subr.bf16.mxu0 %v3044
        %3186 = vmatpush1.bf16.msra.mxu0 %v3043
        %3187 = vmatprep.subr.bf16.mxu0 %v3040
        %3188 = vmatpush1.bf16.msra.mxu0 %v3039
        %3189 = vmatprep.subr.bf16.mxu0 %v3036
        %3190 = vmatpush1.bf16.msra.mxu0 %v3035
        %3191 = vmatprep.subr.bf16.mxu0 0
        %3192 = vmatpush2.bf16.msra.mxu0 0
        %3193 = vmatprep.subr.bf16.mxu0 0
        %3194 = vmatpush2.bf16.msra.mxu0 0
        %3195 = vmatprep.subr.bf16.mxu0 0
        %3196 = vmatpush2.bf16.msra.mxu0 0
        %3197 = vmatprep.subr.bf16.mxu0 0
        %3198 = vmatpush2.bf16.msra.mxu0 0
        %3199 = vmatprep.subr.bf16.mxu0 0
        %3200 = vmatpush2.bf16.msra.mxu0 0
        %3201 = vmatprep.subr.bf16.mxu0 0
        %3202 = vmatpush2.bf16.msra.mxu0 0
        %3203 = vmatprep.subr.bf16.mxu0 0
        %3204 = vmatpush2.bf16.msra.mxu0 0
        %3205 = vmatprep.subr.bf16.mxu0 0
        %3206 = vmatpush2.bf16.msra.mxu0 0
        %3207 = vmatprep.mubr.bf16.mxu0 0
        %3208 = vmatmul.mubr.bf16.gmra.mxu0 %v3132
        %v3209 = vpop.f32.mrf.mxu0
        %v3210 = vadd.f32 %v3169, %v3209
        %v3211 = vpop.f32.mrf.mxu0
        %v3212 = vadd.f32 %v3171, %v3211
        %v3213 = vpop.f32.mrf.mxu0
        %v3214 = vpop.f32.mrf.mxu0
        %3215 = vdwg.mxu0
        %3216 = vmatprep.subr.bf16.mxu0 %v3002
        %3217 = vmatpush1.bf16.msra.mxu0 %v3001
        %3218 = vmatprep.subr.bf16.mxu0 %v2998
        %3219 = vmatpush1.bf16.msra.mxu0 %v2997
        %3220 = vmatprep.subr.bf16.mxu0 %v2994
        %3221 = vmatpush1.bf16.msra.mxu0 %v2993
        %3222 = vmatprep.subr.bf16.mxu0 %v2990
        %3223 = vmatpush1.bf16.msra.mxu0 %v2989
        %3224 = vmatprep.subr.bf16.mxu0 %v2986
        %3225 = vmatpush1.bf16.msra.mxu0 %v2985
        %3226 = vmatprep.subr.bf16.mxu0 %v2982
        %3227 = vmatpush1.bf16.msra.mxu0 %v2981
        %3228 = vmatprep.subr.bf16.mxu0 %v2978
        %3229 = vmatpush1.bf16.msra.mxu0 %v2977
        %3230 = vmatprep.subr.bf16.mxu0 %v2974
        %3231 = vmatpush1.bf16.msra.mxu0 %v2973
        %3232 = vmatprep.subr.bf16.mxu0 %v3034
        %3233 = vmatpush2.bf16.msra.mxu0 %v3033
        %3234 = vmatprep.subr.bf16.mxu0 %v3030
        %3235 = vmatpush2.bf16.msra.mxu0 %v3029
        %3236 = vmatprep.subr.bf16.mxu0 %v3026
        %3237 = vmatpush2.bf16.msra.mxu0 %v3025
        %3238 = vmatprep.subr.bf16.mxu0 %v3022
        %3239 = vmatpush2.bf16.msra.mxu0 %v3021
        %3240 = vmatprep.subr.bf16.mxu0 %v3018
        %3241 = vmatpush2.bf16.msra.mxu0 %v3017
        %3242 = vmatprep.subr.bf16.mxu0 %v3014
        %3243 = vmatpush2.bf16.msra.mxu0 %v3013
        %3244 = vmatprep.subr.bf16.mxu0 %v3010
        %3245 = vmatpush2.bf16.msra.mxu0 %v3009
        %3246 = vmatprep.subr.bf16.mxu0 %v3006
        %3247 = vmatpush2.bf16.msra.mxu0 %v3005
        %3248 = vmatprep.mubr.bf16.mxu0 %v2727
        %3249 = vmatmul.mubr.bf16.gmra.mxu0 %v2726
        %v3250 = vpop.f32.mrf.mxu0
        %v3251 = vadd.f32 0.0, %v3250
        %v3252 = vpop.f32.mrf.mxu0
        %v3253 = vadd.f32 0.0, %v3252
        %v3254 = vpop.f32.mrf.mxu0
        %v3255 = vpop.f32.mrf.mxu0
        %3256 = vdwg.mxu0
        %3257 = vmatprep.subr.bf16.mxu0 0
        %3258 = vmatpush1.bf16.msra.mxu0 0
        %3259 = vmatprep.subr.bf16.mxu0 0
        %3260 = vmatpush1.bf16.msra.mxu0 0
        %3261 = vmatprep.subr.bf16.mxu0 0
        %3262 = vmatpush1.bf16.msra.mxu0 0
        %3263 = vmatprep.subr.bf16.mxu0 0
        %3264 = vmatpush1.bf16.msra.mxu0 0
        %3265 = vmatprep.subr.bf16.mxu0 %v3050
        %3266 = vmatpush1.bf16.msra.mxu0 %v3049
        %3267 = vmatprep.subr.bf16.mxu0 %v3046
        %3268 = vmatpush1.bf16.msra.mxu0 %v3045
        %3269 = vmatprep.subr.bf16.mxu0 %v3042
        %3270 = vmatpush1.bf16.msra.mxu0 %v3041
        %3271 = vmatprep.subr.bf16.mxu0 %v3038
        %3272 = vmatpush1.bf16.msra.mxu0 %v3037
        %3273 = vmatprep.subr.bf16.mxu0 0
        %3274 = vmatpush2.bf16.msra.mxu0 0
        %3275 = vmatprep.subr.bf16.mxu0 0
        %3276 = vmatpush2.bf16.msra.mxu0 0
        %3277 = vmatprep.subr.bf16.mxu0 0
        %3278 = vmatpush2.bf16.msra.mxu0 0
        %3279 = vmatprep.subr.bf16.mxu0 0
        %3280 = vmatpush2.bf16.msra.mxu0 0
        %3281 = vmatprep.subr.bf16.mxu0 0
        %3282 = vmatpush2.bf16.msra.mxu0 0
        %3283 = vmatprep.subr.bf16.mxu0 0
        %3284 = vmatpush2.bf16.msra.mxu0 0
        %3285 = vmatprep.subr.bf16.mxu0 0
        %3286 = vmatpush2.bf16.msra.mxu0 0
        %3287 = vmatprep.subr.bf16.mxu0 0
        %3288 = vmatpush2.bf16.msra.mxu0 0
        %3289 = vmatprep.mubr.bf16.mxu0 0
        %3290 = vmatmul.mubr.bf16.gmra.mxu0 %v3132
        %v3291 = vpop.f32.mrf.mxu0
        %v3292 = vadd.f32 %v3251, %v3291
        %v3293 = vpop.f32.mrf.mxu0
        %v3294 = vadd.f32 %v3253, %v3293
        %v3295 = vpop.f32.mrf.mxu0
        %v3296 = vpop.f32.mrf.mxu0
        %3297 = vdwg.mxu0
        %v3298 = vadd.f32 %v2554, %v3210
        %v3299 = vadd.f32 %v2556, %v3212
        %v3300 = vadd.f32 %v2636, %v3292
        %v3301 = vadd.f32 %v2638, %v3294
        %v3306 = vrot.slane %v3298, 1
        %v3307 = vrot.slane %v3299, 1
        %v3308 = vrot.slane %v3300, 1
        %v3309 = vrot.slane %v3301, 1
        %v3314 = vmax.f32 %v3298, %v3306
        %v3315 = vmax.f32 %v3299, %v3307
        %v3316 = vmax.f32 %v3300, %v3308
        %v3317 = vmax.f32 %v3301, %v3309
        %v3322 = vrot.slane %v3314, 1
        %v3323 = vrot.slane %v3315, 1
        %v3324 = vrot.slane %v3316, 1
        %v3325 = vrot.slane %v3317, 1
        %v3330 = vrot.slane %v3314, 2
        %v3331 = vrot.slane %v3315, 2
        %v3332 = vrot.slane %v3316, 2
        %v3333 = vrot.slane %v3317, 2
        %v3338 = vrot.slane %v3314, 3
        %v3339 = vrot.slane %v3315, 3
        %v3340 = vrot.slane %v3316, 3
        %v3341 = vrot.slane %v3317, 3
        %v3346 = vsel %vm1288, %v3314, %v3322
        %v3347 = vsel %vm1288, %v3315, %v3323
        %v3348 = vsel %vm1288, %v3316, %v3324
        %v3349 = vsel %vm1288, %v3317, %v3325
        %v3350 = vsel %vm1292, %v3346, %v3330
        %v3351 = vsel %vm1292, %v3347, %v3331
        %v3352 = vsel %vm1292, %v3348, %v3332
        %v3353 = vsel %vm1292, %v3349, %v3333
        %v3354 = vsel %vm1296, %v3350, %v3338
        %v3355 = vsel %vm1296, %v3351, %v3339
        %v3356 = vsel %vm1296, %v3352, %v3340
        %v3357 = vsel %vm1296, %v3353, %v3341
        %3359 = vrot.lane.b32.xlu0 %v3354, 64
        %v3360 = vpop.permute.xlu0 %3359
        %v3362 = vmax.f32 %v3354, %v3360
        %3364 = vrot.lane.b32.xlu0 %v3355, 64
        %v3365 = vpop.permute.xlu0 %3364
        %v3367 = vmax.f32 %v3355, %v3365
        %3369 = vrot.lane.b32.xlu0 %v3356, 64
        %v3370 = vpop.permute.xlu0 %3369
        %v3372 = vmax.f32 %v3356, %v3370
        %3374 = vrot.lane.b32.xlu0 %v3357, 64
        %v3375 = vpop.permute.xlu0 %3374
        %v3377 = vmax.f32 %v3357, %v3375
        %3379 = vrot.lane.b32.xlu0 %v3367, 64
        %v3380 = vpop.permute.xlu0 %3379
        %3383 = vrot.lane.b32.xlu0 %v3377, 64
        %v3384 = vpop.permute.xlu0 %3383
        %v3386 = vsel %vm1907, %v3362, %v3380
        %v3387 = vsel %vm1907, %v3372, %v3384
        %v3388 = vld [vmem:[%s4] sm:$0x3]
        %v3390 = vlaneseq
        %v3391 = vshrl.u32 %v3390, 7
        %v3392 = vsub.s32 0, %v3391
        %v3393 = vrot.slane %v3388, %v3392
        %v3394 = vlaneseq
        %v3395 = vshrl.u32 %v3394, 7
        %v3396 = vsub.s32 1, %v3395
        %v3397 = vrot.slane %v3388, %v3396
        %v3400 = vadd.f32 %v3386, %v3393
        %v3401 = vadd.f32 %v3387, %v3397
        %v3402 = vmax.f32 %v3400, 0.0
        %v3403 = vmax.f32 %v3401, 0.0
        %v3404 = vpack.c.bf16 %v3402, %v3402
        %v3405 = vpack.c.bf16 %v3403, %v3403
        %v3406 = vld [vmem:[%s5] sm:$0xf]
        %v3407 = vld [vmem:[%s5 + $0x4] sm:$0xf]
        %v3408 = vld [vmem:[%s5 + $0x8] sm:$0xf]
        %v3409 = vld [vmem:[%s5 + $0xc] sm:$0xf]
        %v3410 = vld [vmem:[%s5 + $0x10] sm:$0xf]
        %v3411 = vld [vmem:[%s5 + $0x14] sm:$0xf]
        %v3412 = vld [vmem:[%s5 + $0x18] sm:$0xf]
        %v3413 = vld [vmem:[%s5 + $0x1c] sm:$0xf]
        %v3414 = vld [vmem:[%s5 + $0x20] sm:$0xf]
        %v3415 = vld [vmem:[%s5 + $0x24] sm:$0xf]
        %v3416 = vld [vmem:[%s5 + $0x28] sm:$0xf]
        %v3417 = vld [vmem:[%s5 + $0x2c] sm:$0xf]
        %v3418 = vld [vmem:[%s5 + $0x30] sm:$0xf]
        %v3419 = vld [vmem:[%s5 + $0x34] sm:$0xf]
        %v3420 = vld [vmem:[%s5 + $0x38] sm:$0xf]
        %v3421 = vld [vmem:[%s5 + $0x3c] sm:$0xf]
        %v3422 = vld [vmem:[%s5 + $0x40] sm:$0xf]
        %v3423 = vld [vmem:[%s5 + $0x44] sm:$0xf]
        %v3424 = vld [vmem:[%s5 + $0x48] sm:$0xf]
        %v3425 = vld [vmem:[%s5 + $0x4c] sm:$0xf]
        %v3426 = vld [vmem:[%s5 + $0x50] sm:$0xf]
        %v3427 = vld [vmem:[%s5 + $0x54] sm:$0xf]
        %v3428 = vld [vmem:[%s5 + $0x58] sm:$0xf]
        %v3429 = vld [vmem:[%s5 + $0x5c] sm:$0xf]
        %v3430 = vld [vmem:[%s5 + $0x60] sm:$0xf]
        %v3431 = vld [vmem:[%s5 + $0x64] sm:$0xf]
        %v3432 = vld [vmem:[%s5 + $0x68] sm:$0xf]
        %v3433 = vld [vmem:[%s5 + $0x6c] sm:$0xf]
        %v3434 = vld [vmem:[%s5 + $0x70] sm:$0xf]
        %v3435 = vld [vmem:[%s5 + $0x74] sm:$0xf]
        %v3436 = vld [vmem:[%s5 + $0x78] sm:$0xf]
        %v3437 = vld [vmem:[%s5 + $0x7c] sm:$0xf]
        %s3438 = scalar_lea.vmem %s5, 128
        %v3439 = vld [vmem:[%s3438] sm:$0xf]
        %v3440 = vld [vmem:[%s3438 + $0x4] sm:$0xf]
        %v3441 = vld [vmem:[%s3438 + $0x8] sm:$0xf]
        %v3442 = vld [vmem:[%s3438 + $0xc] sm:$0xf]
        %v3443 = vld [vmem:[%s3438 + $0x10] sm:$0xf]
        %v3444 = vld [vmem:[%s3438 + $0x14] sm:$0xf]
        %v3445 = vld [vmem:[%s3438 + $0x18] sm:$0xf]
        %v3446 = vld [vmem:[%s3438 + $0x1c] sm:$0xf]
        %v3447 = vld [vmem:[%s3438 + $0x20] sm:$0xf]
        %v3448 = vld [vmem:[%s3438 + $0x24] sm:$0xf]
        %v3449 = vld [vmem:[%s3438 + $0x28] sm:$0xf]
        %v3450 = vld [vmem:[%s3438 + $0x2c] sm:$0xf]
        %v3451 = vld [vmem:[%s3438 + $0x30] sm:$0xf]
        %v3452 = vld [vmem:[%s3438 + $0x34] sm:$0xf]
        %v3453 = vld [vmem:[%s3438 + $0x38] sm:$0xf]
        %v3454 = vld [vmem:[%s3438 + $0x3c] sm:$0xf]
        %v3455 = vld [vmem:[%s3438 + $0x40] sm:$0xf]
        %v3456 = vld [vmem:[%s3438 + $0x44] sm:$0xf]
        %v3457 = vld [vmem:[%s3438 + $0x48] sm:$0xf]
        %v3458 = vld [vmem:[%s3438 + $0x4c] sm:$0xf]
        %v3459 = vld [vmem:[%s3438 + $0x50] sm:$0xf]
        %v3460 = vld [vmem:[%s3438 + $0x54] sm:$0xf]
        %v3461 = vld [vmem:[%s3438 + $0x58] sm:$0xf]
        %v3462 = vld [vmem:[%s3438 + $0x5c] sm:$0xf]
        %v3463 = vld [vmem:[%s3438 + $0x60] sm:$0xf]
        %v3464 = vld [vmem:[%s3438 + $0x64] sm:$0xf]
        %v3465 = vld [vmem:[%s3438 + $0x68] sm:$0xf]
        %v3466 = vld [vmem:[%s3438 + $0x6c] sm:$0xf]
        %v3467 = vld [vmem:[%s3438 + $0x70] sm:$0xf]
        %v3468 = vld [vmem:[%s3438 + $0x74] sm:$0xf]
        %v3469 = vld [vmem:[%s3438 + $0x78] sm:$0xf]
        %v3470 = vld [vmem:[%s3438 + $0x7c] sm:$0xf]
        %v3472 = vshrl.u32 %v3404, 16
        %v3475 = vshrl.u32 %v3405, 16
        %v3511 = vunpack.c.l.b16 %v3439
        %v3512 = vunpack.c.l.b16 %v3440
        %v3513 = vunpack.c.l.b16 %v3441
        %v3514 = vunpack.c.l.b16 %v3442
        %v3515 = vunpack.c.l.b16 %v3443
        %v3516 = vunpack.c.l.b16 %v3444
        %v3517 = vunpack.c.l.b16 %v3445
        %v3518 = vunpack.c.l.b16 %v3446
        %v3519 = vunpack.c.l.b16 %v3447
        %v3520 = vunpack.c.l.b16 %v3448
        %v3521 = vunpack.c.l.b16 %v3449
        %v3522 = vunpack.c.l.b16 %v3450
        %v3523 = vunpack.c.l.b16 %v3451
        %v3524 = vunpack.c.l.b16 %v3452
        %v3525 = vunpack.c.l.b16 %v3453
        %v3526 = vunpack.c.l.b16 %v3454
        %v3527 = vunpack.c.l.b16 %v3455
        %v3528 = vunpack.c.l.b16 %v3456
        %v3529 = vunpack.c.l.b16 %v3457
        %v3530 = vunpack.c.l.b16 %v3458
        %v3531 = vunpack.c.l.b16 %v3459
        %v3532 = vunpack.c.l.b16 %v3460
        %v3533 = vunpack.c.l.b16 %v3461
        %v3534 = vunpack.c.l.b16 %v3462
        %v3535 = vunpack.c.l.b16 %v3463
        %v3536 = vunpack.c.l.b16 %v3464
        %v3537 = vunpack.c.l.b16 %v3465
        %v3538 = vunpack.c.l.b16 %v3466
        %v3539 = vunpack.c.l.b16 %v3467
        %v3540 = vunpack.c.l.b16 %v3468
        %v3541 = vunpack.c.l.b16 %v3469
        %v3542 = vunpack.c.l.b16 %v3470
        %v3543 = vpack.c.b16 %v3512, %v3511
        %v3544 = vpack.c.b16 %v3514, %v3513
        %v3545 = vpack.c.b16 %v3516, %v3515
        %v3546 = vpack.c.b16 %v3518, %v3517
        %v3547 = vpack.c.b16 %v3520, %v3519
        %v3548 = vpack.c.b16 %v3522, %v3521
        %v3549 = vpack.c.b16 %v3524, %v3523
        %v3550 = vpack.c.b16 %v3526, %v3525
        %v3551 = vpack.c.b16 %v3528, %v3527
        %v3552 = vpack.c.b16 %v3530, %v3529
        %v3553 = vpack.c.b16 %v3532, %v3531
        %v3554 = vpack.c.b16 %v3534, %v3533
        %v3555 = vpack.c.b16 %v3536, %v3535
        %v3556 = vpack.c.b16 %v3538, %v3537
        %v3557 = vpack.c.b16 %v3540, %v3539
        %v3558 = vpack.c.b16 %v3542, %v3541
        %3575 = vmatprep.subr.bf16.mxu0 0
        %3576 = vmatpush1.bf16.msra.mxu0 %v3550
        %3577 = vmatprep.subr.bf16.mxu0 0
        %3578 = vmatpush1.bf16.msra.mxu0 %v3549
        %3579 = vmatprep.subr.bf16.mxu0 0
        %3580 = vmatpush1.bf16.msra.mxu0 %v3548
        %3581 = vmatprep.subr.bf16.mxu0 0
        %3582 = vmatpush1.bf16.msra.mxu0 %v3547
        %3583 = vmatprep.subr.bf16.mxu0 0
        %3584 = vmatpush1.bf16.msra.mxu0 %v3546
        %3585 = vmatprep.subr.bf16.mxu0 0
        %3586 = vmatpush1.bf16.msra.mxu0 %v3545
        %3587 = vmatprep.subr.bf16.mxu0 0
        %3588 = vmatpush1.bf16.msra.mxu0 %v3544
        %3589 = vmatprep.subr.bf16.mxu0 0
        %3590 = vmatpush1.bf16.msra.mxu0 %v3543
        %3591 = vmatprep.subr.bf16.mxu0 0
        %3592 = vmatpush2.bf16.msra.mxu0 %v3558
        %3593 = vmatprep.subr.bf16.mxu0 0
        %3594 = vmatpush2.bf16.msra.mxu0 %v3557
        %3595 = vmatprep.subr.bf16.mxu0 0
        %3596 = vmatpush2.bf16.msra.mxu0 %v3556
        %3597 = vmatprep.subr.bf16.mxu0 0
        %3598 = vmatpush2.bf16.msra.mxu0 %v3555
        %3599 = vmatprep.subr.bf16.mxu0 0
        %3600 = vmatpush2.bf16.msra.mxu0 %v3554
        %3601 = vmatprep.subr.bf16.mxu0 0
        %3602 = vmatpush2.bf16.msra.mxu0 %v3553
        %3603 = vmatprep.subr.bf16.mxu0 0
        %3604 = vmatpush2.bf16.msra.mxu0 %v3552
        %3605 = vmatprep.subr.bf16.mxu0 0
        %3606 = vmatpush2.bf16.msra.mxu0 %v3551
        %3607 = vmatprep.mubr.bf16.mxu0 %v3475
        %3608 = vmatmul.mubr.bf16.gmra.mxu0 %v3472
        %v3609 = vpop.f32.mrf.mxu0
        %v3610 = vadd.f32 0.0, %v3609
        %v3611 = vpop.f32.mrf.mxu0
        %v3612 = vpop.f32.mrf.mxu0
        %v3613 = vpop.f32.mrf.mxu0
        %3614 = vdwg.mxu0
        %v3647 = vunpack.c.l.b16 %v3406
        %v3648 = vunpack.c.l.b16 %v3407
        %v3649 = vunpack.c.l.b16 %v3408
        %v3650 = vunpack.c.l.b16 %v3409
        %v3651 = vunpack.c.l.b16 %v3410
        %v3652 = vunpack.c.l.b16 %v3411
        %v3653 = vunpack.c.l.b16 %v3412
        %v3654 = vunpack.c.l.b16 %v3413
        %v3655 = vunpack.c.l.b16 %v3414
        %v3656 = vunpack.c.l.b16 %v3415
        %v3657 = vunpack.c.l.b16 %v3416
        %v3658 = vunpack.c.l.b16 %v3417
        %v3659 = vunpack.c.l.b16 %v3418
        %v3660 = vunpack.c.l.b16 %v3419
        %v3661 = vunpack.c.l.b16 %v3420
        %v3662 = vunpack.c.l.b16 %v3421
        %v3663 = vunpack.c.l.b16 %v3422
        %v3664 = vunpack.c.l.b16 %v3423
        %v3665 = vunpack.c.l.b16 %v3424
        %v3666 = vunpack.c.l.b16 %v3425
        %v3667 = vunpack.c.l.b16 %v3426
        %v3668 = vunpack.c.l.b16 %v3427
        %v3669 = vunpack.c.l.b16 %v3428
        %v3670 = vunpack.c.l.b16 %v3429
        %v3671 = vunpack.c.l.b16 %v3430
        %v3672 = vunpack.c.l.b16 %v3431
        %v3673 = vunpack.c.l.b16 %v3432
        %v3674 = vunpack.c.l.b16 %v3433
        %v3675 = vunpack.c.l.b16 %v3434
        %v3676 = vunpack.c.l.b16 %v3435
        %v3677 = vunpack.c.l.b16 %v3436
        %v3678 = vunpack.c.l.b16 %v3437
        %v3679 = vpack.c.b16 %v3648, %v3647
        %v3680 = vpack.c.b16 %v3650, %v3649
        %v3681 = vpack.c.b16 %v3652, %v3651
        %v3682 = vpack.c.b16 %v3654, %v3653
        %v3683 = vpack.c.b16 %v3656, %v3655
        %v3684 = vpack.c.b16 %v3658, %v3657
        %v3685 = vpack.c.b16 %v3660, %v3659
        %v3686 = vpack.c.b16 %v3662, %v3661
        %v3687 = vpack.c.b16 %v3664, %v3663
        %v3688 = vpack.c.b16 %v3666, %v3665
        %v3689 = vpack.c.b16 %v3668, %v3667
        %v3690 = vpack.c.b16 %v3670, %v3669
        %v3691 = vpack.c.b16 %v3672, %v3671
        %v3692 = vpack.c.b16 %v3674, %v3673
        %v3693 = vpack.c.b16 %v3676, %v3675
        %v3694 = vpack.c.b16 %v3678, %v3677
        %3711 = vmatprep.subr.bf16.mxu0 0
        %3712 = vmatpush1.bf16.msra.mxu0 %v3686
        %3713 = vmatprep.subr.bf16.mxu0 0
        %3714 = vmatpush1.bf16.msra.mxu0 %v3685
        %3715 = vmatprep.subr.bf16.mxu0 0
        %3716 = vmatpush1.bf16.msra.mxu0 %v3684
        %3717 = vmatprep.subr.bf16.mxu0 0
        %3718 = vmatpush1.bf16.msra.mxu0 %v3683
        %3719 = vmatprep.subr.bf16.mxu0 0
        %3720 = vmatpush1.bf16.msra.mxu0 %v3682
        %3721 = vmatprep.subr.bf16.mxu0 0
        %3722 = vmatpush1.bf16.msra.mxu0 %v3681
        %3723 = vmatprep.subr.bf16.mxu0 0
        %3724 = vmatpush1.bf16.msra.mxu0 %v3680
        %3725 = vmatprep.subr.bf16.mxu0 0
        %3726 = vmatpush1.bf16.msra.mxu0 %v3679
        %3727 = vmatprep.subr.bf16.mxu0 0
        %3728 = vmatpush2.bf16.msra.mxu0 %v3694
        %3729 = vmatprep.subr.bf16.mxu0 0
        %3730 = vmatpush2.bf16.msra.mxu0 %v3693
        %3731 = vmatprep.subr.bf16.mxu0 0
        %3732 = vmatpush2.bf16.msra.mxu0 %v3692
        %3733 = vmatprep.subr.bf16.mxu0 0
        %3734 = vmatpush2.bf16.msra.mxu0 %v3691
        %3735 = vmatprep.subr.bf16.mxu0 0
        %3736 = vmatpush2.bf16.msra.mxu0 %v3690
        %3737 = vmatprep.subr.bf16.mxu0 0
        %3738 = vmatpush2.bf16.msra.mxu0 %v3689
        %3739 = vmatprep.subr.bf16.mxu0 0
        %3740 = vmatpush2.bf16.msra.mxu0 %v3688
        %3741 = vmatprep.subr.bf16.mxu0 0
        %3742 = vmatpush2.bf16.msra.mxu0 %v3687
        %3743 = vmatprep.mubr.bf16.mxu0 %v3405
        %3744 = vmatmul.mubr.bf16.gmra.mxu0 %v3404
        %v3745 = vpop.f32.mrf.mxu0
        %v3746 = vadd.f32 %v3610, %v3745
        %v3747 = vpop.f32.mrf.mxu0
        %v3748 = vpop.f32.mrf.mxu0
        %v3749 = vpop.f32.mrf.mxu0
        %3750 = vdwg.mxu0
        %s3751 = scalar_lea.vmem %s5, 256
        %v3752 = vld [vmem:[%s3751] sm:$0xf]
        %v3753 = vld [vmem:[%s3751 + $0x4] sm:$0xf]
        %v3754 = vld [vmem:[%s3751 + $0x8] sm:$0xf]
        %v3755 = vld [vmem:[%s3751 + $0xc] sm:$0xf]
        %v3756 = vld [vmem:[%s3751 + $0x10] sm:$0xf]
        %v3757 = vld [vmem:[%s3751 + $0x14] sm:$0xf]
        %v3758 = vld [vmem:[%s3751 + $0x18] sm:$0xf]
        %v3759 = vld [vmem:[%s3751 + $0x1c] sm:$0xf]
        %v3760 = vld [vmem:[%s3751 + $0x20] sm:$0xf]
        %v3761 = vld [vmem:[%s3751 + $0x24] sm:$0xf]
        %v3762 = vld [vmem:[%s3751 + $0x28] sm:$0xf]
        %v3763 = vld [vmem:[%s3751 + $0x2c] sm:$0xf]
        %v3764 = vld [vmem:[%s3751 + $0x30] sm:$0xf]
        %v3765 = vld [vmem:[%s3751 + $0x34] sm:$0xf]
        %v3766 = vld [vmem:[%s3751 + $0x38] sm:$0xf]
        %v3767 = vld [vmem:[%s3751 + $0x3c] sm:$0xf]
        %v3768 = vld [vmem:[%s3751 + $0x40] sm:$0xf]
        %v3769 = vld [vmem:[%s3751 + $0x44] sm:$0xf]
        %v3770 = vld [vmem:[%s3751 + $0x48] sm:$0xf]
        %v3771 = vld [vmem:[%s3751 + $0x4c] sm:$0xf]
        %v3772 = vld [vmem:[%s3751 + $0x50] sm:$0xf]
        %v3773 = vld [vmem:[%s3751 + $0x54] sm:$0xf]
        %v3774 = vld [vmem:[%s3751 + $0x58] sm:$0xf]
        %v3775 = vld [vmem:[%s3751 + $0x5c] sm:$0xf]
        %v3776 = vld [vmem:[%s3751 + $0x60] sm:$0xf]
        %v3777 = vld [vmem:[%s3751 + $0x64] sm:$0xf]
        %v3778 = vld [vmem:[%s3751 + $0x68] sm:$0xf]
        %v3779 = vld [vmem:[%s3751 + $0x6c] sm:$0xf]
        %v3780 = vld [vmem:[%s3751 + $0x70] sm:$0xf]
        %v3781 = vld [vmem:[%s3751 + $0x74] sm:$0xf]
        %v3782 = vld [vmem:[%s3751 + $0x78] sm:$0xf]
        %v3783 = vld [vmem:[%s3751 + $0x7c] sm:$0xf]
        %v3786 = vrot.slane %v3404, 1
        %v3787 = vrot.slane %v3405, 1
        %v3822 = vunpack.c.l.b16 %v3752
        %v3823 = vunpack.c.l.b16 %v3753
        %v3824 = vunpack.c.l.b16 %v3754
        %v3825 = vunpack.c.l.b16 %v3755
        %v3826 = vunpack.c.l.b16 %v3756
        %v3827 = vunpack.c.l.b16 %v3757
        %v3828 = vunpack.c.l.b16 %v3758
        %v3829 = vunpack.c.l.b16 %v3759
        %v3830 = vunpack.c.l.b16 %v3760
        %v3831 = vunpack.c.l.b16 %v3761
        %v3832 = vunpack.c.l.b16 %v3762
        %v3833 = vunpack.c.l.b16 %v3763
        %v3834 = vunpack.c.l.b16 %v3764
        %v3835 = vunpack.c.l.b16 %v3765
        %v3836 = vunpack.c.l.b16 %v3766
        %v3837 = vunpack.c.l.b16 %v3767
        %v3838 = vunpack.c.l.b16 %v3768
        %v3839 = vunpack.c.l.b16 %v3769
        %v3840 = vunpack.c.l.b16 %v3770
        %v3841 = vunpack.c.l.b16 %v3771
        %v3842 = vunpack.c.l.b16 %v3772
        %v3843 = vunpack.c.l.b16 %v3773
        %v3844 = vunpack.c.l.b16 %v3774
        %v3845 = vunpack.c.l.b16 %v3775
        %v3846 = vunpack.c.l.b16 %v3776
        %v3847 = vunpack.c.l.b16 %v3777
        %v3848 = vunpack.c.l.b16 %v3778
        %v3849 = vunpack.c.l.b16 %v3779
        %v3850 = vunpack.c.l.b16 %v3780
        %v3851 = vunpack.c.l.b16 %v3781
        %v3852 = vunpack.c.l.b16 %v3782
        %v3853 = vunpack.c.l.b16 %v3783
        %v3854 = vpack.c.b16 %v3823, %v3822
        %v3855 = vpack.c.b16 %v3825, %v3824
        %v3856 = vpack.c.b16 %v3827, %v3826
        %v3857 = vpack.c.b16 %v3829, %v3828
        %v3858 = vpack.c.b16 %v3831, %v3830
        %v3859 = vpack.c.b16 %v3833, %v3832
        %v3860 = vpack.c.b16 %v3835, %v3834
        %v3861 = vpack.c.b16 %v3837, %v3836
        %v3862 = vpack.c.b16 %v3839, %v3838
        %v3863 = vpack.c.b16 %v3841, %v3840
        %v3864 = vpack.c.b16 %v3843, %v3842
        %v3865 = vpack.c.b16 %v3845, %v3844
        %v3866 = vpack.c.b16 %v3847, %v3846
        %v3867 = vpack.c.b16 %v3849, %v3848
        %v3868 = vpack.c.b16 %v3851, %v3850
        %v3869 = vpack.c.b16 %v3853, %v3852
        %3886 = vmatprep.subr.bf16.mxu0 0
        %3887 = vmatpush1.bf16.msra.mxu0 %v3861
        %3888 = vmatprep.subr.bf16.mxu0 0
        %3889 = vmatpush1.bf16.msra.mxu0 %v3860
        %3890 = vmatprep.subr.bf16.mxu0 0
        %3891 = vmatpush1.bf16.msra.mxu0 %v3859
        %3892 = vmatprep.subr.bf16.mxu0 0
        %3893 = vmatpush1.bf16.msra.mxu0 %v3858
        %3894 = vmatprep.subr.bf16.mxu0 0
        %3895 = vmatpush1.bf16.msra.mxu0 %v3857
        %3896 = vmatprep.subr.bf16.mxu0 0
        %3897 = vmatpush1.bf16.msra.mxu0 %v3856
        %3898 = vmatprep.subr.bf16.mxu0 0
        %3899 = vmatpush1.bf16.msra.mxu0 %v3855
        %3900 = vmatprep.subr.bf16.mxu0 0
        %3901 = vmatpush1.bf16.msra.mxu0 %v3854
        %3902 = vmatprep.subr.bf16.mxu0 0
        %3903 = vmatpush2.bf16.msra.mxu0 %v3869
        %3904 = vmatprep.subr.bf16.mxu0 0
        %3905 = vmatpush2.bf16.msra.mxu0 %v3868
        %3906 = vmatprep.subr.bf16.mxu0 0
        %3907 = vmatpush2.bf16.msra.mxu0 %v3867
        %3908 = vmatprep.subr.bf16.mxu0 0
        %3909 = vmatpush2.bf16.msra.mxu0 %v3866
        %3910 = vmatprep.subr.bf16.mxu0 0
        %3911 = vmatpush2.bf16.msra.mxu0 %v3865
        %3912 = vmatprep.subr.bf16.mxu0 0
        %3913 = vmatpush2.bf16.msra.mxu0 %v3864
        %3914 = vmatprep.subr.bf16.mxu0 0
        %3915 = vmatpush2.bf16.msra.mxu0 %v3863
        %3916 = vmatprep.subr.bf16.mxu0 0
        %3917 = vmatpush2.bf16.msra.mxu0 %v3862
        %3918 = vmatprep.mubr.bf16.mxu0 %v3787
        %3919 = vmatmul.mubr.bf16.gmra.mxu0 %v3786
        %v3920 = vpop.f32.mrf.mxu0
        %v3921 = vadd.f32 0.0, %v3920
        %v3922 = vpop.f32.mrf.mxu0
        %v3923 = vpop.f32.mrf.mxu0
        %v3924 = vpop.f32.mrf.mxu0
        %3925 = vdwg.mxu0
        %v3926 = vadd.f32 %v3746, %v3921
        %s3927 = scalar_lea.vmem %s5, 384
        %v3928 = vld [vmem:[%s3927] sm:$0xf]
        %v3929 = vld [vmem:[%s3927 + $0x4] sm:$0xf]
        %v3930 = vld [vmem:[%s3927 + $0x8] sm:$0xf]
        %v3931 = vld [vmem:[%s3927 + $0xc] sm:$0xf]
        %v3932 = vld [vmem:[%s3927 + $0x10] sm:$0xf]
        %v3933 = vld [vmem:[%s3927 + $0x14] sm:$0xf]
        %v3934 = vld [vmem:[%s3927 + $0x18] sm:$0xf]
        %v3935 = vld [vmem:[%s3927 + $0x1c] sm:$0xf]
        %v3936 = vld [vmem:[%s3927 + $0x20] sm:$0xf]
        %v3937 = vld [vmem:[%s3927 + $0x24] sm:$0xf]
        %v3938 = vld [vmem:[%s3927 + $0x28] sm:$0xf]
        %v3939 = vld [vmem:[%s3927 + $0x2c] sm:$0xf]
        %v3940 = vld [vmem:[%s3927 + $0x30] sm:$0xf]
        %v3941 = vld [vmem:[%s3927 + $0x34] sm:$0xf]
        %v3942 = vld [vmem:[%s3927 + $0x38] sm:$0xf]
        %v3943 = vld [vmem:[%s3927 + $0x3c] sm:$0xf]
        %v3944 = vld [vmem:[%s3927 + $0x40] sm:$0xf]
        %v3945 = vld [vmem:[%s3927 + $0x44] sm:$0xf]
        %v3946 = vld [vmem:[%s3927 + $0x48] sm:$0xf]
        %v3947 = vld [vmem:[%s3927 + $0x4c] sm:$0xf]
        %v3948 = vld [vmem:[%s3927 + $0x50] sm:$0xf]
        %v3949 = vld [vmem:[%s3927 + $0x54] sm:$0xf]
        %v3950 = vld [vmem:[%s3927 + $0x58] sm:$0xf]
        %v3951 = vld [vmem:[%s3927 + $0x5c] sm:$0xf]
        %v3952 = vld [vmem:[%s3927 + $0x60] sm:$0xf]
        %v3953 = vld [vmem:[%s3927 + $0x64] sm:$0xf]
        %v3954 = vld [vmem:[%s3927 + $0x68] sm:$0xf]
        %v3955 = vld [vmem:[%s3927 + $0x6c] sm:$0xf]
        %v3956 = vld [vmem:[%s3927 + $0x70] sm:$0xf]
        %v3957 = vld [vmem:[%s3927 + $0x74] sm:$0xf]
        %v3958 = vld [vmem:[%s3927 + $0x78] sm:$0xf]
        %v3959 = vld [vmem:[%s3927 + $0x7c] sm:$0xf]
        %v3960 = vrot.slane %v3472, 1
        %v3961 = vrot.slane %v3475, 1
        %v3996 = vunpack.c.l.b16 %v3928
        %v3997 = vunpack.c.l.b16 %v3929
        %v3998 = vunpack.c.l.b16 %v3930
        %v3999 = vunpack.c.l.b16 %v3931
        %v4000 = vunpack.c.l.b16 %v3932
        %v4001 = vunpack.c.l.b16 %v3933
        %v4002 = vunpack.c.l.b16 %v3934
        %v4003 = vunpack.c.l.b16 %v3935
        %v4004 = vunpack.c.l.b16 %v3936
        %v4005 = vunpack.c.l.b16 %v3937
        %v4006 = vunpack.c.l.b16 %v3938
        %v4007 = vunpack.c.l.b16 %v3939
        %v4008 = vunpack.c.l.b16 %v3940
        %v4009 = vunpack.c.l.b16 %v3941
        %v4010 = vunpack.c.l.b16 %v3942
        %v4011 = vunpack.c.l.b16 %v3943
        %v4012 = vunpack.c.l.b16 %v3944
        %v4013 = vunpack.c.l.b16 %v3945
        %v4014 = vunpack.c.l.b16 %v3946
        %v4015 = vunpack.c.l.b16 %v3947
        %v4016 = vunpack.c.l.b16 %v3948
        %v4017 = vunpack.c.l.b16 %v3949
        %v4018 = vunpack.c.l.b16 %v3950
        %v4019 = vunpack.c.l.b16 %v3951
        %v4020 = vunpack.c.l.b16 %v3952
        %v4021 = vunpack.c.l.b16 %v3953
        %v4022 = vunpack.c.l.b16 %v3954
        %v4023 = vunpack.c.l.b16 %v3955
        %v4024 = vunpack.c.l.b16 %v3956
        %v4025 = vunpack.c.l.b16 %v3957
        %v4026 = vunpack.c.l.b16 %v3958
        %v4027 = vunpack.c.l.b16 %v3959
        %v4028 = vpack.c.b16 %v3997, %v3996
        %v4029 = vpack.c.b16 %v3999, %v3998
        %v4030 = vpack.c.b16 %v4001, %v4000
        %v4031 = vpack.c.b16 %v4003, %v4002
        %v4032 = vpack.c.b16 %v4005, %v4004
        %v4033 = vpack.c.b16 %v4007, %v4006
        %v4034 = vpack.c.b16 %v4009, %v4008
        %v4035 = vpack.c.b16 %v4011, %v4010
        %v4036 = vpack.c.b16 %v4013, %v4012
        %v4037 = vpack.c.b16 %v4015, %v4014
        %v4038 = vpack.c.b16 %v4017, %v4016
        %v4039 = vpack.c.b16 %v4019, %v4018
        %v4040 = vpack.c.b16 %v4021, %v4020
        %v4041 = vpack.c.b16 %v4023, %v4022
        %v4042 = vpack.c.b16 %v4025, %v4024
        %v4043 = vpack.c.b16 %v4027, %v4026
        %4060 = vmatprep.subr.bf16.mxu0 0
        %4061 = vmatpush1.bf16.msra.mxu0 %v4035
        %4062 = vmatprep.subr.bf16.mxu0 0
        %4063 = vmatpush1.bf16.msra.mxu0 %v4034
        %4064 = vmatprep.subr.bf16.mxu0 0
        %4065 = vmatpush1.bf16.msra.mxu0 %v4033
        %4066 = vmatprep.subr.bf16.mxu0 0
        %4067 = vmatpush1.bf16.msra.mxu0 %v4032
        %4068 = vmatprep.subr.bf16.mxu0 0
        %4069 = vmatpush1.bf16.msra.mxu0 %v4031
        %4070 = vmatprep.subr.bf16.mxu0 0
        %4071 = vmatpush1.bf16.msra.mxu0 %v4030
        %4072 = vmatprep.subr.bf16.mxu0 0
        %4073 = vmatpush1.bf16.msra.mxu0 %v4029
        %4074 = vmatprep.subr.bf16.mxu0 0
        %4075 = vmatpush1.bf16.msra.mxu0 %v4028
        %4076 = vmatprep.subr.bf16.mxu0 0
        %4077 = vmatpush2.bf16.msra.mxu0 %v4043
        %4078 = vmatprep.subr.bf16.mxu0 0
        %4079 = vmatpush2.bf16.msra.mxu0 %v4042
        %4080 = vmatprep.subr.bf16.mxu0 0
        %4081 = vmatpush2.bf16.msra.mxu0 %v4041
        %4082 = vmatprep.subr.bf16.mxu0 0
        %4083 = vmatpush2.bf16.msra.mxu0 %v4040
        %4084 = vmatprep.subr.bf16.mxu0 0
        %4085 = vmatpush2.bf16.msra.mxu0 %v4039
        %4086 = vmatprep.subr.bf16.mxu0 0
        %4087 = vmatpush2.bf16.msra.mxu0 %v4038
        %4088 = vmatprep.subr.bf16.mxu0 0
        %4089 = vmatpush2.bf16.msra.mxu0 %v4037
        %4090 = vmatprep.subr.bf16.mxu0 0
        %4091 = vmatpush2.bf16.msra.mxu0 %v4036
        %4092 = vmatprep.mubr.bf16.mxu0 %v3961
        %4093 = vmatmul.mubr.bf16.gmra.mxu0 %v3960
        %v4094 = vpop.f32.mrf.mxu0
        %v4095 = vadd.f32 0.0, %v4094
        %v4096 = vpop.f32.mrf.mxu0
        %v4097 = vpop.f32.mrf.mxu0
        %v4098 = vpop.f32.mrf.mxu0
        %4099 = vdwg.mxu0
        %v4100 = vadd.f32 %v3926, %v4095
        %v4101 = vld [vmem:[%s6] sm:$0x1]
        %v4102 = vadd.f32 %v4100, %v4101
        %v4103 = vmax.f32 %v4102, 0.0
        %v4104 = vpack.c.bf16 %v4103, %v4103
        %v4105 = vld [vmem:[%s7] sm:$0xf]
        %v4106 = vld [vmem:[%s7 + $0x4] sm:$0xf]
        %v4107 = vld [vmem:[%s7 + $0x8] sm:$0xf]
        %v4108 = vld [vmem:[%s7 + $0xc] sm:$0xf]
        %v4109 = vld [vmem:[%s7 + $0x10] sm:$0xf]
        %v4110 = vld [vmem:[%s7 + $0x14] sm:$0xf]
        %v4111 = vld [vmem:[%s7 + $0x18] sm:$0xf]
        %v4112 = vld [vmem:[%s7 + $0x1c] sm:$0xf]
        %v4113 = vld [vmem:[%s7 + $0x20] sm:$0xf]
        %v4114 = vld [vmem:[%s7 + $0x24] sm:$0xf]
        %v4115 = vld [vmem:[%s7 + $0x28] sm:$0xf]
        %v4116 = vld [vmem:[%s7 + $0x2c] sm:$0xf]
        %v4117 = vld [vmem:[%s7 + $0x30] sm:$0xf]
        %v4118 = vld [vmem:[%s7 + $0x34] sm:$0xf]
        %v4119 = vld [vmem:[%s7 + $0x38] sm:$0xf]
        %v4120 = vld [vmem:[%s7 + $0x3c] sm:$0xf]
        %v4121 = vld [vmem:[%s8] sm:$0x1]
        %v4138 = vunpack.c.l.b16 %v4105
        %v4139 = vunpack.c.l.b16 %v4106
        %v4140 = vunpack.c.l.b16 %v4107
        %v4141 = vunpack.c.l.b16 %v4108
        %v4142 = vunpack.c.l.b16 %v4109
        %v4143 = vunpack.c.l.b16 %v4110
        %v4144 = vunpack.c.l.b16 %v4111
        %v4145 = vunpack.c.l.b16 %v4112
        %v4146 = vunpack.c.l.b16 %v4113
        %v4147 = vunpack.c.l.b16 %v4114
        %v4148 = vunpack.c.l.b16 %v4115
        %v4149 = vunpack.c.l.b16 %v4116
        %v4150 = vunpack.c.l.b16 %v4117
        %v4151 = vunpack.c.l.b16 %v4118
        %v4152 = vunpack.c.l.b16 %v4119
        %v4153 = vunpack.c.l.b16 %v4120
        %v4154 = vpack.c.b16 %v4139, %v4138
        %v4155 = vpack.c.b16 %v4141, %v4140
        %v4156 = vpack.c.b16 %v4143, %v4142
        %v4157 = vpack.c.b16 %v4145, %v4144
        %v4158 = vpack.c.b16 %v4147, %v4146
        %v4159 = vpack.c.b16 %v4149, %v4148
        %v4160 = vpack.c.b16 %v4151, %v4150
        %v4161 = vpack.c.b16 %v4153, %v4152
        %4170 = vmatprep.subr.bf16.mxu0 0
        %4171 = vmatpush1.bf16.msra.mxu0 %v4161
        %4172 = vmatprep.subr.bf16.mxu0 0
        %4173 = vmatpush1.bf16.msra.mxu0 %v4160
        %4174 = vmatprep.subr.bf16.mxu0 0
        %4175 = vmatpush1.bf16.msra.mxu0 %v4159
        %4176 = vmatprep.subr.bf16.mxu0 0
        %4177 = vmatpush1.bf16.msra.mxu0 %v4158
        %4178 = vmatprep.subr.bf16.mxu0 0
        %4179 = vmatpush1.bf16.msra.mxu0 %v4157
        %4180 = vmatprep.subr.bf16.mxu0 0
        %4181 = vmatpush1.bf16.msra.mxu0 %v4156
        %4182 = vmatprep.subr.bf16.mxu0 0
        %4183 = vmatpush1.bf16.msra.mxu0 %v4155
        %4184 = vmatprep.subr.bf16.mxu0 0
        %4185 = vmatpush1.bf16.msra.mxu0 %v4154
        %4186 = vmatprep.subr.bf16.mxu0 0
        %4187 = vmatpush2.bf16.msra.mxu0 0
        %4188 = vmatprep.subr.bf16.mxu0 0
        %4189 = vmatpush2.bf16.msra.mxu0 0
        %4190 = vmatprep.subr.bf16.mxu0 0
        %4191 = vmatpush2.bf16.msra.mxu0 0
        %4192 = vmatprep.subr.bf16.mxu0 0
        %4193 = vmatpush2.bf16.msra.mxu0 0
        %4194 = vmatprep.subr.bf16.mxu0 0
        %4195 = vmatpush2.bf16.msra.mxu0 0
        %4196 = vmatprep.subr.bf16.mxu0 0
        %4197 = vmatpush2.bf16.msra.mxu0 0
        %4198 = vmatprep.subr.bf16.mxu0 0
        %4199 = vmatpush2.bf16.msra.mxu0 0
        %4200 = vmatprep.subr.bf16.mxu0 0
        %4201 = vmatpush2.bf16.msra.mxu0 0
        %4202 = vmatprep.mubr.bf16.mxu0 0
        %4203 = vmatmul.mubr.bf16.gmra.mxu0 %v4104
        %v4204 = vpop.f32.mrf.mxu0
        %v4205 = vadd.f32 %v4121, %v4204
        %v4206 = vpop.f32.mrf.mxu0
        %v4207 = vpop.f32.mrf.mxu0
        %v4208 = vpop.f32.mrf.mxu0
        %4209 = vdwg.mxu0
        %4210 = vst [vmem:[%s324] sm:$0x1] %v4205
        %s4211 = sand.u32 %s225, 1
        %s4212 = scalar_lea.sflag [#allocation3], %s4211
        %s4213 = sand.u32 %s225, 1
        %s4214 = scalar_lea.vmem [#allocation2], %s4213
        // Predicated region
        $region57: #{cnn_forward.1} parent=55 // pred_check
          %p4215 = pneg %p235
        $region58: #{cnn_forward.1} parent=55 // pred_check_branch
          %4217 = sbr.rel (%p4215) target = $region60
        $region59: #{cnn_forward.1} parent=55 // pred_region
          %s4219 = ssub.s32 16, 16
          %4220 = vsyncadd %s4212, %s4219
          %s4221 = smul.addr %s23, 16
          %s4222 = scalar_lea.hbm %s9, %s4221
          %s4224 = sshll.u32 %s4214, 4
          %s4225 = int_to_ptr.vmem [resolvable:$true] %s4224
          %4227 = dma.vmem_to_hbm [thread:$0]  %s4225, 16, %s4222, %s4212
        $region60: #{cnn_forward.1} parent=55 // pred_fallthru
          _
      $region56: #{cnn_forward.1} parent=5 // pred_fallthru
        _
      %p4228 = scmp.le.s32.totalorder 2, %s18
      // Predicated region
      $region61: #{cnn_forward.1} parent=5 // pred_check
        %p4229 = pneg %p4228
      $region62: #{cnn_forward.1} parent=5 // pred_check_branch
        %4231 = sbr.rel (%p4229) target = $region64
      $region63: #{cnn_forward.1} parent=5 // pred_region
        %s4232 = ssub.s32 %s18, 2
        // Predicated region
        $region65: #{cnn_forward.1} parent=63 // pred_check
          %p4233 = pneg %p241
        $region66: #{cnn_forward.1} parent=63 // pred_check_branch
          %4235 = sbr.rel (%p4233) target = $region68
        $region67: #{cnn_forward.1} parent=63 // pred_region
          %s4236 = sand.u32 %s226, 1
          %s4237 = scalar_lea.sflag [#allocation3], %s4236
          %s4238 = sand.u32 %s226, 1
          %s4239 = scalar_lea.vmem [#allocation2], %s4238
          %4240 = dma.done %s4237, 16
        $region68: #{cnn_forward.1} parent=63 // pred_fallthru
          _
      $region64: #{cnn_forward.1} parent=5 // pred_fallthru
        _
    $region6: #{cnn_forward.1} parent=1 // loop_footer
      %s22 = sadd.s32 1, %s18
    $region7: #{cnn_forward.1} parent=1 // loop_footer_branch
      %17 = sbr.rel target = $region3
    $region8: #{cnn_forward.1} parent=1 // loop_exit
      _
    %4241 = vsyncpa [#allocation3], 1
    %s4242 = scalar_lea.sflag [#allocation3], 1
    %4243 = vsyncpa %s4242, 1

</llo_original>
